<compile_context>
chip_gen: v6e
topology: v6e:2x2x1
jax: 0.10.0
libtpu: 0.0.40
codegen_flags: <defaults>
</compile_context>

<pallas_src>
import functools

import jax
import jax.numpy as jnp
from jax import lax
from jax.experimental import pallas as pl
from jax.experimental.pallas import tpu as pltpu


def _round_up(x, m):
    return (x + m - 1) // m * m


def _vmem_capacity_bytes():
    """Physical VMEM per TensorCore (generation-aware), with a safe fallback."""
    try:
        cap = int(pltpu.get_tpu_info().vmem_capacity_bytes)
        if cap > 0:
            return cap
    except Exception:
        pass
    return 64 << 20   # conservative fallback (v7x per-core size)


def _tensorcores_per_chip():
    """2 on v7x (batch-block split pays off), 1 on v5e/v6e (single TC)."""
    try:
        kind = jax.devices()[0].device_kind.lower()
    except Exception:
        return 1
    return 2 if "v7" in kind else 1


def _pick_t_chunk(seq, bb, hp, input_size, budget_bytes, const_bytes):
    """Largest time chunk whose VMEM footprint fits the budget.

    seq does NOT need to be divisible by the chunk: the caller pads the time
    axis up to a multiple of t_chunk and slices the output back (exact).
    """
    max_c = min(64, _round_up(max(seq, 1), 8))
    for c in (64, 32, 16, 8, 4, 2, 1):
        if c > max_c:
            continue
        need = (const_bytes                              # resident weights/bias
                + 2 * c * bb * (input_size + hp) * 4     # dbl-buffered x/out blocks
                + bb * hp * 4)                           # persistent h scratch
        if need <= budget_bytes:
            return c
    return 1


# ---------------------------------------------------------------------------
# Fused kernel: per-chunk input projection + sequential CTRNN recurrence
# ---------------------------------------------------------------------------
def _ctrnn_kernel(x_ref, w_in_ref, b_ref, w_hh_ref, out_ref, h_ref, *,
                  alpha, t_chunk, unroll):
    c = pl.program_id(1)   # time-chunk index (innermost, sequential)

    # Reset the persistent hidden state at the start of each batch block's
    # time loop (grid iterates batch blocks outermost, time innermost).
    @pl.when(c == 0)
    def _():
        h_ref[...] = jnp.zeros_like(h_ref)

    b_row = b_ref[...]      # (1, hp)  — broadcasts over the batch sublanes
    w_in = w_in_ref[...]    # (input_size, hp), f32
    w_hh = w_hh_ref[...]    # (hp, hp), f32 or bf16
    rdt = w_hh.dtype

    # --- fused input projection for the whole chunk (off the serial path) ---
    # Staged directly into the VMEM-resident output block: no HBM round trip
    # and no extra scratch buffer.  The per-step dots are independent of h,
    # so they pipeline back-to-back on the MXU before the recurrence below.
    def proj_step(i, carry):
        out_ref[i] = (jnp.dot(x_ref[i], w_in,
                              preferred_element_type=jnp.float32)
                      + b_row).astype(out_ref.dtype)
        return carry

    lax.fori_loop(0, t_chunk, proj_step, 0, unroll=unroll)

    # --- serial recurrence: h <- (1-a)*h + a*relu(xproj_t + h @ W_hh) -------
    def step(i, h):
        pre = out_ref[i] + jnp.dot(h.astype(rdt), w_hh,
                                   preferred_element_type=jnp.float32)
        h_new = jnp.maximum(pre, 0.0)
        h = (1.0 - alpha) * h + alpha * h_new
        out_ref[i] = h.astype(out_ref.dtype)
        return h

    h = lax.fori_loop(0, t_chunk, step, h_ref[...], unroll=unroll)
    h_ref[...] = h


def _build_recurrence(seq_p, bp, bb, n_bblocks, n_chunks, input_size, hp,
                      t_chunk, alpha, unroll, vmem_limit, single_buffer):
    # Constant-index operands: single-buffer them when requested (Buffered(1)).
    const_kw = {"pipeline_mode": pl.Buffered(1)} if single_buffer else {}
    kernel = functools.partial(_ctrnn_kernel, alpha=float(alpha),
                               t_chunk=t_chunk, unroll=unroll)
    return pl.pallas_call(
        kernel,
        out_shape=jax.ShapeDtypeStruct((seq_p, bp, hp), jnp.float32),
        grid_spec=pltpu.PrefetchScalarGridSpec(
            num_scalar_prefetch=0,
            grid=(n_bblocks, n_chunks),          # batch blocks outer, time inner
            in_specs=[
                pl.BlockSpec((t_chunk, bb, input_size), lambda b, c: (c, b, 0)),
                pl.BlockSpec((input_size, hp), lambda b, c: (0, 0), **const_kw),
                pl.BlockSpec((1, hp), lambda b, c: (0, 0), **const_kw),
                pl.BlockSpec((hp, hp), lambda b, c: (0, 0), **const_kw),
            ],
            out_specs=pl.BlockSpec((t_chunk, bb, hp), lambda b, c: (c, b, 0)),
            scratch_shapes=[pltpu.VMEM((bb, hp), jnp.float32)],
        ),
        compiler_params=pltpu.CompilerParams(
            dimension_semantics=("parallel", "arbitrary"),
            vmem_limit_bytes=int(vmem_limit)),
    )


def ctrnn_forward(x, w_in, b_in, w_hh, b_hh, alpha, *,
                  recurrent_dtype=jnp.float32):
    """x: (seq, batch, input_size) f32.
    w_in: (input_size, hidden), b_in: (1, hidden)   [pre-transposed vs torch]
    w_hh: (hidden, hidden),     b_hh: (1, hidden)
    recurrent_dtype: dtype of W_hh / h for the recurrent MXU matmul (bf16 is
        a perf knob with f32 accumulation; default f32 for exact parity).
    Returns (output (seq, batch, hidden), final hidden (batch, hidden))."""
    seq, batch, input_size = x.shape
    hidden = w_in.shape[1]

    # --- tile-aligned, mathematically exact zero padding ---------------------
    hp = _round_up(hidden, 128)                  # lane-dense hidden
    n_tc = _tensorcores_per_chip()
    bp = _round_up(batch, 8)                     # sublane-aligned batch
    n_bblocks = 1
    if n_tc >= 2 and bp >= 128:                  # split only if >= 64 rows/core
        bp = _round_up(batch, 16)
        n_bblocks = 2
    bb = bp // n_bblocks

    x_b = jnp.pad(x, ((0, 0), (0, bp - batch), (0, 0))).astype(jnp.float32)
    w_in_p = jnp.pad(w_in, ((0, 0), (0, hp - hidden))).astype(jnp.float32)
    # Fold both biases into one resident vector (one VPU add in-kernel).
    b_p = jnp.pad(b_in + b_hh, ((0, 0), (0, hp - hidden))).astype(jnp.float32)
    w_hh_p = jnp.pad(w_hh, ((0, hp - hidden), (0, hp - hidden))
                     ).astype(recurrent_dtype)

    # --- generation-aware VMEM budget ----------------------------------------
    cap = _vmem_capacity_bytes()                 # ~128 MiB v5e/v6e, ~64 MiB v7x
    vmem_limit = max(32 << 20, min(int(cap * 0.85), cap - (8 << 20)))
    budget = vmem_limit - (4 << 20)
    whh_item = jnp.dtype(recurrent_dtype).itemsize

    last_err = None
    out_p = None
    # Preferred config single-buffers the constant weight operands; fall back
    # to default double-buffering if this JAX build rejects Buffered(1).
    for single_buffer in (True, False):
        cbuf = 1 if single_buffer else 2
        const_bytes = cbuf * (hp * hp * whh_item + input_size * hp * 4 + hp * 4)
        t_chunk = _pick_t_chunk(seq, bb, hp, input_size, budget, const_bytes)
        seq_p = _round_up(seq, t_chunk)          # pad time; sliced back below
        n_chunks = seq_p // t_chunk
        x_p = x_b if seq_p == seq else jnp.pad(
            x_b, ((0, seq_p - seq), (0, 0), (0, 0)))

        # Bound the unroll so the (bb, hp) carry + temporaries stay in vregs.
        carry_bytes = bb * hp * 4
        if carry_bytes <= 32 * 1024:
            unroll = min(t_chunk, 8)
        elif carry_bytes <= 128 * 1024:
            unroll = min(t_chunk, 4)
        else:
            unroll = min(t_chunk, 2)

        try:
            call = _build_recurrence(seq_p, bp, bb, n_bblocks, n_chunks,
                                     input_size, hp, t_chunk, alpha, unroll,
                                     vmem_limit, single_buffer)
            out_p = jax.block_until_ready(call(x_p, w_in_p, b_p, w_hh_p))
            break
        except Exception as e:                   # robustness fallback
            last_err = e
            out_p = None
    if out_p is None:
        raise last_err

    out = out_p[:seq, :batch, :hidden]
    return out, out[-1]


def _init_linear(key, in_features, out_features):
    # Matches torch.nn.Linear default init: U(-1/sqrt(fan_in), 1/sqrt(fan_in)).
    k_w, k_b = jax.random.split(key)
    bound = 1.0 / (in_features ** 0.5)
    # PyTorch weight is (out, in); we keep it transposed (in, out) for x @ W.
    w = jax.random.uniform(k_w, (in_features, out_features),
                           jnp.float32, -bound, bound)
    b = jax.random.uniform(k_b, (1, out_features), jnp.float32, -bound, bound)
    return w, b


def _reference(x, w_in, b_in, w_hh, b_hh, alpha):
    def step(h, x_t):
        h_new = jnp.maximum(x_t @ w_in + b_in + h @ w_hh + b_hh, 0.0)
        h = (1.0 - alpha) * h + alpha * h_new
        return h, h
    h0 = jnp.zeros((x.shape[1], w_in.shape[1]), jnp.float32)
    h_last, outs = jax.lax.scan(step, h0, x)
    return outs, h_last


if __name__ == "__main__":
    seq_len, batch, input_size, hidden_size = 8, 2, 4, 32
    dt, tau = 10, 100
    alpha = dt / tau

    key = jax.random.PRNGKey(0)
    k_x, k_in, k_hh = jax.random.split(key, 3)

    x = jax.random.normal(k_x, (seq_len, batch, input_size), jnp.float32)
    w_in, b_in = _init_linear(k_in, input_size, hidden_size)
    w_hh, b_hh = _init_linear(k_hh, hidden_size, hidden_size)

    ref_out, ref_h = _reference(x, w_in, b_in, w_hh, b_hh, alpha)

    # Default f32 path: exact parity with the PyTorch module.
    out, h_final = ctrnn_forward(x, w_in, b_in, w_hh, b_hh, alpha)
    out = jax.block_until_ready(out)
    h_final = jax.block_until_ready(h_final)
    assert out.shape == (seq_len, batch, hidden_size)
    assert h_final.shape == (batch, hidden_size)
    assert jnp.allclose(out, ref_out, atol=1e-5, rtol=1e-5)
    assert jnp.allclose(h_final, ref_h, atol=1e-5, rtol=1e-5)

    # Non-divisible sequence length exercises the time-padding path.
    out7, h7 = ctrnn_forward(x[:7], w_in, b_in, w_hh, b_hh, alpha)
    ref_out7, ref_h7 = _reference(x[:7], w_in, b_in, w_hh, b_hh, alpha)
    out7 = jax.block_until_ready(out7)
    assert out7.shape == (7, batch, hidden_size)
    assert jnp.allclose(out7, ref_out7, atol=1e-5, rtol=1e-5)
    assert jnp.allclose(h7, ref_h7, atol=1e-5, rtol=1e-5)

    # Optional bf16 W_hh on the recurrent MXU matmul (perf knob, f32 accum):
    # validated at a looser tolerance by construction.
    out_bf, _ = ctrnn_forward(x, w_in, b_in, w_hh, b_hh, alpha,
                              recurrent_dtype=jnp.bfloat16)
    out_bf = jax.block_until_ready(out_bf)
    assert jnp.allclose(out_bf, ref_out, atol=1e-1, rtol=1e-1)

    print("KERNEL_OK")
</pallas_src>

<mosaic_0001>
module attributes {stable_mosaic.version = 11 : i64} {
  func.func @_ctrnn_kernel(%arg0: i32, %arg1: i32, %arg2: memref<8x8x4xf32, #tpu.memory_space<vmem>>, %arg3: memref<4x128xf32, #tpu.memory_space<vmem>>, %arg4: memref<1x128xf32, #tpu.memory_space<vmem>>, %arg5: memref<128x128xf32, #tpu.memory_space<vmem>>, %arg6: memref<8x8x128xf32, #tpu.memory_space<vmem>>, %arg7: memref<8x128xf32, #tpu.memory_space<vmem>>) attributes {dimension_semantics = [#tpu.dimension_semantics<parallel>, #tpu.dimension_semantics<arbitrary>], iteration_bounds = array<i64: 1, 1>, scalar_prefetch = 0 : i64, scratch_operands = 1 : i64, tpu.core_type = #tpu.core_type<tc>, window_params = [{transform_indices = @transform_0, window_bounds = array<i64: 8, 8, 4>}, {pipeline_mode = #tpu.pipeline_mode<synchronous>, transform_indices = @transform_1, window_bounds = array<i64: 4, 128>}, {pipeline_mode = #tpu.pipeline_mode<synchronous>, transform_indices = @transform_2, window_bounds = array<i64: 1, 128>}, {pipeline_mode = #tpu.pipeline_mode<synchronous>, transform_indices = @transform_3, window_bounds = array<i64: 128, 128>}, {transform_indices = @transform_4, window_bounds = array<i64: 8, 8, 128>}]} {
    %c0_i32 = arith.constant 0 : i32
    %0 = arith.cmpi eq, %arg1, %c0_i32 : i32
    %1 = arith.extui %0 : i1 to i32
    %c0_i32_0 = arith.constant 0 : i32
    %2 = arith.cmpi ne, %1, %c0_i32_0 : i32
    scf.if %2 {
      %cst_123 = arith.constant 0.000000e+00 : f32
      %216 = vector.broadcast %cst_123 : f32 to vector<8x128xf32>
      %c0_124 = arith.constant 0 : index
      %c0_125 = arith.constant 0 : index
      %217 = vector.load %arg7[%c0_124, %c0_125] : memref<8x128xf32, #tpu.memory_space<vmem>>, vector<8x128xf32>
      tpu.vector_store %arg7[%c0_124, %c0_125], %216 {strides = array<i32>} : memref<8x128xf32, #tpu.memory_space<vmem>>, vector<8x128xf32>,
    } else {
    }
    %c0 = arith.constant 0 : index
    %c0_1 = arith.constant 0 : index
    %3 = vector.load %arg4[%c0, %c0_1] : memref<1x128xf32, #tpu.memory_space<vmem>>, vector<1x128xf32>
    %c0_2 = arith.constant 0 : index
    %c0_3 = arith.constant 0 : index
    %4 = vector.load %arg3[%c0_2, %c0_3] : memref<4x128xf32, #tpu.memory_space<vmem>>, vector<4x128xf32>
    %c0_4 = arith.constant 0 : index
    %c0_5 = arith.constant 0 : index
    %5 = vector.load %arg5[%c0_4, %c0_5] : memref<128x128xf32, #tpu.memory_space<vmem>>, vector<128x128xf32>
    %c0_i32_6 = arith.constant 0 : i32
    %6 = arith.index_cast %c0_i32_6 : i32 to index
    %c0_7 = arith.constant 0 : index
    %c0_8 = arith.constant 0 : index
    %7 = vector.load %arg2[%6, %c0_7, %c0_8] : memref<8x8x4xf32, #tpu.memory_space<vmem>>, vector<1x8x4xf32>
    %8 = vector.shape_cast %7 : vector<1x8x4xf32> to vector<8x4xf32>
    %cst = arith.constant dense<0.000000e+00> : vector<8x128xf32>
    %9 = tpu.matmul %8, %4, %cst {dimension_numbers = #tpu.dot_dimension_numbers<[1], [0], [0], [1], [0, 0, 1, 1], [], []>} : vector<8x4xf32>, vector<4x128xf32>, vector<8x128xf32> -> vector<8x128xf32>
    %10 = vector.broadcast %3 : vector<1x128xf32> to vector<8x128xf32>
    %11 = arith.addf %9, %10 : vector<8x128xf32>
    %12 = arith.index_cast %c0_i32_6 : i32 to index
    %c0_9 = arith.constant 0 : index
    %c0_10 = arith.constant 0 : index
    %13 = vector.load %arg6[%12, %c0_9, %c0_10] : memref<8x8x128xf32, #tpu.memory_space<vmem>>, vector<1x8x128xf32>
    %14 = vector.shape_cast %13 : vector<1x8x128xf32> to vector<8x128xf32>
    %15 = vector.shape_cast %11 : vector<8x128xf32> to vector<1x8x128xf32>
    tpu.vector_store %arg6[%12, %c0_9, %c0_10], %15 {strides = array<i32>} : memref<8x8x128xf32, #tpu.memory_space<vmem>>, vector<1x8x128xf32>,
    %c1_i32 = arith.constant 1 : i32
    %16 = arith.index_cast %c1_i32 : i32 to index
    %c0_11 = arith.constant 0 : index
    %c0_12 = arith.constant 0 : index
    %17 = vector.load %arg2[%16, %c0_11, %c0_12] : memref<8x8x4xf32, #tpu.memory_space<vmem>>, vector<1x8x4xf32>
    %18 = vector.shape_cast %17 : vector<1x8x4xf32> to vector<8x4xf32>
    %cst_13 = arith.constant dense<0.000000e+00> : vector<8x128xf32>
    %19 = tpu.matmul %18, %4, %cst_13 {dimension_numbers = #tpu.dot_dimension_numbers<[1], [0], [0], [1], [0, 0, 1, 1], [], []>} : vector<8x4xf32>, vector<4x128xf32>, vector<8x128xf32> -> vector<8x128xf32>
    %20 = vector.broadcast %3 : vector<1x128xf32> to vector<8x128xf32>
    %21 = arith.addf %19, %20 : vector<8x128xf32>
    %22 = arith.index_cast %c1_i32 : i32 to index
    %c0_14 = arith.constant 0 : index
    %c0_15 = arith.constant 0 : index
    %23 = vector.load %arg6[%22, %c0_14, %c0_15] : memref<8x8x128xf32, #tpu.memory_space<vmem>>, vector<1x8x128xf32>
    %24 = vector.shape_cast %23 : vector<1x8x128xf32> to vector<8x128xf32>
    %25 = vector.shape_cast %21 : vector<8x128xf32> to vector<1x8x128xf32>
    tpu.vector_store %arg6[%22, %c0_14, %c0_15], %25 {strides = array<i32>} : memref<8x8x128xf32, #tpu.memory_space<vmem>>, vector<1x8x128xf32>,
    %c2_i32 = arith.constant 2 : i32
    %26 = arith.index_cast %c2_i32 : i32 to index
    %c0_16 = arith.constant 0 : index
    %c0_17 = arith.constant 0 : index
    %27 = vector.load %arg2[%26, %c0_16, %c0_17] : memref<8x8x4xf32, #tpu.memory_space<vmem>>, vector<1x8x4xf32>
    %28 = vector.shape_cast %27 : vector<1x8x4xf32> to vector<8x4xf32>
    %cst_18 = arith.constant dense<0.000000e+00> : vector<8x128xf32>
    %29 = tpu.matmul %28, %4, %cst_18 {dimension_numbers = #tpu.dot_dimension_numbers<[1], [0], [0], [1], [0, 0, 1, 1], [], []>} : vector<8x4xf32>, vector<4x128xf32>, vector<8x128xf32> -> vector<8x128xf32>
    %30 = vector.broadcast %3 : vector<1x128xf32> to vector<8x128xf32>
    %31 = arith.addf %29, %30 : vector<8x128xf32>
    %32 = arith.index_cast %c2_i32 : i32 to index
    %c0_19 = arith.constant 0 : index
    %c0_20 = arith.constant 0 : index
    %33 = vector.load %arg6[%32, %c0_19, %c0_20] : memref<8x8x128xf32, #tpu.memory_space<vmem>>, vector<1x8x128xf32>
    %34 = vector.shape_cast %33 : vector<1x8x128xf32> to vector<8x128xf32>
    %35 = vector.shape_cast %31 : vector<8x128xf32> to vector<1x8x128xf32>
    tpu.vector_store %arg6[%32, %c0_19, %c0_20], %35 {strides = array<i32>} : memref<8x8x128xf32, #tpu.memory_space<vmem>>, vector<1x8x128xf32>,
    %c3_i32 = arith.constant 3 : i32
    %36 = arith.index_cast %c3_i32 : i32 to index
    %c0_21 = arith.constant 0 : index
    %c0_22 = arith.constant 0 : index
    %37 = vector.load %arg2[%36, %c0_21, %c0_22] : memref<8x8x4xf32, #tpu.memory_space<vmem>>, vector<1x8x4xf32>
    %38 = vector.shape_cast %37 : vector<1x8x4xf32> to vector<8x4xf32>
    %cst_23 = arith.constant dense<0.000000e+00> : vector<8x128xf32>
    %39 = tpu.matmul %38, %4, %cst_23 {dimension_numbers = #tpu.dot_dimension_numbers<[1], [0], [0], [1], [0, 0, 1, 1], [], []>} : vector<8x4xf32>, vector<4x128xf32>, vector<8x128xf32> -> vector<8x128xf32>
    %40 = vector.broadcast %3 : vector<1x128xf32> to vector<8x128xf32>
    %41 = arith.addf %39, %40 : vector<8x128xf32>
    %42 = arith.index_cast %c3_i32 : i32 to index
    %c0_24 = arith.constant 0 : index
    %c0_25 = arith.constant 0 : index
    %43 = vector.load %arg6[%42, %c0_24, %c0_25] : memref<8x8x128xf32, #tpu.memory_space<vmem>>, vector<1x8x128xf32>
    %44 = vector.shape_cast %43 : vector<1x8x128xf32> to vector<8x128xf32>
    %45 = vector.shape_cast %41 : vector<8x128xf32> to vector<1x8x128xf32>
    tpu.vector_store %arg6[%42, %c0_24, %c0_25], %45 {strides = array<i32>} : memref<8x8x128xf32, #tpu.memory_space<vmem>>, vector<1x8x128xf32>,
    %c4_i32 = arith.constant 4 : i32
    %46 = arith.index_cast %c4_i32 : i32 to index
    %c0_26 = arith.constant 0 : index
    %c0_27 = arith.constant 0 : index
    %47 = vector.load %arg2[%46, %c0_26, %c0_27] : memref<8x8x4xf32, #tpu.memory_space<vmem>>, vector<1x8x4xf32>
    %48 = vector.shape_cast %47 : vector<1x8x4xf32> to vector<8x4xf32>
    %cst_28 = arith.constant dense<0.000000e+00> : vector<8x128xf32>
    %49 = tpu.matmul %48, %4, %cst_28 {dimension_numbers = #tpu.dot_dimension_numbers<[1], [0], [0], [1], [0, 0, 1, 1], [], []>} : vector<8x4xf32>, vector<4x128xf32>, vector<8x128xf32> -> vector<8x128xf32>
    %50 = vector.broadcast %3 : vector<1x128xf32> to vector<8x128xf32>
    %51 = arith.addf %49, %50 : vector<8x128xf32>
    %52 = arith.index_cast %c4_i32 : i32 to index
    %c0_29 = arith.constant 0 : index
    %c0_30 = arith.constant 0 : index
    %53 = vector.load %arg6[%52, %c0_29, %c0_30] : memref<8x8x128xf32, #tpu.memory_space<vmem>>, vector<1x8x128xf32>
    %54 = vector.shape_cast %53 : vector<1x8x128xf32> to vector<8x128xf32>
    %55 = vector.shape_cast %51 : vector<8x128xf32> to vector<1x8x128xf32>
    tpu.vector_store %arg6[%52, %c0_29, %c0_30], %55 {strides = array<i32>} : memref<8x8x128xf32, #tpu.memory_space<vmem>>, vector<1x8x128xf32>,
    %c5_i32 = arith.constant 5 : i32
    %56 = arith.index_cast %c5_i32 : i32 to index
    %c0_31 = arith.constant 0 : index
    %c0_32 = arith.constant 0 : index
    %57 = vector.load %arg2[%56, %c0_31, %c0_32] : memref<8x8x4xf32, #tpu.memory_space<vmem>>, vector<1x8x4xf32>
    %58 = vector.shape_cast %57 : vector<1x8x4xf32> to vector<8x4xf32>
    %cst_33 = arith.constant dense<0.000000e+00> : vector<8x128xf32>
    %59 = tpu.matmul %58, %4, %cst_33 {dimension_numbers = #tpu.dot_dimension_numbers<[1], [0], [0], [1], [0, 0, 1, 1], [], []>} : vector<8x4xf32>, vector<4x128xf32>, vector<8x128xf32> -> vector<8x128xf32>
    %60 = vector.broadcast %3 : vector<1x128xf32> to vector<8x128xf32>
    %61 = arith.addf %59, %60 : vector<8x128xf32>
    %62 = arith.index_cast %c5_i32 : i32 to index
    %c0_34 = arith.constant 0 : index
    %c0_35 = arith.constant 0 : index
    %63 = vector.load %arg6[%62, %c0_34, %c0_35] : memref<8x8x128xf32, #tpu.memory_space<vmem>>, vector<1x8x128xf32>
    %64 = vector.shape_cast %63 : vector<1x8x128xf32> to vector<8x128xf32>
    %65 = vector.shape_cast %61 : vector<8x128xf32> to vector<1x8x128xf32>
    tpu.vector_store %arg6[%62, %c0_34, %c0_35], %65 {strides = array<i32>} : memref<8x8x128xf32, #tpu.memory_space<vmem>>, vector<1x8x128xf32>,
    %c6_i32 = arith.constant 6 : i32
    %66 = arith.index_cast %c6_i32 : i32 to index
    %c0_36 = arith.constant 0 : index
    %c0_37 = arith.constant 0 : index
    %67 = vector.load %arg2[%66, %c0_36, %c0_37] : memref<8x8x4xf32, #tpu.memory_space<vmem>>, vector<1x8x4xf32>
    %68 = vector.shape_cast %67 : vector<1x8x4xf32> to vector<8x4xf32>
    %cst_38 = arith.constant dense<0.000000e+00> : vector<8x128xf32>
    %69 = tpu.matmul %68, %4, %cst_38 {dimension_numbers = #tpu.dot_dimension_numbers<[1], [0], [0], [1], [0, 0, 1, 1], [], []>} : vector<8x4xf32>, vector<4x128xf32>, vector<8x128xf32> -> vector<8x128xf32>
    %70 = vector.broadcast %3 : vector<1x128xf32> to vector<8x128xf32>
    %71 = arith.addf %69, %70 : vector<8x128xf32>
    %72 = arith.index_cast %c6_i32 : i32 to index
    %c0_39 = arith.constant 0 : index
    %c0_40 = arith.constant 0 : index
    %73 = vector.load %arg6[%72, %c0_39, %c0_40] : memref<8x8x128xf32, #tpu.memory_space<vmem>>, vector<1x8x128xf32>
    %74 = vector.shape_cast %73 : vector<1x8x128xf32> to vector<8x128xf32>
    %75 = vector.shape_cast %71 : vector<8x128xf32> to vector<1x8x128xf32>
    tpu.vector_store %arg6[%72, %c0_39, %c0_40], %75 {strides = array<i32>} : memref<8x8x128xf32, #tpu.memory_space<vmem>>, vector<1x8x128xf32>,
    %c7_i32 = arith.constant 7 : i32
    %76 = arith.index_cast %c7_i32 : i32 to index
    %c0_41 = arith.constant 0 : index
    %c0_42 = arith.constant 0 : index
    %77 = vector.load %arg2[%76, %c0_41, %c0_42] : memref<8x8x4xf32, #tpu.memory_space<vmem>>, vector<1x8x4xf32>
    %78 = vector.shape_cast %77 : vector<1x8x4xf32> to vector<8x4xf32>
    %cst_43 = arith.constant dense<0.000000e+00> : vector<8x128xf32>
    %79 = tpu.matmul %78, %4, %cst_43 {dimension_numbers = #tpu.dot_dimension_numbers<[1], [0], [0], [1], [0, 0, 1, 1], [], []>} : vector<8x4xf32>, vector<4x128xf32>, vector<8x128xf32> -> vector<8x128xf32>
    %80 = vector.broadcast %3 : vector<1x128xf32> to vector<8x128xf32>
    %81 = arith.addf %79, %80 : vector<8x128xf32>
    %82 = arith.index_cast %c7_i32 : i32 to index
    %c0_44 = arith.constant 0 : index
    %c0_45 = arith.constant 0 : index
    %83 = vector.load %arg6[%82, %c0_44, %c0_45] : memref<8x8x128xf32, #tpu.memory_space<vmem>>, vector<1x8x128xf32>
    %84 = vector.shape_cast %83 : vector<1x8x128xf32> to vector<8x128xf32>
    %85 = vector.shape_cast %81 : vector<8x128xf32> to vector<1x8x128xf32>
    tpu.vector_store %arg6[%82, %c0_44, %c0_45], %85 {strides = array<i32>} : memref<8x8x128xf32, #tpu.memory_space<vmem>>, vector<1x8x128xf32>,
    %c8_i32 = arith.constant 8 : i32
    %c0_46 = arith.constant 0 : index
    %c0_47 = arith.constant 0 : index
    %86 = vector.load %arg7[%c0_46, %c0_47] : memref<8x128xf32, #tpu.memory_space<vmem>>, vector<8x128xf32>
    %c0_i32_48 = arith.constant 0 : i32
    %87 = arith.index_cast %c0_i32_48 : i32 to index
    %c0_49 = arith.constant 0 : index
    %c0_50 = arith.constant 0 : index
    %88 = vector.load %arg6[%87, %c0_49, %c0_50] : memref<8x8x128xf32, #tpu.memory_space<vmem>>, vector<1x8x128xf32>
    %89 = vector.shape_cast %88 : vector<1x8x128xf32> to vector<8x128xf32>
    %cst_51 = arith.constant dense<0.000000e+00> : vector<8x128xf32>
    %90 = tpu.matmul %86, %5, %cst_51 {dimension_numbers = #tpu.dot_dimension_numbers<[1], [0], [0], [1], [0, 0, 1, 1], [], []>} : vector<8x128xf32>, vector<128x128xf32>, vector<8x128xf32> -> vector<8x128xf32>
    %91 = arith.addf %89, %90 : vector<8x128xf32>
    %cst_52 = arith.constant 0.000000e+00 : f32
    %92 = vector.broadcast %cst_52 : f32 to vector<8x128xf32>
    %93 = arith.maximumf %91, %92 : vector<8x128xf32>
    %cst_53 = arith.constant 0.899999976 : f32
    %94 = vector.broadcast %cst_53 : f32 to vector<8x128xf32>
    %95 = arith.mulf %94, %86 : vector<8x128xf32>
    %cst_54 = arith.constant 1.000000e-01 : f32
    %96 = vector.broadcast %cst_54 : f32 to vector<8x128xf32>
    %97 = arith.mulf %96, %93 : vector<8x128xf32>
    %98 = arith.addf %95, %97 : vector<8x128xf32>
    %99 = arith.index_cast %c0_i32_48 : i32 to index
    %c0_55 = arith.constant 0 : index
    %c0_56 = arith.constant 0 : index
    %100 = vector.load %arg6[%99, %c0_55, %c0_56] : memref<8x8x128xf32, #tpu.memory_space<vmem>>, vector<1x8x128xf32>
    %101 = vector.shape_cast %100 : vector<1x8x128xf32> to vector<8x128xf32>
    %102 = vector.shape_cast %98 : vector<8x128xf32> to vector<1x8x128xf32>
    tpu.vector_store %arg6[%99, %c0_55, %c0_56], %102 {strides = array<i32>} : memref<8x8x128xf32, #tpu.memory_space<vmem>>, vector<1x8x128xf32>,
    %c1_i32_57 = arith.constant 1 : i32
    %103 = arith.index_cast %c1_i32_57 : i32 to index
    %c0_58 = arith.constant 0 : index
    %c0_59 = arith.constant 0 : index
    %104 = vector.load %arg6[%103, %c0_58, %c0_59] : memref<8x8x128xf32, #tpu.memory_space<vmem>>, vector<1x8x128xf32>
    %105 = vector.shape_cast %104 : vector<1x8x128xf32> to vector<8x128xf32>
    %cst_60 = arith.constant dense<0.000000e+00> : vector<8x128xf32>
    %106 = tpu.matmul %98, %5, %cst_60 {dimension_numbers = #tpu.dot_dimension_numbers<[1], [0], [0], [1], [0, 0, 1, 1], [], []>} : vector<8x128xf32>, vector<128x128xf32>, vector<8x128xf32> -> vector<8x128xf32>
    %107 = arith.addf %105, %106 : vector<8x128xf32>
    %cst_61 = arith.constant 0.000000e+00 : f32
    %108 = vector.broadcast %cst_61 : f32 to vector<8x128xf32>
    %109 = arith.maximumf %107, %108 : vector<8x128xf32>
    %cst_62 = arith.constant 0.899999976 : f32
    %110 = vector.broadcast %cst_62 : f32 to vector<8x128xf32>
    %111 = arith.mulf %110, %98 : vector<8x128xf32>
    %cst_63 = arith.constant 1.000000e-01 : f32
    %112 = vector.broadcast %cst_63 : f32 to vector<8x128xf32>
    %113 = arith.mulf %112, %109 : vector<8x128xf32>
    %114 = arith.addf %111, %113 : vector<8x128xf32>
    %115 = arith.index_cast %c1_i32_57 : i32 to index
    %c0_64 = arith.constant 0 : index
    %c0_65 = arith.constant 0 : index
    %116 = vector.load %arg6[%115, %c0_64, %c0_65] : memref<8x8x128xf32, #tpu.memory_space<vmem>>, vector<1x8x128xf32>
    %117 = vector.shape_cast %116 : vector<1x8x128xf32> to vector<8x128xf32>
    %118 = vector.shape_cast %114 : vector<8x128xf32> to vector<1x8x128xf32>
    tpu.vector_store %arg6[%115, %c0_64, %c0_65], %118 {strides = array<i32>} : memref<8x8x128xf32, #tpu.memory_space<vmem>>, vector<1x8x128xf32>,
    %c2_i32_66 = arith.constant 2 : i32
    %119 = arith.index_cast %c2_i32_66 : i32 to index
    %c0_67 = arith.constant 0 : index
    %c0_68 = arith.constant 0 : index
    %120 = vector.load %arg6[%119, %c0_67, %c0_68] : memref<8x8x128xf32, #tpu.memory_space<vmem>>, vector<1x8x128xf32>
    %121 = vector.shape_cast %120 : vector<1x8x128xf32> to vector<8x128xf32>
    %cst_69 = arith.constant dense<0.000000e+00> : vector<8x128xf32>
    %122 = tpu.matmul %114, %5, %cst_69 {dimension_numbers = #tpu.dot_dimension_numbers<[1], [0], [0], [1], [0, 0, 1, 1], [], []>} : vector<8x128xf32>, vector<128x128xf32>, vector<8x128xf32> -> vector<8x128xf32>
    %123 = arith.addf %121, %122 : vector<8x128xf32>
    %cst_70 = arith.constant 0.000000e+00 : f32
    %124 = vector.broadcast %cst_70 : f32 to vector<8x128xf32>
    %125 = arith.maximumf %123, %124 : vector<8x128xf32>
    %cst_71 = arith.constant 0.899999976 : f32
    %126 = vector.broadcast %cst_71 : f32 to vector<8x128xf32>
    %127 = arith.mulf %126, %114 : vector<8x128xf32>
    %cst_72 = arith.constant 1.000000e-01 : f32
    %128 = vector.broadcast %cst_72 : f32 to vector<8x128xf32>
    %129 = arith.mulf %128, %125 : vector<8x128xf32>
    %130 = arith.addf %127, %129 : vector<8x128xf32>
    %131 = arith.index_cast %c2_i32_66 : i32 to index
    %c0_73 = arith.constant 0 : index
    %c0_74 = arith.constant 0 : index
    %132 = vector.load %arg6[%131, %c0_73, %c0_74] : memref<8x8x128xf32, #tpu.memory_space<vmem>>, vector<1x8x128xf32>
    %133 = vector.shape_cast %132 : vector<1x8x128xf32> to vector<8x128xf32>
    %134 = vector.shape_cast %130 : vector<8x128xf32> to vector<1x8x128xf32>
    tpu.vector_store %arg6[%131, %c0_73, %c0_74], %134 {strides = array<i32>} : memref<8x8x128xf32, #tpu.memory_space<vmem>>, vector<1x8x128xf32>,
    %c3_i32_75 = arith.constant 3 : i32
    %135 = arith.index_cast %c3_i32_75 : i32 to index
    %c0_76 = arith.constant 0 : index
    %c0_77 = arith.constant 0 : index
    %136 = vector.load %arg6[%135, %c0_76, %c0_77] : memref<8x8x128xf32, #tpu.memory_space<vmem>>, vector<1x8x128xf32>
    %137 = vector.shape_cast %136 : vector<1x8x128xf32> to vector<8x128xf32>
    %cst_78 = arith.constant dense<0.000000e+00> : vector<8x128xf32>
    %138 = tpu.matmul %130, %5, %cst_78 {dimension_numbers = #tpu.dot_dimension_numbers<[1], [0], [0], [1], [0, 0, 1, 1], [], []>} : vector<8x128xf32>, vector<128x128xf32>, vector<8x128xf32> -> vector<8x128xf32>
    %139 = arith.addf %137, %138 : vector<8x128xf32>
    %cst_79 = arith.constant 0.000000e+00 : f32
    %140 = vector.broadcast %cst_79 : f32 to vector<8x128xf32>
    %141 = arith.maximumf %139, %140 : vector<8x128xf32>
    %cst_80 = arith.constant 0.899999976 : f32
    %142 = vector.broadcast %cst_80 : f32 to vector<8x128xf32>
    %143 = arith.mulf %142, %130 : vector<8x128xf32>
    %cst_81 = arith.constant 1.000000e-01 : f32
    %144 = vector.broadcast %cst_81 : f32 to vector<8x128xf32>
    %145 = arith.mulf %144, %141 : vector<8x128xf32>
    %146 = arith.addf %143, %145 : vector<8x128xf32>
    %147 = arith.index_cast %c3_i32_75 : i32 to index
    %c0_82 = arith.constant 0 : index
    %c0_83 = arith.constant 0 : index
    %148 = vector.load %arg6[%147, %c0_82, %c0_83] : memref<8x8x128xf32, #tpu.memory_space<vmem>>, vector<1x8x128xf32>
    %149 = vector.shape_cast %148 : vector<1x8x128xf32> to vector<8x128xf32>
    %150 = vector.shape_cast %146 : vector<8x128xf32> to vector<1x8x128xf32>
    tpu.vector_store %arg6[%147, %c0_82, %c0_83], %150 {strides = array<i32>} : memref<8x8x128xf32, #tpu.memory_space<vmem>>, vector<1x8x128xf32>,
    %c4_i32_84 = arith.constant 4 : i32
    %151 = arith.index_cast %c4_i32_84 : i32 to index
    %c0_85 = arith.constant 0 : index
    %c0_86 = arith.constant 0 : index
    %152 = vector.load %arg6[%151, %c0_85, %c0_86] : memref<8x8x128xf32, #tpu.memory_space<vmem>>, vector<1x8x128xf32>
    %153 = vector.shape_cast %152 : vector<1x8x128xf32> to vector<8x128xf32>
    %cst_87 = arith.constant dense<0.000000e+00> : vector<8x128xf32>
    %154 = tpu.matmul %146, %5, %cst_87 {dimension_numbers = #tpu.dot_dimension_numbers<[1], [0], [0], [1], [0, 0, 1, 1], [], []>} : vector<8x128xf32>, vector<128x128xf32>, vector<8x128xf32> -> vector<8x128xf32>
    %155 = arith.addf %153, %154 : vector<8x128xf32>
    %cst_88 = arith.constant 0.000000e+00 : f32
    %156 = vector.broadcast %cst_88 : f32 to vector<8x128xf32>
    %157 = arith.maximumf %155, %156 : vector<8x128xf32>
    %cst_89 = arith.constant 0.899999976 : f32
    %158 = vector.broadcast %cst_89 : f32 to vector<8x128xf32>
    %159 = arith.mulf %158, %146 : vector<8x128xf32>
    %cst_90 = arith.constant 1.000000e-01 : f32
    %160 = vector.broadcast %cst_90 : f32 to vector<8x128xf32>
    %161 = arith.mulf %160, %157 : vector<8x128xf32>
    %162 = arith.addf %159, %161 : vector<8x128xf32>
    %163 = arith.index_cast %c4_i32_84 : i32 to index
    %c0_91 = arith.constant 0 : index
    %c0_92 = arith.constant 0 : index
    %164 = vector.load %arg6[%163, %c0_91, %c0_92] : memref<8x8x128xf32, #tpu.memory_space<vmem>>, vector<1x8x128xf32>
    %165 = vector.shape_cast %164 : vector<1x8x128xf32> to vector<8x128xf32>
    %166 = vector.shape_cast %162 : vector<8x128xf32> to vector<1x8x128xf32>
    tpu.vector_store %arg6[%163, %c0_91, %c0_92], %166 {strides = array<i32>} : memref<8x8x128xf32, #tpu.memory_space<vmem>>, vector<1x8x128xf32>,
    %c5_i32_93 = arith.constant 5 : i32
    %167 = arith.index_cast %c5_i32_93 : i32 to index
    %c0_94 = arith.constant 0 : index
    %c0_95 = arith.constant 0 : index
    %168 = vector.load %arg6[%167, %c0_94, %c0_95] : memref<8x8x128xf32, #tpu.memory_space<vmem>>, vector<1x8x128xf32>
    %169 = vector.shape_cast %168 : vector<1x8x128xf32> to vector<8x128xf32>
    %cst_96 = arith.constant dense<0.000000e+00> : vector<8x128xf32>
    %170 = tpu.matmul %162, %5, %cst_96 {dimension_numbers = #tpu.dot_dimension_numbers<[1], [0], [0], [1], [0, 0, 1, 1], [], []>} : vector<8x128xf32>, vector<128x128xf32>, vector<8x128xf32> -> vector<8x128xf32>
    %171 = arith.addf %169, %170 : vector<8x128xf32>
    %cst_97 = arith.constant 0.000000e+00 : f32
    %172 = vector.broadcast %cst_97 : f32 to vector<8x128xf32>
    %173 = arith.maximumf %171, %172 : vector<8x128xf32>
    %cst_98 = arith.constant 0.899999976 : f32
    %174 = vector.broadcast %cst_98 : f32 to vector<8x128xf32>
    %175 = arith.mulf %174, %162 : vector<8x128xf32>
    %cst_99 = arith.constant 1.000000e-01 : f32
    %176 = vector.broadcast %cst_99 : f32 to vector<8x128xf32>
    %177 = arith.mulf %176, %173 : vector<8x128xf32>
    %178 = arith.addf %175, %177 : vector<8x128xf32>
    %179 = arith.index_cast %c5_i32_93 : i32 to index
    %c0_100 = arith.constant 0 : index
    %c0_101 = arith.constant 0 : index
    %180 = vector.load %arg6[%179, %c0_100, %c0_101] : memref<8x8x128xf32, #tpu.memory_space<vmem>>, vector<1x8x128xf32>
    %181 = vector.shape_cast %180 : vector<1x8x128xf32> to vector<8x128xf32>
    %182 = vector.shape_cast %178 : vector<8x128xf32> to vector<1x8x128xf32>
    tpu.vector_store %arg6[%179, %c0_100, %c0_101], %182 {strides = array<i32>} : memref<8x8x128xf32, #tpu.memory_space<vmem>>, vector<1x8x128xf32>,
    %c6_i32_102 = arith.constant 6 : i32
    %183 = arith.index_cast %c6_i32_102 : i32 to index
    %c0_103 = arith.constant 0 : index
    %c0_104 = arith.constant 0 : index
    %184 = vector.load %arg6[%183, %c0_103, %c0_104] : memref<8x8x128xf32, #tpu.memory_space<vmem>>, vector<1x8x128xf32>
    %185 = vector.shape_cast %184 : vector<1x8x128xf32> to vector<8x128xf32>
    %cst_105 = arith.constant dense<0.000000e+00> : vector<8x128xf32>
    %186 = tpu.matmul %178, %5, %cst_105 {dimension_numbers = #tpu.dot_dimension_numbers<[1], [0], [0], [1], [0, 0, 1, 1], [], []>} : vector<8x128xf32>, vector<128x128xf32>, vector<8x128xf32> -> vector<8x128xf32>
    %187 = arith.addf %185, %186 : vector<8x128xf32>
    %cst_106 = arith.constant 0.000000e+00 : f32
    %188 = vector.broadcast %cst_106 : f32 to vector<8x128xf32>
    %189 = arith.maximumf %187, %188 : vector<8x128xf32>
    %cst_107 = arith.constant 0.899999976 : f32
    %190 = vector.broadcast %cst_107 : f32 to vector<8x128xf32>
    %191 = arith.mulf %190, %178 : vector<8x128xf32>
    %cst_108 = arith.constant 1.000000e-01 : f32
    %192 = vector.broadcast %cst_108 : f32 to vector<8x128xf32>
    %193 = arith.mulf %192, %189 : vector<8x128xf32>
    %194 = arith.addf %191, %193 : vector<8x128xf32>
    %195 = arith.index_cast %c6_i32_102 : i32 to index
    %c0_109 = arith.constant 0 : index
    %c0_110 = arith.constant 0 : index
    %196 = vector.load %arg6[%195, %c0_109, %c0_110] : memref<8x8x128xf32, #tpu.memory_space<vmem>>, vector<1x8x128xf32>
    %197 = vector.shape_cast %196 : vector<1x8x128xf32> to vector<8x128xf32>
    %198 = vector.shape_cast %194 : vector<8x128xf32> to vector<1x8x128xf32>
    tpu.vector_store %arg6[%195, %c0_109, %c0_110], %198 {strides = array<i32>} : memref<8x8x128xf32, #tpu.memory_space<vmem>>, vector<1x8x128xf32>,
    %c7_i32_111 = arith.constant 7 : i32
    %199 = arith.index_cast %c7_i32_111 : i32 to index
    %c0_112 = arith.constant 0 : index
    %c0_113 = arith.constant 0 : index
    %200 = vector.load %arg6[%199, %c0_112, %c0_113] : memref<8x8x128xf32, #tpu.memory_space<vmem>>, vector<1x8x128xf32>
    %201 = vector.shape_cast %200 : vector<1x8x128xf32> to vector<8x128xf32>
    %cst_114 = arith.constant dense<0.000000e+00> : vector<8x128xf32>
    %202 = tpu.matmul %194, %5, %cst_114 {dimension_numbers = #tpu.dot_dimension_numbers<[1], [0], [0], [1], [0, 0, 1, 1], [], []>} : vector<8x128xf32>, vector<128x128xf32>, vector<8x128xf32> -> vector<8x128xf32>
    %203 = arith.addf %201, %202 : vector<8x128xf32>
    %cst_115 = arith.constant 0.000000e+00 : f32
    %204 = vector.broadcast %cst_115 : f32 to vector<8x128xf32>
    %205 = arith.maximumf %203, %204 : vector<8x128xf32>
    %cst_116 = arith.constant 0.899999976 : f32
    %206 = vector.broadcast %cst_116 : f32 to vector<8x128xf32>
    %207 = arith.mulf %206, %194 : vector<8x128xf32>
    %cst_117 = arith.constant 1.000000e-01 : f32
    %208 = vector.broadcast %cst_117 : f32 to vector<8x128xf32>
    %209 = arith.mulf %208, %205 : vector<8x128xf32>
    %210 = arith.addf %207, %209 : vector<8x128xf32>
    %211 = arith.index_cast %c7_i32_111 : i32 to index
    %c0_118 = arith.constant 0 : index
    %c0_119 = arith.constant 0 : index
    %212 = vector.load %arg6[%211, %c0_118, %c0_119] : memref<8x8x128xf32, #tpu.memory_space<vmem>>, vector<1x8x128xf32>
    %213 = vector.shape_cast %212 : vector<1x8x128xf32> to vector<8x128xf32>
    %214 = vector.shape_cast %210 : vector<8x128xf32> to vector<1x8x128xf32>
    tpu.vector_store %arg6[%211, %c0_118, %c0_119], %214 {strides = array<i32>} : memref<8x8x128xf32, #tpu.memory_space<vmem>>, vector<1x8x128xf32>,
    %c8_i32_120 = arith.constant 8 : i32
    %c0_121 = arith.constant 0 : index
    %c0_122 = arith.constant 0 : index
    %215 = vector.load %arg7[%c0_121, %c0_122] : memref<8x128xf32, #tpu.memory_space<vmem>>, vector<8x128xf32>
    tpu.vector_store %arg7[%c0_121, %c0_122], %210 {strides = array<i32>} : memref<8x128xf32, #tpu.memory_space<vmem>>, vector<8x128xf32>,
    return
  }
  func.func @transform_0(%arg0: i32, %arg1: i32) -> (i32, i32, i32) {
    %c0_i32 = arith.constant 0 : i32
    %c0_i32_0 = arith.constant 0 : i32
    return %arg1, %arg0, %c0_i32 : i32, i32, i32
  }
  func.func @transform_1(%arg0: i32, %arg1: i32) -> (i32, i32) {
    %c0_i32 = arith.constant 0 : i32
    %c0_i32_0 = arith.constant 0 : i32
    %c0_i32_1 = arith.constant 0 : i32
    return %c0_i32, %c0_i32_0 : i32, i32
  }
  func.func @transform_2(%arg0: i32, %arg1: i32) -> (i32, i32) {
    %c0_i32 = arith.constant 0 : i32
    %c0_i32_0 = arith.constant 0 : i32
    %c0_i32_1 = arith.constant 0 : i32
    return %c0_i32, %c0_i32_0 : i32, i32
  }
  func.func @transform_3(%arg0: i32, %arg1: i32) -> (i32, i32) {
    %c0_i32 = arith.constant 0 : i32
    %c0_i32_0 = arith.constant 0 : i32
    %c0_i32_1 = arith.constant 0 : i32
    return %c0_i32, %c0_i32_0 : i32, i32
  }
  func.func @transform_4(%arg0: i32, %arg1: i32) -> (i32, i32, i32) {
    %c0_i32 = arith.constant 0 : i32
    %c0_i32_0 = arith.constant 0 : i32
    return %arg1, %arg0, %c0_i32 : i32, i32, i32
  }
}

module attributes {stable_mosaic.version = 11 : i64} {
  func.func @_ctrnn_kernel(%arg0: i32, %arg1: i32, %arg2: memref<8x8x4xf32, #tpu.memory_space<vmem>>, %arg3: memref<4x128xf32, #tpu.memory_space<vmem>>, %arg4: memref<1x128xf32, #tpu.memory_space<vmem>>, %arg5: memref<128x128xf32, #tpu.memory_space<vmem>>, %arg6: memref<8x8x128xf32, #tpu.memory_space<vmem>>, %arg7: memref<8x128xf32, #tpu.memory_space<vmem>>) attributes {dimension_semantics = [#tpu.dimension_semantics<parallel>, #tpu.dimension_semantics<arbitrary>], iteration_bounds = array<i64: 1, 1>, scalar_prefetch = 0 : i64, scratch_operands = 1 : i64, tpu.core_type = #tpu.core_type<tc>, window_params = [{transform_indices = @transform_0, window_bounds = array<i64: 8, 8, 4>}, {pipeline_mode = #tpu.pipeline_mode<synchronous>, transform_indices = @transform_1, window_bounds = array<i64: 4, 128>}, {pipeline_mode = #tpu.pipeline_mode<synchronous>, transform_indices = @transform_2, window_bounds = array<i64: 1, 128>}, {pipeline_mode = #tpu.pipeline_mode<synchronous>, transform_indices = @transform_3, window_bounds = array<i64: 128, 128>}, {transform_indices = @transform_4, window_bounds = array<i64: 8, 8, 128>}]} {
    %c0_i32 = arith.constant 0 : i32
    %0 = arith.cmpi eq, %arg1, %c0_i32 : i32
    %1 = arith.extui %0 : i1 to i32
    %c0_i32_0 = arith.constant 0 : i32
    %2 = arith.cmpi ne, %1, %c0_i32_0 : i32
    scf.if %2 {
      %cst_123 = arith.constant 0.000000e+00 : f32
      %216 = vector.broadcast %cst_123 : f32 to vector<8x128xf32>
      %c0_124 = arith.constant 0 : index
      %c0_125 = arith.constant 0 : index
      %217 = vector.load %arg7[%c0_124, %c0_125] : memref<8x128xf32, #tpu.memory_space<vmem>>, vector<8x128xf32>
      tpu.vector_store %arg7[%c0_124, %c0_125], %216 {strides = array<i32>} : memref<8x128xf32, #tpu.memory_space<vmem>>, vector<8x128xf32>,
    } else {
    }
    %c0 = arith.constant 0 : index
    %c0_1 = arith.constant 0 : index
    %3 = vector.load %arg4[%c0, %c0_1] : memref<1x128xf32, #tpu.memory_space<vmem>>, vector<1x128xf32>
    %c0_2 = arith.constant 0 : index
    %c0_3 = arith.constant 0 : index
    %4 = vector.load %arg3[%c0_2, %c0_3] : memref<4x128xf32, #tpu.memory_space<vmem>>, vector<4x128xf32>
    %c0_4 = arith.constant 0 : index
    %c0_5 = arith.constant 0 : index
    %5 = vector.load %arg5[%c0_4, %c0_5] : memref<128x128xf32, #tpu.memory_space<vmem>>, vector<128x128xf32>
    %c0_i32_6 = arith.constant 0 : i32
    %6 = arith.index_cast %c0_i32_6 : i32 to index
    %c0_7 = arith.constant 0 : index
    %c0_8 = arith.constant 0 : index
    %7 = vector.load %arg2[%6, %c0_7, %c0_8] : memref<8x8x4xf32, #tpu.memory_space<vmem>>, vector<1x8x4xf32>
    %8 = vector.shape_cast %7 : vector<1x8x4xf32> to vector<8x4xf32>
    %cst = arith.constant dense<0.000000e+00> : vector<8x128xf32>
    %9 = tpu.matmul %8, %4, %cst {dimension_numbers = #tpu.dot_dimension_numbers<[1], [0], [0], [1], [0, 0, 1, 1], [], []>} : vector<8x4xf32>, vector<4x128xf32>, vector<8x128xf32> -> vector<8x128xf32>
    %10 = vector.broadcast %3 : vector<1x128xf32> to vector<8x128xf32>
    %11 = arith.addf %9, %10 : vector<8x128xf32>
    %12 = arith.index_cast %c0_i32_6 : i32 to index
    %c0_9 = arith.constant 0 : index
    %c0_10 = arith.constant 0 : index
    %13 = vector.load %arg6[%12, %c0_9, %c0_10] : memref<8x8x128xf32, #tpu.memory_space<vmem>>, vector<1x8x128xf32>
    %14 = vector.shape_cast %13 : vector<1x8x128xf32> to vector<8x128xf32>
    %15 = vector.shape_cast %11 : vector<8x128xf32> to vector<1x8x128xf32>
    tpu.vector_store %arg6[%12, %c0_9, %c0_10], %15 {strides = array<i32>} : memref<8x8x128xf32, #tpu.memory_space<vmem>>, vector<1x8x128xf32>,
    %c1_i32 = arith.constant 1 : i32
    %16 = arith.index_cast %c1_i32 : i32 to index
    %c0_11 = arith.constant 0 : index
    %c0_12 = arith.constant 0 : index
    %17 = vector.load %arg2[%16, %c0_11, %c0_12] : memref<8x8x4xf32, #tpu.memory_space<vmem>>, vector<1x8x4xf32>
    %18 = vector.shape_cast %17 : vector<1x8x4xf32> to vector<8x4xf32>
    %cst_13 = arith.constant dense<0.000000e+00> : vector<8x128xf32>
    %19 = tpu.matmul %18, %4, %cst_13 {dimension_numbers = #tpu.dot_dimension_numbers<[1], [0], [0], [1], [0, 0, 1, 1], [], []>} : vector<8x4xf32>, vector<4x128xf32>, vector<8x128xf32> -> vector<8x128xf32>
    %20 = vector.broadcast %3 : vector<1x128xf32> to vector<8x128xf32>
    %21 = arith.addf %19, %20 : vector<8x128xf32>
    %22 = arith.index_cast %c1_i32 : i32 to index
    %c0_14 = arith.constant 0 : index
    %c0_15 = arith.constant 0 : index
    %23 = vector.load %arg6[%22, %c0_14, %c0_15] : memref<8x8x128xf32, #tpu.memory_space<vmem>>, vector<1x8x128xf32>
    %24 = vector.shape_cast %23 : vector<1x8x128xf32> to vector<8x128xf32>
    %25 = vector.shape_cast %21 : vector<8x128xf32> to vector<1x8x128xf32>
    tpu.vector_store %arg6[%22, %c0_14, %c0_15], %25 {strides = array<i32>} : memref<8x8x128xf32, #tpu.memory_space<vmem>>, vector<1x8x128xf32>,
    %c2_i32 = arith.constant 2 : i32
    %26 = arith.index_cast %c2_i32 : i32 to index
    %c0_16 = arith.constant 0 : index
    %c0_17 = arith.constant 0 : index
    %27 = vector.load %arg2[%26, %c0_16, %c0_17] : memref<8x8x4xf32, #tpu.memory_space<vmem>>, vector<1x8x4xf32>
    %28 = vector.shape_cast %27 : vector<1x8x4xf32> to vector<8x4xf32>
    %cst_18 = arith.constant dense<0.000000e+00> : vector<8x128xf32>
    %29 = tpu.matmul %28, %4, %cst_18 {dimension_numbers = #tpu.dot_dimension_numbers<[1], [0], [0], [1], [0, 0, 1, 1], [], []>} : vector<8x4xf32>, vector<4x128xf32>, vector<8x128xf32> -> vector<8x128xf32>
    %30 = vector.broadcast %3 : vector<1x128xf32> to vector<8x128xf32>
    %31 = arith.addf %29, %30 : vector<8x128xf32>
    %32 = arith.index_cast %c2_i32 : i32 to index
    %c0_19 = arith.constant 0 : index
    %c0_20 = arith.constant 0 : index
    %33 = vector.load %arg6[%32, %c0_19, %c0_20] : memref<8x8x128xf32, #tpu.memory_space<vmem>>, vector<1x8x128xf32>
    %34 = vector.shape_cast %33 : vector<1x8x128xf32> to vector<8x128xf32>
    %35 = vector.shape_cast %31 : vector<8x128xf32> to vector<1x8x128xf32>
    tpu.vector_store %arg6[%32, %c0_19, %c0_20], %35 {strides = array<i32>} : memref<8x8x128xf32, #tpu.memory_space<vmem>>, vector<1x8x128xf32>,
    %c3_i32 = arith.constant 3 : i32
    %36 = arith.index_cast %c3_i32 : i32 to index
    %c0_21 = arith.constant 0 : index
    %c0_22 = arith.constant 0 : index
    %37 = vector.load %arg2[%36, %c0_21, %c0_22] : memref<8x8x4xf32, #tpu.memory_space<vmem>>, vector<1x8x4xf32>
    %38 = vector.shape_cast %37 : vector<1x8x4xf32> to vector<8x4xf32>
    %cst_23 = arith.constant dense<0.000000e+00> : vector<8x128xf32>
    %39 = tpu.matmul %38, %4, %cst_23 {dimension_numbers = #tpu.dot_dimension_numbers<[1], [0], [0], [1], [0, 0, 1, 1], [], []>} : vector<8x4xf32>, vector<4x128xf32>, vector<8x128xf32> -> vector<8x128xf32>
    %40 = vector.broadcast %3 : vector<1x128xf32> to vector<8x128xf32>
    %41 = arith.addf %39, %40 : vector<8x128xf32>
    %42 = arith.index_cast %c3_i32 : i32 to index
    %c0_24 = arith.constant 0 : index
    %c0_25 = arith.constant 0 : index
    %43 = vector.load %arg6[%42, %c0_24, %c0_25] : memref<8x8x128xf32, #tpu.memory_space<vmem>>, vector<1x8x128xf32>
    %44 = vector.shape_cast %43 : vector<1x8x128xf32> to vector<8x128xf32>
    %45 = vector.shape_cast %41 : vector<8x128xf32> to vector<1x8x128xf32>
    tpu.vector_store %arg6[%42, %c0_24, %c0_25], %45 {strides = array<i32>} : memref<8x8x128xf32, #tpu.memory_space<vmem>>, vector<1x8x128xf32>,
    %c4_i32 = arith.constant 4 : i32
    %46 = arith.index_cast %c4_i32 : i32 to index
    %c0_26 = arith.constant 0 : index
    %c0_27 = arith.constant 0 : index
    %47 = vector.load %arg2[%46, %c0_26, %c0_27] : memref<8x8x4xf32, #tpu.memory_space<vmem>>, vector<1x8x4xf32>
    %48 = vector.shape_cast %47 : vector<1x8x4xf32> to vector<8x4xf32>
    %cst_28 = arith.constant dense<0.000000e+00> : vector<8x128xf32>
    %49 = tpu.matmul %48, %4, %cst_28 {dimension_numbers = #tpu.dot_dimension_numbers<[1], [0], [0], [1], [0, 0, 1, 1], [], []>} : vector<8x4xf32>, vector<4x128xf32>, vector<8x128xf32> -> vector<8x128xf32>
    %50 = vector.broadcast %3 : vector<1x128xf32> to vector<8x128xf32>
    %51 = arith.addf %49, %50 : vector<8x128xf32>
    %52 = arith.index_cast %c4_i32 : i32 to index
    %c0_29 = arith.constant 0 : index
    %c0_30 = arith.constant 0 : index
    %53 = vector.load %arg6[%52, %c0_29, %c0_30] : memref<8x8x128xf32, #tpu.memory_space<vmem>>, vector<1x8x128xf32>
    %54 = vector.shape_cast %53 : vector<1x8x128xf32> to vector<8x128xf32>
    %55 = vector.shape_cast %51 : vector<8x128xf32> to vector<1x8x128xf32>
    tpu.vector_store %arg6[%52, %c0_29, %c0_30], %55 {strides = array<i32>} : memref<8x8x128xf32, #tpu.memory_space<vmem>>, vector<1x8x128xf32>,
    %c5_i32 = arith.constant 5 : i32
    %56 = arith.index_cast %c5_i32 : i32 to index
    %c0_31 = arith.constant 0 : index
    %c0_32 = arith.constant 0 : index
    %57 = vector.load %arg2[%56, %c0_31, %c0_32] : memref<8x8x4xf32, #tpu.memory_space<vmem>>, vector<1x8x4xf32>
    %58 = vector.shape_cast %57 : vector<1x8x4xf32> to vector<8x4xf32>
    %cst_33 = arith.constant dense<0.000000e+00> : vector<8x128xf32>
    %59 = tpu.matmul %58, %4, %cst_33 {dimension_numbers = #tpu.dot_dimension_numbers<[1], [0], [0], [1], [0, 0, 1, 1], [], []>} : vector<8x4xf32>, vector<4x128xf32>, vector<8x128xf32> -> vector<8x128xf32>
    %60 = vector.broadcast %3 : vector<1x128xf32> to vector<8x128xf32>
    %61 = arith.addf %59, %60 : vector<8x128xf32>
    %62 = arith.index_cast %c5_i32 : i32 to index
    %c0_34 = arith.constant 0 : index
    %c0_35 = arith.constant 0 : index
    %63 = vector.load %arg6[%62, %c0_34, %c0_35] : memref<8x8x128xf32, #tpu.memory_space<vmem>>, vector<1x8x128xf32>
    %64 = vector.shape_cast %63 : vector<1x8x128xf32> to vector<8x128xf32>
    %65 = vector.shape_cast %61 : vector<8x128xf32> to vector<1x8x128xf32>
    tpu.vector_store %arg6[%62, %c0_34, %c0_35], %65 {strides = array<i32>} : memref<8x8x128xf32, #tpu.memory_space<vmem>>, vector<1x8x128xf32>,
    %c6_i32 = arith.constant 6 : i32
    %66 = arith.index_cast %c6_i32 : i32 to index
    %c0_36 = arith.constant 0 : index
    %c0_37 = arith.constant 0 : index
    %67 = vector.load %arg2[%66, %c0_36, %c0_37] : memref<8x8x4xf32, #tpu.memory_space<vmem>>, vector<1x8x4xf32>
    %68 = vector.shape_cast %67 : vector<1x8x4xf32> to vector<8x4xf32>
    %cst_38 = arith.constant dense<0.000000e+00> : vector<8x128xf32>
    %69 = tpu.matmul %68, %4, %cst_38 {dimension_numbers = #tpu.dot_dimension_numbers<[1], [0], [0], [1], [0, 0, 1, 1], [], []>} : vector<8x4xf32>, vector<4x128xf32>, vector<8x128xf32> -> vector<8x128xf32>
    %70 = vector.broadcast %3 : vector<1x128xf32> to vector<8x128xf32>
    %71 = arith.addf %69, %70 : vector<8x128xf32>
    %72 = arith.index_cast %c6_i32 : i32 to index
    %c0_39 = arith.constant 0 : index
    %c0_40 = arith.constant 0 : index
    %73 = vector.load %arg6[%72, %c0_39, %c0_40] : memref<8x8x128xf32, #tpu.memory_space<vmem>>, vector<1x8x128xf32>
    %74 = vector.shape_cast %73 : vector<1x8x128xf32> to vector<8x128xf32>
    %75 = vector.shape_cast %71 : vector<8x128xf32> to vector<1x8x128xf32>
    tpu.vector_store %arg6[%72, %c0_39, %c0_40], %75 {strides = array<i32>} : memref<8x8x128xf32, #tpu.memory_space<vmem>>, vector<1x8x128xf32>,
    %c7_i32 = arith.constant 7 : i32
    %76 = arith.index_cast %c7_i32 : i32 to index
    %c0_41 = arith.constant 0 : index
    %c0_42 = arith.constant 0 : index
    %77 = vector.load %arg2[%76, %c0_41, %c0_42] : memref<8x8x4xf32, #tpu.memory_space<vmem>>, vector<1x8x4xf32>
    %78 = vector.shape_cast %77 : vector<1x8x4xf32> to vector<8x4xf32>
    %cst_43 = arith.constant dense<0.000000e+00> : vector<8x128xf32>
    %79 = tpu.matmul %78, %4, %cst_43 {dimension_numbers = #tpu.dot_dimension_numbers<[1], [0], [0], [1], [0, 0, 1, 1], [], []>} : vector<8x4xf32>, vector<4x128xf32>, vector<8x128xf32> -> vector<8x128xf32>
    %80 = vector.broadcast %3 : vector<1x128xf32> to vector<8x128xf32>
    %81 = arith.addf %79, %80 : vector<8x128xf32>
    %82 = arith.index_cast %c7_i32 : i32 to index
    %c0_44 = arith.constant 0 : index
    %c0_45 = arith.constant 0 : index
    %83 = vector.load %arg6[%82, %c0_44, %c0_45] : memref<8x8x128xf32, #tpu.memory_space<vmem>>, vector<1x8x128xf32>
    %84 = vector.shape_cast %83 : vector<1x8x128xf32> to vector<8x128xf32>
    %85 = vector.shape_cast %81 : vector<8x128xf32> to vector<1x8x128xf32>
    tpu.vector_store %arg6[%82, %c0_44, %c0_45], %85 {strides = array<i32>} : memref<8x8x128xf32, #tpu.memory_space<vmem>>, vector<1x8x128xf32>,
    %c8_i32 = arith.constant 8 : i32
    %c0_46 = arith.constant 0 : index
    %c0_47 = arith.constant 0 : index
    %86 = vector.load %arg7[%c0_46, %c0_47] : memref<8x128xf32, #tpu.memory_space<vmem>>, vector<8x128xf32>
    %c0_i32_48 = arith.constant 0 : i32
    %87 = arith.index_cast %c0_i32_48 : i32 to index
    %c0_49 = arith.constant 0 : index
    %c0_50 = arith.constant 0 : index
    %88 = vector.load %arg6[%87, %c0_49, %c0_50] : memref<8x8x128xf32, #tpu.memory_space<vmem>>, vector<1x8x128xf32>
    %89 = vector.shape_cast %88 : vector<1x8x128xf32> to vector<8x128xf32>
    %cst_51 = arith.constant dense<0.000000e+00> : vector<8x128xf32>
    %90 = tpu.matmul %86, %5, %cst_51 {dimension_numbers = #tpu.dot_dimension_numbers<[1], [0], [0], [1], [0, 0, 1, 1], [], []>} : vector<8x128xf32>, vector<128x128xf32>, vector<8x128xf32> -> vector<8x128xf32>
    %91 = arith.addf %89, %90 : vector<8x128xf32>
    %cst_52 = arith.constant 0.000000e+00 : f32
    %92 = vector.broadcast %cst_52 : f32 to vector<8x128xf32>
    %93 = arith.maximumf %91, %92 : vector<8x128xf32>
    %cst_53 = arith.constant 0.899999976 : f32
    %94 = vector.broadcast %cst_53 : f32 to vector<8x128xf32>
    %95 = arith.mulf %94, %86 : vector<8x128xf32>
    %cst_54 = arith.constant 1.000000e-01 : f32
    %96 = vector.broadcast %cst_54 : f32 to vector<8x128xf32>
    %97 = arith.mulf %96, %93 : vector<8x128xf32>
    %98 = arith.addf %95, %97 : vector<8x128xf32>
    %99 = arith.index_cast %c0_i32_48 : i32 to index
    %c0_55 = arith.constant 0 : index
    %c0_56 = arith.constant 0 : index
    %100 = vector.load %arg6[%99, %c0_55, %c0_56] : memref<8x8x128xf32, #tpu.memory_space<vmem>>, vector<1x8x128xf32>
    %101 = vector.shape_cast %100 : vector<1x8x128xf32> to vector<8x128xf32>
    %102 = vector.shape_cast %98 : vector<8x128xf32> to vector<1x8x128xf32>
    tpu.vector_store %arg6[%99, %c0_55, %c0_56], %102 {strides = array<i32>} : memref<8x8x128xf32, #tpu.memory_space<vmem>>, vector<1x8x128xf32>,
    %c1_i32_57 = arith.constant 1 : i32
    %103 = arith.index_cast %c1_i32_57 : i32 to index
    %c0_58 = arith.constant 0 : index
    %c0_59 = arith.constant 0 : index
    %104 = vector.load %arg6[%103, %c0_58, %c0_59] : memref<8x8x128xf32, #tpu.memory_space<vmem>>, vector<1x8x128xf32>
    %105 = vector.shape_cast %104 : vector<1x8x128xf32> to vector<8x128xf32>
    %cst_60 = arith.constant dense<0.000000e+00> : vector<8x128xf32>
    %106 = tpu.matmul %98, %5, %cst_60 {dimension_numbers = #tpu.dot_dimension_numbers<[1], [0], [0], [1], [0, 0, 1, 1], [], []>} : vector<8x128xf32>, vector<128x128xf32>, vector<8x128xf32> -> vector<8x128xf32>
    %107 = arith.addf %105, %106 : vector<8x128xf32>
    %cst_61 = arith.constant 0.000000e+00 : f32
    %108 = vector.broadcast %cst_61 : f32 to vector<8x128xf32>
    %109 = arith.maximumf %107, %108 : vector<8x128xf32>
    %cst_62 = arith.constant 0.899999976 : f32
    %110 = vector.broadcast %cst_62 : f32 to vector<8x128xf32>
    %111 = arith.mulf %110, %98 : vector<8x128xf32>
    %cst_63 = arith.constant 1.000000e-01 : f32
    %112 = vector.broadcast %cst_63 : f32 to vector<8x128xf32>
    %113 = arith.mulf %112, %109 : vector<8x128xf32>
    %114 = arith.addf %111, %113 : vector<8x128xf32>
    %115 = arith.index_cast %c1_i32_57 : i32 to index
    %c0_64 = arith.constant 0 : index
    %c0_65 = arith.constant 0 : index
    %116 = vector.load %arg6[%115, %c0_64, %c0_65] : memref<8x8x128xf32, #tpu.memory_space<vmem>>, vector<1x8x128xf32>
    %117 = vector.shape_cast %116 : vector<1x8x128xf32> to vector<8x128xf32>
    %118 = vector.shape_cast %114 : vector<8x128xf32> to vector<1x8x128xf32>
    tpu.vector_store %arg6[%115, %c0_64, %c0_65], %118 {strides = array<i32>} : memref<8x8x128xf32, #tpu.memory_space<vmem>>, vector<1x8x128xf32>,
    %c2_i32_66 = arith.constant 2 : i32
    %119 = arith.index_cast %c2_i32_66 : i32 to index
    %c0_67 = arith.constant 0 : index
    %c0_68 = arith.constant 0 : index
    %120 = vector.load %arg6[%119, %c0_67, %c0_68] : memref<8x8x128xf32, #tpu.memory_space<vmem>>, vector<1x8x128xf32>
    %121 = vector.shape_cast %120 : vector<1x8x128xf32> to vector<8x128xf32>
    %cst_69 = arith.constant dense<0.000000e+00> : vector<8x128xf32>
    %122 = tpu.matmul %114, %5, %cst_69 {dimension_numbers = #tpu.dot_dimension_numbers<[1], [0], [0], [1], [0, 0, 1, 1], [], []>} : vector<8x128xf32>, vector<128x128xf32>, vector<8x128xf32> -> vector<8x128xf32>
    %123 = arith.addf %121, %122 : vector<8x128xf32>
    %cst_70 = arith.constant 0.000000e+00 : f32
    %124 = vector.broadcast %cst_70 : f32 to vector<8x128xf32>
    %125 = arith.maximumf %123, %124 : vector<8x128xf32>
    %cst_71 = arith.constant 0.899999976 : f32
    %126 = vector.broadcast %cst_71 : f32 to vector<8x128xf32>
    %127 = arith.mulf %126, %114 : vector<8x128xf32>
    %cst_72 = arith.constant 1.000000e-01 : f32
    %128 = vector.broadcast %cst_72 : f32 to vector<8x128xf32>
    %129 = arith.mulf %128, %125 : vector<8x128xf32>
    %130 = arith.addf %127, %129 : vector<8x128xf32>
    %131 = arith.index_cast %c2_i32_66 : i32 to index
    %c0_73 = arith.constant 0 : index
    %c0_74 = arith.constant 0 : index
    %132 = vector.load %arg6[%131, %c0_73, %c0_74] : memref<8x8x128xf32, #tpu.memory_space<vmem>>, vector<1x8x128xf32>
    %133 = vector.shape_cast %132 : vector<1x8x128xf32> to vector<8x128xf32>
    %134 = vector.shape_cast %130 : vector<8x128xf32> to vector<1x8x128xf32>
    tpu.vector_store %arg6[%131, %c0_73, %c0_74], %134 {strides = array<i32>} : memref<8x8x128xf32, #tpu.memory_space<vmem>>, vector<1x8x128xf32>,
    %c3_i32_75 = arith.constant 3 : i32
    %135 = arith.index_cast %c3_i32_75 : i32 to index
    %c0_76 = arith.constant 0 : index
    %c0_77 = arith.constant 0 : index
    %136 = vector.load %arg6[%135, %c0_76, %c0_77] : memref<8x8x128xf32, #tpu.memory_space<vmem>>, vector<1x8x128xf32>
    %137 = vector.shape_cast %136 : vector<1x8x128xf32> to vector<8x128xf32>
    %cst_78 = arith.constant dense<0.000000e+00> : vector<8x128xf32>
    %138 = tpu.matmul %130, %5, %cst_78 {dimension_numbers = #tpu.dot_dimension_numbers<[1], [0], [0], [1], [0, 0, 1, 1], [], []>} : vector<8x128xf32>, vector<128x128xf32>, vector<8x128xf32> -> vector<8x128xf32>
    %139 = arith.addf %137, %138 : vector<8x128xf32>
    %cst_79 = arith.constant 0.000000e+00 : f32
    %140 = vector.broadcast %cst_79 : f32 to vector<8x128xf32>
    %141 = arith.maximumf %139, %140 : vector<8x128xf32>
    %cst_80 = arith.constant 0.899999976 : f32
    %142 = vector.broadcast %cst_80 : f32 to vector<8x128xf32>
    %143 = arith.mulf %142, %130 : vector<8x128xf32>
    %cst_81 = arith.constant 1.000000e-01 : f32
    %144 = vector.broadcast %cst_81 : f32 to vector<8x128xf32>
    %145 = arith.mulf %144, %141 : vector<8x128xf32>
    %146 = arith.addf %143, %145 : vector<8x128xf32>
    %147 = arith.index_cast %c3_i32_75 : i32 to index
    %c0_82 = arith.constant 0 : index
    %c0_83 = arith.constant 0 : index
    %148 = vector.load %arg6[%147, %c0_82, %c0_83] : memref<8x8x128xf32, #tpu.memory_space<vmem>>, vector<1x8x128xf32>
    %149 = vector.shape_cast %148 : vector<1x8x128xf32> to vector<8x128xf32>
    %150 = vector.shape_cast %146 : vector<8x128xf32> to vector<1x8x128xf32>
    tpu.vector_store %arg6[%147, %c0_82, %c0_83], %150 {strides = array<i32>} : memref<8x8x128xf32, #tpu.memory_space<vmem>>, vector<1x8x128xf32>,
    %c4_i32_84 = arith.constant 4 : i32
    %151 = arith.index_cast %c4_i32_84 : i32 to index
    %c0_85 = arith.constant 0 : index
    %c0_86 = arith.constant 0 : index
    %152 = vector.load %arg6[%151, %c0_85, %c0_86] : memref<8x8x128xf32, #tpu.memory_space<vmem>>, vector<1x8x128xf32>
    %153 = vector.shape_cast %152 : vector<1x8x128xf32> to vector<8x128xf32>
    %cst_87 = arith.constant dense<0.000000e+00> : vector<8x128xf32>
    %154 = tpu.matmul %146, %5, %cst_87 {dimension_numbers = #tpu.dot_dimension_numbers<[1], [0], [0], [1], [0, 0, 1, 1], [], []>} : vector<8x128xf32>, vector<128x128xf32>, vector<8x128xf32> -> vector<8x128xf32>
    %155 = arith.addf %153, %154 : vector<8x128xf32>
    %cst_88 = arith.constant 0.000000e+00 : f32
    %156 = vector.broadcast %cst_88 : f32 to vector<8x128xf32>
    %157 = arith.maximumf %155, %156 : vector<8x128xf32>
    %cst_89 = arith.constant 0.899999976 : f32
    %158 = vector.broadcast %cst_89 : f32 to vector<8x128xf32>
    %159 = arith.mulf %158, %146 : vector<8x128xf32>
    %cst_90 = arith.constant 1.000000e-01 : f32
    %160 = vector.broadcast %cst_90 : f32 to vector<8x128xf32>
    %161 = arith.mulf %160, %157 : vector<8x128xf32>
    %162 = arith.addf %159, %161 : vector<8x128xf32>
    %163 = arith.index_cast %c4_i32_84 : i32 to index
    %c0_91 = arith.constant 0 : index
    %c0_92 = arith.constant 0 : index
    %164 = vector.load %arg6[%163, %c0_91, %c0_92] : memref<8x8x128xf32, #tpu.memory_space<vmem>>, vector<1x8x128xf32>
    %165 = vector.shape_cast %164 : vector<1x8x128xf32> to vector<8x128xf32>
    %166 = vector.shape_cast %162 : vector<8x128xf32> to vector<1x8x128xf32>
    tpu.vector_store %arg6[%163, %c0_91, %c0_92], %166 {strides = array<i32>} : memref<8x8x128xf32, #tpu.memory_space<vmem>>, vector<1x8x128xf32>,
    %c5_i32_93 = arith.constant 5 : i32
    %167 = arith.index_cast %c5_i32_93 : i32 to index
    %c0_94 = arith.constant 0 : index
    %c0_95 = arith.constant 0 : index
    %168 = vector.load %arg6[%167, %c0_94, %c0_95] : memref<8x8x128xf32, #tpu.memory_space<vmem>>, vector<1x8x128xf32>
    %169 = vector.shape_cast %168 : vector<1x8x128xf32> to vector<8x128xf32>
    %cst_96 = arith.constant dense<0.000000e+00> : vector<8x128xf32>
    %170 = tpu.matmul %162, %5, %cst_96 {dimension_numbers = #tpu.dot_dimension_numbers<[1], [0], [0], [1], [0, 0, 1, 1], [], []>} : vector<8x128xf32>, vector<128x128xf32>, vector<8x128xf32> -> vector<8x128xf32>
    %171 = arith.addf %169, %170 : vector<8x128xf32>
    %cst_97 = arith.constant 0.000000e+00 : f32
    %172 = vector.broadcast %cst_97 : f32 to vector<8x128xf32>
    %173 = arith.maximumf %171, %172 : vector<8x128xf32>
    %cst_98 = arith.constant 0.899999976 : f32
    %174 = vector.broadcast %cst_98 : f32 to vector<8x128xf32>
    %175 = arith.mulf %174, %162 : vector<8x128xf32>
    %cst_99 = arith.constant 1.000000e-01 : f32
    %176 = vector.broadcast %cst_99 : f32 to vector<8x128xf32>
    %177 = arith.mulf %176, %173 : vector<8x128xf32>
    %178 = arith.addf %175, %177 : vector<8x128xf32>
    %179 = arith.index_cast %c5_i32_93 : i32 to index
    %c0_100 = arith.constant 0 : index
    %c0_101 = arith.constant 0 : index
    %180 = vector.load %arg6[%179, %c0_100, %c0_101] : memref<8x8x128xf32, #tpu.memory_space<vmem>>, vector<1x8x128xf32>
    %181 = vector.shape_cast %180 : vector<1x8x128xf32> to vector<8x128xf32>
    %182 = vector.shape_cast %178 : vector<8x128xf32> to vector<1x8x128xf32>
    tpu.vector_store %arg6[%179, %c0_100, %c0_101], %182 {strides = array<i32>} : memref<8x8x128xf32, #tpu.memory_space<vmem>>, vector<1x8x128xf32>,
    %c6_i32_102 = arith.constant 6 : i32
    %183 = arith.index_cast %c6_i32_102 : i32 to index
    %c0_103 = arith.constant 0 : index
    %c0_104 = arith.constant 0 : index
    %184 = vector.load %arg6[%183, %c0_103, %c0_104] : memref<8x8x128xf32, #tpu.memory_space<vmem>>, vector<1x8x128xf32>
    %185 = vector.shape_cast %184 : vector<1x8x128xf32> to vector<8x128xf32>
    %cst_105 = arith.constant dense<0.000000e+00> : vector<8x128xf32>
    %186 = tpu.matmul %178, %5, %cst_105 {dimension_numbers = #tpu.dot_dimension_numbers<[1], [0], [0], [1], [0, 0, 1, 1], [], []>} : vector<8x128xf32>, vector<128x128xf32>, vector<8x128xf32> -> vector<8x128xf32>
    %187 = arith.addf %185, %186 : vector<8x128xf32>
    %cst_106 = arith.constant 0.000000e+00 : f32
    %188 = vector.broadcast %cst_106 : f32 to vector<8x128xf32>
    %189 = arith.maximumf %187, %188 : vector<8x128xf32>
    %cst_107 = arith.constant 0.899999976 : f32
    %190 = vector.broadcast %cst_107 : f32 to vector<8x128xf32>
    %191 = arith.mulf %190, %178 : vector<8x128xf32>
    %cst_108 = arith.constant 1.000000e-01 : f32
    %192 = vector.broadcast %cst_108 : f32 to vector<8x128xf32>
    %193 = arith.mulf %192, %189 : vector<8x128xf32>
    %194 = arith.addf %191, %193 : vector<8x128xf32>
    %195 = arith.index_cast %c6_i32_102 : i32 to index
    %c0_109 = arith.constant 0 : index
    %c0_110 = arith.constant 0 : index
    %196 = vector.load %arg6[%195, %c0_109, %c0_110] : memref<8x8x128xf32, #tpu.memory_space<vmem>>, vector<1x8x128xf32>
    %197 = vector.shape_cast %196 : vector<1x8x128xf32> to vector<8x128xf32>
    %198 = vector.shape_cast %194 : vector<8x128xf32> to vector<1x8x128xf32>
    tpu.vector_store %arg6[%195, %c0_109, %c0_110], %198 {strides = array<i32>} : memref<8x8x128xf32, #tpu.memory_space<vmem>>, vector<1x8x128xf32>,
    %c7_i32_111 = arith.constant 7 : i32
    %199 = arith.index_cast %c7_i32_111 : i32 to index
    %c0_112 = arith.constant 0 : index
    %c0_113 = arith.constant 0 : index
    %200 = vector.load %arg6[%199, %c0_112, %c0_113] : memref<8x8x128xf32, #tpu.memory_space<vmem>>, vector<1x8x128xf32>
    %201 = vector.shape_cast %200 : vector<1x8x128xf32> to vector<8x128xf32>
    %cst_114 = arith.constant dense<0.000000e+00> : vector<8x128xf32>
    %202 = tpu.matmul %194, %5, %cst_114 {dimension_numbers = #tpu.dot_dimension_numbers<[1], [0], [0], [1], [0, 0, 1, 1], [], []>} : vector<8x128xf32>, vector<128x128xf32>, vector<8x128xf32> -> vector<8x128xf32>
    %203 = arith.addf %201, %202 : vector<8x128xf32>
    %cst_115 = arith.constant 0.000000e+00 : f32
    %204 = vector.broadcast %cst_115 : f32 to vector<8x128xf32>
    %205 = arith.maximumf %203, %204 : vector<8x128xf32>
    %cst_116 = arith.constant 0.899999976 : f32
    %206 = vector.broadcast %cst_116 : f32 to vector<8x128xf32>
    %207 = arith.mulf %206, %194 : vector<8x128xf32>
    %cst_117 = arith.constant 1.000000e-01 : f32
    %208 = vector.broadcast %cst_117 : f32 to vector<8x128xf32>
    %209 = arith.mulf %208, %205 : vector<8x128xf32>
    %210 = arith.addf %207, %209 : vector<8x128xf32>
    %211 = arith.index_cast %c7_i32_111 : i32 to index
    %c0_118 = arith.constant 0 : index
    %c0_119 = arith.constant 0 : index
    %212 = vector.load %arg6[%211, %c0_118, %c0_119] : memref<8x8x128xf32, #tpu.memory_space<vmem>>, vector<1x8x128xf32>
    %213 = vector.shape_cast %212 : vector<1x8x128xf32> to vector<8x128xf32>
    %214 = vector.shape_cast %210 : vector<8x128xf32> to vector<1x8x128xf32>
    tpu.vector_store %arg6[%211, %c0_118, %c0_119], %214 {strides = array<i32>} : memref<8x8x128xf32, #tpu.memory_space<vmem>>, vector<1x8x128xf32>,
    %c8_i32_120 = arith.constant 8 : i32
    %c0_121 = arith.constant 0 : index
    %c0_122 = arith.constant 0 : index
    %215 = vector.load %arg7[%c0_121, %c0_122] : memref<8x128xf32, #tpu.memory_space<vmem>>, vector<8x128xf32>
    tpu.vector_store %arg7[%c0_121, %c0_122], %210 {strides = array<i32>} : memref<8x128xf32, #tpu.memory_space<vmem>>, vector<8x128xf32>,
    return
  }
  func.func @transform_0(%arg0: i32, %arg1: i32) -> (i32, i32, i32) {
    %c0_i32 = arith.constant 0 : i32
    %c0_i32_0 = arith.constant 0 : i32
    return %arg1, %arg0, %c0_i32 : i32, i32, i32
  }
  func.func @transform_1(%arg0: i32, %arg1: i32) -> (i32, i32) {
    %c0_i32 = arith.constant 0 : i32
    %c0_i32_0 = arith.constant 0 : i32
    %c0_i32_1 = arith.constant 0 : i32
    return %c0_i32, %c0_i32_0 : i32, i32
  }
  func.func @transform_2(%arg0: i32, %arg1: i32) -> (i32, i32) {
    %c0_i32 = arith.constant 0 : i32
    %c0_i32_0 = arith.constant 0 : i32
    %c0_i32_1 = arith.constant 0 : i32
    return %c0_i32, %c0_i32_0 : i32, i32
  }
  func.func @transform_3(%arg0: i32, %arg1: i32) -> (i32, i32) {
    %c0_i32 = arith.constant 0 : i32
    %c0_i32_0 = arith.constant 0 : i32
    %c0_i32_1 = arith.constant 0 : i32
    return %c0_i32, %c0_i32_0 : i32, i32
  }
  func.func @transform_4(%arg0: i32, %arg1: i32) -> (i32, i32, i32) {
    %c0_i32 = arith.constant 0 : i32
    %c0_i32_0 = arith.constant 0 : i32
    return %arg1, %arg0, %c0_i32 : i32, i32, i32
  }
}

</mosaic_0001>

<llo_original>
// kernel: tpu_custom_call.1
$region0: #{tpu_custom_call.1}
  #allocation0 [shape = 'u32[]', space=smem, size = 0x4, offset = 0x4, fixed_abs, tag = 'smem constant byte address 0x4 - core index']
  #allocation1 [shape = 'u32[144,128]{1,0:T(1,128)}', space=vmem, size = 0x12000, scoped, tag = 'internal scratch']
  #allocation2 [shape = 'f32[8,128]{1,0:T(8,128)}', space=vmem, size = 0x1000, scoped, tag = 'scratch operand']
  %s0 = inlined_call_operand.vmem [shape: f32[8,8,4], index: 0, kind: input, shape index: {}]
  %s1 = inlined_call_operand.vmem [shape: f32[4,128], index: 1, kind: input, shape index: {}]
  %s2 = inlined_call_operand.vmem [shape: f32[1,128], index: 2, kind: input, shape index: {}]
  %s3 = inlined_call_operand.hbm [shape: f32[128,128], index: 3, kind: input, shape index: {}]
  %s4 = inlined_call_operand.hbm [shape: f32[8,8,128], index: 4, kind: output, shape index: {}]
  %s5 = sld [smem:[#allocation0]]
  $region34: #{tpu_custom_call.1} parent=0
    _
  %s7 = ssub.s32 1, %s5
  %s8 = scalar_select 0, %s7, %s5
  $region1: #{tpu_custom_call.1} parent=0
    #allocation3 [shape = 'u8[65536]{0}', space=vmem, size = 0x10000, scoped, tag = 'input window, operand 3, single buffered']
    #allocation4 [shape = 's32[1]{0}', space=sflag, size = 0x4, scoped, tag = 'scoped memory for tpu_custom_call.1']
    #allocation5 [shape = 's32[1]{0}', space=sflag, size = 0x4, scoped, tag = 'scoped memory for tpu_custom_call.1']
    #allocation6 [shape = 'u8[32768]{0}', space=vmem, size = 0x8000, scoped, tag = 'output window, operand 0, single buffered']
    %9 = vsyncpa [#allocation4], 0
    %10 = vsyncpa [#allocation5], 0
    // Predicated region
    $region2: #{tpu_custom_call.1} parent=1 // pred_check
      _
    $region3: #{tpu_custom_call.1} parent=1 // pred_check_branch
      %12 = sbr.rel (0) target = $region5
    $region4: #{tpu_custom_call.1} parent=1 // pred_region
      _
    $region5: #{tpu_custom_call.1} parent=1 // pred_fallthru
      _
    // Predicated region
    $region6: #{tpu_custom_call.1} parent=1 // pred_check
      _
    $region7: #{tpu_custom_call.1} parent=1 // pred_check_branch
      %14 = sbr.rel (0) target = $region9
    $region8: #{tpu_custom_call.1} parent=1 // pred_region
      _
    $region9: #{tpu_custom_call.1} parent=1 // pred_fallthru
      _
    // Predicated region
    $region10: #{tpu_custom_call.1} parent=1 // pred_check
      _
    $region11: #{tpu_custom_call.1} parent=1 // pred_check_branch
      %16 = sbr.rel (0) target = $region13
    $region12: #{tpu_custom_call.1} parent=1 // pred_region
      _
    $region13: #{tpu_custom_call.1} parent=1 // pred_fallthru
      _
    // Predicated region
    $region14: #{tpu_custom_call.1} parent=1 // pred_check
      _
    $region15: #{tpu_custom_call.1} parent=1 // pred_check_branch
      %18 = sbr.rel (0) target = $region17
    $region16: #{tpu_custom_call.1} parent=1 // pred_region
      %s20 = ssub.s32 2048, 2048
      %21 = vsyncadd [#allocation4], %s20
      %s22 = sshll.u32 [#allocation3], 4
      %s23 = int_to_ptr.vmem [resolvable:$true] %s22
      %28 = dma.hbm_to_vmem [thread:$0]  %s3, 2048, %s23, [#allocation4], 128, 128, 8
    $region17: #{tpu_custom_call.1} parent=1 // pred_fallthru
      _
    // Predicated region
    $region18: #{tpu_custom_call.1} parent=1 // pred_check
      _
    $region19: #{tpu_custom_call.1} parent=1 // pred_check_branch
      %30 = sbr.rel (0) target = $region21
    $region20: #{tpu_custom_call.1} parent=1 // pred_region
      %31 = dma.done [#allocation4], 2048
    $region21: #{tpu_custom_call.1} parent=1 // pred_fallthru
      _
    %p32 = scmp.eq.s32.totalorder 0, 0
    // Predicated region
    $region22: #{tpu_custom_call.1} parent=1 // pred_check
      %p33 = pneg %p32
    $region23: #{tpu_custom_call.1} parent=1 // pred_check_branch
      %35 = sbr.rel (%p33) target = $region25
    $region24: #{tpu_custom_call.1} parent=1 // pred_region
      %36 = vst [vmem:[#allocation2] sm:$0xff] 0.0
    $region25: #{tpu_custom_call.1} parent=1 // pred_fallthru
      _
    %v37 = vld [vmem:[%s2] sm:$0x1]
    %v38 = vld [vmem:[%s1] sm:$0xf]
    %v39 = vld [vmem:[#allocation3] sm:$0xff]
    %v40 = vld [vmem:[#allocation3 + $0x8] sm:$0xff]
    %v41 = vld [vmem:[#allocation3 + $0x10] sm:$0xff]
    %v42 = vld [vmem:[#allocation3 + $0x18] sm:$0xff]
    %v43 = vld [vmem:[#allocation3 + $0x20] sm:$0xff]
    %v44 = vld [vmem:[#allocation3 + $0x28] sm:$0xff]
    %v45 = vld [vmem:[#allocation3 + $0x30] sm:$0xff]
    %v46 = vld [vmem:[#allocation3 + $0x38] sm:$0xff]
    %v47 = vld [vmem:[#allocation3 + $0x40] sm:$0xff]
    %v48 = vld [vmem:[#allocation3 + $0x48] sm:$0xff]
    %v49 = vld [vmem:[#allocation3 + $0x50] sm:$0xff]
    %v50 = vld [vmem:[#allocation3 + $0x58] sm:$0xff]
    %v51 = vld [vmem:[#allocation3 + $0x60] sm:$0xff]
    %v52 = vld [vmem:[#allocation3 + $0x68] sm:$0xff]
    %v53 = vld [vmem:[#allocation3 + $0x70] sm:$0xff]
    %v54 = vld [vmem:[#allocation3 + $0x78] sm:$0xff]
    %v55 = vld [vmem:[%s0] sm:$0xff]
    %v57 = vlaneseq
    %v58 = vshrl.u32 %v57, 7
    %v59 = vsub.s32 0, %v58
    %v60 = vrot.slane %v37, %v59
    %vm62 = vcmask 31744
    %v64 = vsel %vm62, %v55, 0
    %vm66 = vcmask 1043456
    %v68 = vsel %vm66, %v38, 0
    %70 = vmatprep.subr.mxu0 0.0
    %71 = vmatpush1.msra.mxu0 0.0
    %72 = vmatprep.subr.mxu0 0.0
    %73 = vmatpush1.msra.mxu0 0.0
    %74 = vmatprep.subr.mxu0 0.0
    %75 = vmatpush1.msra.mxu0 0.0
    %76 = vmatprep.subr.mxu0 0.0
    %77 = vmatpush1.msra.mxu0 0.0
    %78 = vmatprep.subr.mxu0 0.0
    %79 = vmatpush1.msra.mxu0 0.0
    %80 = vmatprep.subr.mxu0 0.0
    %81 = vmatpush1.msra.mxu0 0.0
    %82 = vmatprep.subr.mxu0 0.0
    %83 = vmatpush1.msra.mxu0 0.0
    %84 = vmatprep.subr.mxu0 0.0
    %85 = vmatpush1.msra.mxu0 0.0
    %86 = vmatprep.subr.mxu0 0.0
    %87 = vmatpush1.msra.mxu0 0.0
    %88 = vmatprep.subr.mxu0 0.0
    %89 = vmatpush1.msra.mxu0 0.0
    %90 = vmatprep.subr.mxu0 0.0
    %91 = vmatpush1.msra.mxu0 0.0
    %92 = vmatprep.subr.mxu0 0.0
    %93 = vmatpush1.msra.mxu0 0.0
    %94 = vmatprep.subr.mxu0 0.0
    %95 = vmatpush1.msra.mxu0 0.0
    %96 = vmatprep.subr.mxu0 0.0
    %97 = vmatpush1.msra.mxu0 0.0
    %98 = vmatprep.subr.mxu0 0.0
    %99 = vmatpush1.msra.mxu0 0.0
    %100 = vmatprep.subr.mxu0 0.0
    %101 = vmatpush1.msra.mxu0 %v68
    %102 = vmatprep.subr.mxu0 0.0
    %103 = vmatpush2.msra.mxu0 0.0
    %104 = vmatprep.subr.mxu0 0.0
    %105 = vmatpush2.msra.mxu0 0.0
    %106 = vmatprep.subr.mxu0 0.0
    %107 = vmatpush2.msra.mxu0 0.0
    %108 = vmatprep.subr.mxu0 0.0
    %109 = vmatpush2.msra.mxu0 0.0
    %110 = vmatprep.subr.mxu0 0.0
    %111 = vmatpush2.msra.mxu0 0.0
    %112 = vmatprep.subr.mxu0 0.0
    %113 = vmatpush2.msra.mxu0 0.0
    %114 = vmatprep.subr.mxu0 0.0
    %115 = vmatpush2.msra.mxu0 0.0
    %116 = vmatprep.subr.mxu0 0.0
    %117 = vmatpush2.msra.mxu0 0.0
    %118 = vmatprep.subr.mxu0 0.0
    %119 = vmatpush2.msra.mxu0 0.0
    %120 = vmatprep.subr.mxu0 0.0
    %121 = vmatpush2.msra.mxu0 0.0
    %122 = vmatprep.subr.mxu0 0.0
    %123 = vmatpush2.msra.mxu0 0.0
    %124 = vmatprep.subr.mxu0 0.0
    %125 = vmatpush2.msra.mxu0 0.0
    %126 = vmatprep.subr.mxu0 0.0
    %127 = vmatpush2.msra.mxu0 0.0
    %128 = vmatprep.subr.mxu0 0.0
    %129 = vmatpush2.msra.mxu0 0.0
    %130 = vmatprep.subr.mxu0 0.0
    %131 = vmatpush2.msra.mxu0 0.0
    %132 = vmatprep.subr.mxu0 0.0
    %133 = vmatpush2.msra.mxu0 0.0
    %134 = vmatprep.mubr.f32.mxu0 0.0
    %135 = vmatmul.mubr.f32.gmra.mxu0 %v64
    %v136 = vpop.f32.mrf.mxu0
    %v137 = vadd.f32 %v60, %v136
    %v138 = vpop.f32.mrf.mxu0
    %139 = vdwg.mxu0
    %140 = vst [vmem:[#allocation6] sm:$0xff] %v137
    %s141 = scalar_lea.vmem %s0, 8
    %v142 = vld [vmem:[%s141] sm:$0xff]
    %v144 = vsel %vm62, %v142, 0
    %146 = vmatprep.subr.mxu0 0.0
    %147 = vmatpush1.msra.mxu0 0.0
    %148 = vmatprep.subr.mxu0 0.0
    %149 = vmatpush1.msra.mxu0 0.0
    %150 = vmatprep.subr.mxu0 0.0
    %151 = vmatpush1.msra.mxu0 0.0
    %152 = vmatprep.subr.mxu0 0.0
    %153 = vmatpush1.msra.mxu0 0.0
    %154 = vmatprep.subr.mxu0 0.0
    %155 = vmatpush1.msra.mxu0 0.0
    %156 = vmatprep.subr.mxu0 0.0
    %157 = vmatpush1.msra.mxu0 0.0
    %158 = vmatprep.subr.mxu0 0.0
    %159 = vmatpush1.msra.mxu0 0.0
    %160 = vmatprep.subr.mxu0 0.0
    %161 = vmatpush1.msra.mxu0 0.0
    %162 = vmatprep.subr.mxu0 0.0
    %163 = vmatpush1.msra.mxu0 0.0
    %164 = vmatprep.subr.mxu0 0.0
    %165 = vmatpush1.msra.mxu0 0.0
    %166 = vmatprep.subr.mxu0 0.0
    %167 = vmatpush1.msra.mxu0 0.0
    %168 = vmatprep.subr.mxu0 0.0
    %169 = vmatpush1.msra.mxu0 0.0
    %170 = vmatprep.subr.mxu0 0.0
    %171 = vmatpush1.msra.mxu0 0.0
    %172 = vmatprep.subr.mxu0 0.0
    %173 = vmatpush1.msra.mxu0 0.0
    %174 = vmatprep.subr.mxu0 0.0
    %175 = vmatpush1.msra.mxu0 0.0
    %176 = vmatprep.subr.mxu0 0.0
    %177 = vmatpush1.msra.mxu0 %v68
    %178 = vmatprep.subr.mxu0 0.0
    %179 = vmatpush2.msra.mxu0 0.0
    %180 = vmatprep.subr.mxu0 0.0
    %181 = vmatpush2.msra.mxu0 0.0
    %182 = vmatprep.subr.mxu0 0.0
    %183 = vmatpush2.msra.mxu0 0.0
    %184 = vmatprep.subr.mxu0 0.0
    %185 = vmatpush2.msra.mxu0 0.0
    %186 = vmatprep.subr.mxu0 0.0
    %187 = vmatpush2.msra.mxu0 0.0
    %188 = vmatprep.subr.mxu0 0.0
    %189 = vmatpush2.msra.mxu0 0.0
    %190 = vmatprep.subr.mxu0 0.0
    %191 = vmatpush2.msra.mxu0 0.0
    %192 = vmatprep.subr.mxu0 0.0
    %193 = vmatpush2.msra.mxu0 0.0
    %194 = vmatprep.subr.mxu0 0.0
    %195 = vmatpush2.msra.mxu0 0.0
    %196 = vmatprep.subr.mxu0 0.0
    %197 = vmatpush2.msra.mxu0 0.0
    %198 = vmatprep.subr.mxu0 0.0
    %199 = vmatpush2.msra.mxu0 0.0
    %200 = vmatprep.subr.mxu0 0.0
    %201 = vmatpush2.msra.mxu0 0.0
    %202 = vmatprep.subr.mxu0 0.0
    %203 = vmatpush2.msra.mxu0 0.0
    %204 = vmatprep.subr.mxu0 0.0
    %205 = vmatpush2.msra.mxu0 0.0
    %206 = vmatprep.subr.mxu0 0.0
    %207 = vmatpush2.msra.mxu0 0.0
    %208 = vmatprep.subr.mxu0 0.0
    %209 = vmatpush2.msra.mxu0 0.0
    %210 = vmatprep.mubr.f32.mxu0 0.0
    %211 = vmatmul.mubr.f32.gmra.mxu0 %v144
    %v212 = vpop.f32.mrf.mxu0
    %v213 = vadd.f32 %v60, %v212
    %v214 = vpop.f32.mrf.mxu0
    %215 = vdwg.mxu0
    %s216 = scalar_lea.vmem [#allocation6], 8
    %217 = vst [vmem:[%s216] sm:$0xff] %v213
    %s218 = scalar_lea.vmem %s0, 16
    %v219 = vld [vmem:[%s218] sm:$0xff]
    %v221 = vsel %vm62, %v219, 0
    %223 = vmatprep.subr.mxu0 0.0
    %224 = vmatpush1.msra.mxu0 0.0
    %225 = vmatprep.subr.mxu0 0.0
    %226 = vmatpush1.msra.mxu0 0.0
    %227 = vmatprep.subr.mxu0 0.0
    %228 = vmatpush1.msra.mxu0 0.0
    %229 = vmatprep.subr.mxu0 0.0
    %230 = vmatpush1.msra.mxu0 0.0
    %231 = vmatprep.subr.mxu0 0.0
    %232 = vmatpush1.msra.mxu0 0.0
    %233 = vmatprep.subr.mxu0 0.0
    %234 = vmatpush1.msra.mxu0 0.0
    %235 = vmatprep.subr.mxu0 0.0
    %236 = vmatpush1.msra.mxu0 0.0
    %237 = vmatprep.subr.mxu0 0.0
    %238 = vmatpush1.msra.mxu0 0.0
    %239 = vmatprep.subr.mxu0 0.0
    %240 = vmatpush1.msra.mxu0 0.0
    %241 = vmatprep.subr.mxu0 0.0
    %242 = vmatpush1.msra.mxu0 0.0
    %243 = vmatprep.subr.mxu0 0.0
    %244 = vmatpush1.msra.mxu0 0.0
    %245 = vmatprep.subr.mxu0 0.0
    %246 = vmatpush1.msra.mxu0 0.0
    %247 = vmatprep.subr.mxu0 0.0
    %248 = vmatpush1.msra.mxu0 0.0
    %249 = vmatprep.subr.mxu0 0.0
    %250 = vmatpush1.msra.mxu0 0.0
    %251 = vmatprep.subr.mxu0 0.0
    %252 = vmatpush1.msra.mxu0 0.0
    %253 = vmatprep.subr.mxu0 0.0
    %254 = vmatpush1.msra.mxu0 %v68
    %255 = vmatprep.subr.mxu0 0.0
    %256 = vmatpush2.msra.mxu0 0.0
    %257 = vmatprep.subr.mxu0 0.0
    %258 = vmatpush2.msra.mxu0 0.0
    %259 = vmatprep.subr.mxu0 0.0
    %260 = vmatpush2.msra.mxu0 0.0
    %261 = vmatprep.subr.mxu0 0.0
    %262 = vmatpush2.msra.mxu0 0.0
    %263 = vmatprep.subr.mxu0 0.0
    %264 = vmatpush2.msra.mxu0 0.0
    %265 = vmatprep.subr.mxu0 0.0
    %266 = vmatpush2.msra.mxu0 0.0
    %267 = vmatprep.subr.mxu0 0.0
    %268 = vmatpush2.msra.mxu0 0.0
    %269 = vmatprep.subr.mxu0 0.0
    %270 = vmatpush2.msra.mxu0 0.0
    %271 = vmatprep.subr.mxu0 0.0
    %272 = vmatpush2.msra.mxu0 0.0
    %273 = vmatprep.subr.mxu0 0.0
    %274 = vmatpush2.msra.mxu0 0.0
    %275 = vmatprep.subr.mxu0 0.0
    %276 = vmatpush2.msra.mxu0 0.0
    %277 = vmatprep.subr.mxu0 0.0
    %278 = vmatpush2.msra.mxu0 0.0
    %279 = vmatprep.subr.mxu0 0.0
    %280 = vmatpush2.msra.mxu0 0.0
    %281 = vmatprep.subr.mxu0 0.0
    %282 = vmatpush2.msra.mxu0 0.0
    %283 = vmatprep.subr.mxu0 0.0
    %284 = vmatpush2.msra.mxu0 0.0
    %285 = vmatprep.subr.mxu0 0.0
    %286 = vmatpush2.msra.mxu0 0.0
    %287 = vmatprep.mubr.f32.mxu0 0.0
    %288 = vmatmul.mubr.f32.gmra.mxu0 %v221
    %v289 = vpop.f32.mrf.mxu0
    %v290 = vadd.f32 %v60, %v289
    %v291 = vpop.f32.mrf.mxu0
    %292 = vdwg.mxu0
    %s293 = scalar_lea.vmem [#allocation6], 16
    %294 = vst [vmem:[%s293] sm:$0xff] %v290
    %s295 = scalar_lea.vmem %s0, 24
    %v296 = vld [vmem:[%s295] sm:$0xff]
    %v298 = vsel %vm62, %v296, 0
    %300 = vmatprep.subr.mxu0 0.0
    %301 = vmatpush1.msra.mxu0 0.0
    %302 = vmatprep.subr.mxu0 0.0
    %303 = vmatpush1.msra.mxu0 0.0
    %304 = vmatprep.subr.mxu0 0.0
    %305 = vmatpush1.msra.mxu0 0.0
    %306 = vmatprep.subr.mxu0 0.0
    %307 = vmatpush1.msra.mxu0 0.0
    %308 = vmatprep.subr.mxu0 0.0
    %309 = vmatpush1.msra.mxu0 0.0
    %310 = vmatprep.subr.mxu0 0.0
    %311 = vmatpush1.msra.mxu0 0.0
    %312 = vmatprep.subr.mxu0 0.0
    %313 = vmatpush1.msra.mxu0 0.0
    %314 = vmatprep.subr.mxu0 0.0
    %315 = vmatpush1.msra.mxu0 0.0
    %316 = vmatprep.subr.mxu0 0.0
    %317 = vmatpush1.msra.mxu0 0.0
    %318 = vmatprep.subr.mxu0 0.0
    %319 = vmatpush1.msra.mxu0 0.0
    %320 = vmatprep.subr.mxu0 0.0
    %321 = vmatpush1.msra.mxu0 0.0
    %322 = vmatprep.subr.mxu0 0.0
    %323 = vmatpush1.msra.mxu0 0.0
    %324 = vmatprep.subr.mxu0 0.0
    %325 = vmatpush1.msra.mxu0 0.0
    %326 = vmatprep.subr.mxu0 0.0
    %327 = vmatpush1.msra.mxu0 0.0
    %328 = vmatprep.subr.mxu0 0.0
    %329 = vmatpush1.msra.mxu0 0.0
    %330 = vmatprep.subr.mxu0 0.0
    %331 = vmatpush1.msra.mxu0 %v68
    %332 = vmatprep.subr.mxu0 0.0
    %333 = vmatpush2.msra.mxu0 0.0
    %334 = vmatprep.subr.mxu0 0.0
    %335 = vmatpush2.msra.mxu0 0.0
    %336 = vmatprep.subr.mxu0 0.0
    %337 = vmatpush2.msra.mxu0 0.0
    %338 = vmatprep.subr.mxu0 0.0
    %339 = vmatpush2.msra.mxu0 0.0
    %340 = vmatprep.subr.mxu0 0.0
    %341 = vmatpush2.msra.mxu0 0.0
    %342 = vmatprep.subr.mxu0 0.0
    %343 = vmatpush2.msra.mxu0 0.0
    %344 = vmatprep.subr.mxu0 0.0
    %345 = vmatpush2.msra.mxu0 0.0
    %346 = vmatprep.subr.mxu0 0.0
    %347 = vmatpush2.msra.mxu0 0.0
    %348 = vmatprep.subr.mxu0 0.0
    %349 = vmatpush2.msra.mxu0 0.0
    %350 = vmatprep.subr.mxu0 0.0
    %351 = vmatpush2.msra.mxu0 0.0
    %352 = vmatprep.subr.mxu0 0.0
    %353 = vmatpush2.msra.mxu0 0.0
    %354 = vmatprep.subr.mxu0 0.0
    %355 = vmatpush2.msra.mxu0 0.0
    %356 = vmatprep.subr.mxu0 0.0
    %357 = vmatpush2.msra.mxu0 0.0
    %358 = vmatprep.subr.mxu0 0.0
    %359 = vmatpush2.msra.mxu0 0.0
    %360 = vmatprep.subr.mxu0 0.0
    %361 = vmatpush2.msra.mxu0 0.0
    %362 = vmatprep.subr.mxu0 0.0
    %363 = vmatpush2.msra.mxu0 0.0
    %364 = vmatprep.mubr.f32.mxu0 0.0
    %365 = vmatmul.mubr.f32.gmra.mxu0 %v298
    %v366 = vpop.f32.mrf.mxu0
    %v367 = vadd.f32 %v60, %v366
    %v368 = vpop.f32.mrf.mxu0
    %369 = vdwg.mxu0
    %s370 = scalar_lea.vmem [#allocation6], 24
    %371 = vst [vmem:[%s370] sm:$0xff] %v367
    %s372 = scalar_lea.vmem %s0, 32
    %v373 = vld [vmem:[%s372] sm:$0xff]
    %v375 = vsel %vm62, %v373, 0
    %377 = vmatprep.subr.mxu0 0.0
    %378 = vmatpush1.msra.mxu0 0.0
    %379 = vmatprep.subr.mxu0 0.0
    %380 = vmatpush1.msra.mxu0 0.0
    %381 = vmatprep.subr.mxu0 0.0
    %382 = vmatpush1.msra.mxu0 0.0
    %383 = vmatprep.subr.mxu0 0.0
    %384 = vmatpush1.msra.mxu0 0.0
    %385 = vmatprep.subr.mxu0 0.0
    %386 = vmatpush1.msra.mxu0 0.0
    %387 = vmatprep.subr.mxu0 0.0
    %388 = vmatpush1.msra.mxu0 0.0
    %389 = vmatprep.subr.mxu0 0.0
    %390 = vmatpush1.msra.mxu0 0.0
    %391 = vmatprep.subr.mxu0 0.0
    %392 = vmatpush1.msra.mxu0 0.0
    %393 = vmatprep.subr.mxu0 0.0
    %394 = vmatpush1.msra.mxu0 0.0
    %395 = vmatprep.subr.mxu0 0.0
    %396 = vmatpush1.msra.mxu0 0.0
    %397 = vmatprep.subr.mxu0 0.0
    %398 = vmatpush1.msra.mxu0 0.0
    %399 = vmatprep.subr.mxu0 0.0
    %400 = vmatpush1.msra.mxu0 0.0
    %401 = vmatprep.subr.mxu0 0.0
    %402 = vmatpush1.msra.mxu0 0.0
    %403 = vmatprep.subr.mxu0 0.0
    %404 = vmatpush1.msra.mxu0 0.0
    %405 = vmatprep.subr.mxu0 0.0
    %406 = vmatpush1.msra.mxu0 0.0
    %407 = vmatprep.subr.mxu0 0.0
    %408 = vmatpush1.msra.mxu0 %v68
    %409 = vmatprep.subr.mxu0 0.0
    %410 = vmatpush2.msra.mxu0 0.0
    %411 = vmatprep.subr.mxu0 0.0
    %412 = vmatpush2.msra.mxu0 0.0
    %413 = vmatprep.subr.mxu0 0.0
    %414 = vmatpush2.msra.mxu0 0.0
    %415 = vmatprep.subr.mxu0 0.0
    %416 = vmatpush2.msra.mxu0 0.0
    %417 = vmatprep.subr.mxu0 0.0
    %418 = vmatpush2.msra.mxu0 0.0
    %419 = vmatprep.subr.mxu0 0.0
    %420 = vmatpush2.msra.mxu0 0.0
    %421 = vmatprep.subr.mxu0 0.0
    %422 = vmatpush2.msra.mxu0 0.0
    %423 = vmatprep.subr.mxu0 0.0
    %424 = vmatpush2.msra.mxu0 0.0
    %425 = vmatprep.subr.mxu0 0.0
    %426 = vmatpush2.msra.mxu0 0.0
    %427 = vmatprep.subr.mxu0 0.0
    %428 = vmatpush2.msra.mxu0 0.0
    %429 = vmatprep.subr.mxu0 0.0
    %430 = vmatpush2.msra.mxu0 0.0
    %431 = vmatprep.subr.mxu0 0.0
    %432 = vmatpush2.msra.mxu0 0.0
    %433 = vmatprep.subr.mxu0 0.0
    %434 = vmatpush2.msra.mxu0 0.0
    %435 = vmatprep.subr.mxu0 0.0
    %436 = vmatpush2.msra.mxu0 0.0
    %437 = vmatprep.subr.mxu0 0.0
    %438 = vmatpush2.msra.mxu0 0.0
    %439 = vmatprep.subr.mxu0 0.0
    %440 = vmatpush2.msra.mxu0 0.0
    %441 = vmatprep.mubr.f32.mxu0 0.0
    %442 = vmatmul.mubr.f32.gmra.mxu0 %v375
    %v443 = vpop.f32.mrf.mxu0
    %v444 = vadd.f32 %v60, %v443
    %v445 = vpop.f32.mrf.mxu0
    %446 = vdwg.mxu0
    %s447 = scalar_lea.vmem [#allocation6], 32
    %448 = vst [vmem:[%s447] sm:$0xff] %v444
    %s449 = scalar_lea.vmem %s0, 40
    %v450 = vld [vmem:[%s449] sm:$0xff]
    %v452 = vsel %vm62, %v450, 0
    %454 = vmatprep.subr.mxu0 0.0
    %455 = vmatpush1.msra.mxu0 0.0
    %456 = vmatprep.subr.mxu0 0.0
    %457 = vmatpush1.msra.mxu0 0.0
    %458 = vmatprep.subr.mxu0 0.0
    %459 = vmatpush1.msra.mxu0 0.0
    %460 = vmatprep.subr.mxu0 0.0
    %461 = vmatpush1.msra.mxu0 0.0
    %462 = vmatprep.subr.mxu0 0.0
    %463 = vmatpush1.msra.mxu0 0.0
    %464 = vmatprep.subr.mxu0 0.0
    %465 = vmatpush1.msra.mxu0 0.0
    %466 = vmatprep.subr.mxu0 0.0
    %467 = vmatpush1.msra.mxu0 0.0
    %468 = vmatprep.subr.mxu0 0.0
    %469 = vmatpush1.msra.mxu0 0.0
    %470 = vmatprep.subr.mxu0 0.0
    %471 = vmatpush1.msra.mxu0 0.0
    %472 = vmatprep.subr.mxu0 0.0
    %473 = vmatpush1.msra.mxu0 0.0
    %474 = vmatprep.subr.mxu0 0.0
    %475 = vmatpush1.msra.mxu0 0.0
    %476 = vmatprep.subr.mxu0 0.0
    %477 = vmatpush1.msra.mxu0 0.0
    %478 = vmatprep.subr.mxu0 0.0
    %479 = vmatpush1.msra.mxu0 0.0
    %480 = vmatprep.subr.mxu0 0.0
    %481 = vmatpush1.msra.mxu0 0.0
    %482 = vmatprep.subr.mxu0 0.0
    %483 = vmatpush1.msra.mxu0 0.0
    %484 = vmatprep.subr.mxu0 0.0
    %485 = vmatpush1.msra.mxu0 %v68
    %486 = vmatprep.subr.mxu0 0.0
    %487 = vmatpush2.msra.mxu0 0.0
    %488 = vmatprep.subr.mxu0 0.0
    %489 = vmatpush2.msra.mxu0 0.0
    %490 = vmatprep.subr.mxu0 0.0
    %491 = vmatpush2.msra.mxu0 0.0
    %492 = vmatprep.subr.mxu0 0.0
    %493 = vmatpush2.msra.mxu0 0.0
    %494 = vmatprep.subr.mxu0 0.0
    %495 = vmatpush2.msra.mxu0 0.0
    %496 = vmatprep.subr.mxu0 0.0
    %497 = vmatpush2.msra.mxu0 0.0
    %498 = vmatprep.subr.mxu0 0.0
    %499 = vmatpush2.msra.mxu0 0.0
    %500 = vmatprep.subr.mxu0 0.0
    %501 = vmatpush2.msra.mxu0 0.0
    %502 = vmatprep.subr.mxu0 0.0
    %503 = vmatpush2.msra.mxu0 0.0
    %504 = vmatprep.subr.mxu0 0.0
    %505 = vmatpush2.msra.mxu0 0.0
    %506 = vmatprep.subr.mxu0 0.0
    %507 = vmatpush2.msra.mxu0 0.0
    %508 = vmatprep.subr.mxu0 0.0
    %509 = vmatpush2.msra.mxu0 0.0
    %510 = vmatprep.subr.mxu0 0.0
    %511 = vmatpush2.msra.mxu0 0.0
    %512 = vmatprep.subr.mxu0 0.0
    %513 = vmatpush2.msra.mxu0 0.0
    %514 = vmatprep.subr.mxu0 0.0
    %515 = vmatpush2.msra.mxu0 0.0
    %516 = vmatprep.subr.mxu0 0.0
    %517 = vmatpush2.msra.mxu0 0.0
    %518 = vmatprep.mubr.f32.mxu0 0.0
    %519 = vmatmul.mubr.f32.gmra.mxu0 %v452
    %v520 = vpop.f32.mrf.mxu0
    %v521 = vadd.f32 %v60, %v520
    %v522 = vpop.f32.mrf.mxu0
    %523 = vdwg.mxu0
    %s524 = scalar_lea.vmem [#allocation6], 40
    %525 = vst [vmem:[%s524] sm:$0xff] %v521
    %s526 = scalar_lea.vmem %s0, 48
    %v527 = vld [vmem:[%s526] sm:$0xff]
    %v529 = vsel %vm62, %v527, 0
    %531 = vmatprep.subr.mxu0 0.0
    %532 = vmatpush1.msra.mxu0 0.0
    %533 = vmatprep.subr.mxu0 0.0
    %534 = vmatpush1.msra.mxu0 0.0
    %535 = vmatprep.subr.mxu0 0.0
    %536 = vmatpush1.msra.mxu0 0.0
    %537 = vmatprep.subr.mxu0 0.0
    %538 = vmatpush1.msra.mxu0 0.0
    %539 = vmatprep.subr.mxu0 0.0
    %540 = vmatpush1.msra.mxu0 0.0
    %541 = vmatprep.subr.mxu0 0.0
    %542 = vmatpush1.msra.mxu0 0.0
    %543 = vmatprep.subr.mxu0 0.0
    %544 = vmatpush1.msra.mxu0 0.0
    %545 = vmatprep.subr.mxu0 0.0
    %546 = vmatpush1.msra.mxu0 0.0
    %547 = vmatprep.subr.mxu0 0.0
    %548 = vmatpush1.msra.mxu0 0.0
    %549 = vmatprep.subr.mxu0 0.0
    %550 = vmatpush1.msra.mxu0 0.0
    %551 = vmatprep.subr.mxu0 0.0
    %552 = vmatpush1.msra.mxu0 0.0
    %553 = vmatprep.subr.mxu0 0.0
    %554 = vmatpush1.msra.mxu0 0.0
    %555 = vmatprep.subr.mxu0 0.0
    %556 = vmatpush1.msra.mxu0 0.0
    %557 = vmatprep.subr.mxu0 0.0
    %558 = vmatpush1.msra.mxu0 0.0
    %559 = vmatprep.subr.mxu0 0.0
    %560 = vmatpush1.msra.mxu0 0.0
    %561 = vmatprep.subr.mxu0 0.0
    %562 = vmatpush1.msra.mxu0 %v68
    %563 = vmatprep.subr.mxu0 0.0
    %564 = vmatpush2.msra.mxu0 0.0
    %565 = vmatprep.subr.mxu0 0.0
    %566 = vmatpush2.msra.mxu0 0.0
    %567 = vmatprep.subr.mxu0 0.0
    %568 = vmatpush2.msra.mxu0 0.0
    %569 = vmatprep.subr.mxu0 0.0
    %570 = vmatpush2.msra.mxu0 0.0
    %571 = vmatprep.subr.mxu0 0.0
    %572 = vmatpush2.msra.mxu0 0.0
    %573 = vmatprep.subr.mxu0 0.0
    %574 = vmatpush2.msra.mxu0 0.0
    %575 = vmatprep.subr.mxu0 0.0
    %576 = vmatpush2.msra.mxu0 0.0
    %577 = vmatprep.subr.mxu0 0.0
    %578 = vmatpush2.msra.mxu0 0.0
    %579 = vmatprep.subr.mxu0 0.0
    %580 = vmatpush2.msra.mxu0 0.0
    %581 = vmatprep.subr.mxu0 0.0
    %582 = vmatpush2.msra.mxu0 0.0
    %583 = vmatprep.subr.mxu0 0.0
    %584 = vmatpush2.msra.mxu0 0.0
    %585 = vmatprep.subr.mxu0 0.0
    %586 = vmatpush2.msra.mxu0 0.0
    %587 = vmatprep.subr.mxu0 0.0
    %588 = vmatpush2.msra.mxu0 0.0
    %589 = vmatprep.subr.mxu0 0.0
    %590 = vmatpush2.msra.mxu0 0.0
    %591 = vmatprep.subr.mxu0 0.0
    %592 = vmatpush2.msra.mxu0 0.0
    %593 = vmatprep.subr.mxu0 0.0
    %594 = vmatpush2.msra.mxu0 0.0
    %595 = vmatprep.mubr.f32.mxu0 0.0
    %596 = vmatmul.mubr.f32.gmra.mxu0 %v529
    %v597 = vpop.f32.mrf.mxu0
    %v598 = vadd.f32 %v60, %v597
    %v599 = vpop.f32.mrf.mxu0
    %600 = vdwg.mxu0
    %s601 = scalar_lea.vmem [#allocation6], 48
    %602 = vst [vmem:[%s601] sm:$0xff] %v598
    %s603 = scalar_lea.vmem %s0, 56
    %v604 = vld [vmem:[%s603] sm:$0xff]
    %v606 = vsel %vm62, %v604, 0
    %608 = vmatprep.subr.mxu0 0.0
    %609 = vmatpush1.msra.mxu0 0.0
    %610 = vmatprep.subr.mxu0 0.0
    %611 = vmatpush1.msra.mxu0 0.0
    %612 = vmatprep.subr.mxu0 0.0
    %613 = vmatpush1.msra.mxu0 0.0
    %614 = vmatprep.subr.mxu0 0.0
    %615 = vmatpush1.msra.mxu0 0.0
    %616 = vmatprep.subr.mxu0 0.0
    %617 = vmatpush1.msra.mxu0 0.0
    %618 = vmatprep.subr.mxu0 0.0
    %619 = vmatpush1.msra.mxu0 0.0
    %620 = vmatprep.subr.mxu0 0.0
    %621 = vmatpush1.msra.mxu0 0.0
    %622 = vmatprep.subr.mxu0 0.0
    %623 = vmatpush1.msra.mxu0 0.0
    %624 = vmatprep.subr.mxu0 0.0
    %625 = vmatpush1.msra.mxu0 0.0
    %626 = vmatprep.subr.mxu0 0.0
    %627 = vmatpush1.msra.mxu0 0.0
    %628 = vmatprep.subr.mxu0 0.0
    %629 = vmatpush1.msra.mxu0 0.0
    %630 = vmatprep.subr.mxu0 0.0
    %631 = vmatpush1.msra.mxu0 0.0
    %632 = vmatprep.subr.mxu0 0.0
    %633 = vmatpush1.msra.mxu0 0.0
    %634 = vmatprep.subr.mxu0 0.0
    %635 = vmatpush1.msra.mxu0 0.0
    %636 = vmatprep.subr.mxu0 0.0
    %637 = vmatpush1.msra.mxu0 0.0
    %638 = vmatprep.subr.mxu0 0.0
    %639 = vmatpush1.msra.mxu0 %v68
    %640 = vmatprep.subr.mxu0 0.0
    %641 = vmatpush2.msra.mxu0 0.0
    %642 = vmatprep.subr.mxu0 0.0
    %643 = vmatpush2.msra.mxu0 0.0
    %644 = vmatprep.subr.mxu0 0.0
    %645 = vmatpush2.msra.mxu0 0.0
    %646 = vmatprep.subr.mxu0 0.0
    %647 = vmatpush2.msra.mxu0 0.0
    %648 = vmatprep.subr.mxu0 0.0
    %649 = vmatpush2.msra.mxu0 0.0
    %650 = vmatprep.subr.mxu0 0.0
    %651 = vmatpush2.msra.mxu0 0.0
    %652 = vmatprep.subr.mxu0 0.0
    %653 = vmatpush2.msra.mxu0 0.0
    %654 = vmatprep.subr.mxu0 0.0
    %655 = vmatpush2.msra.mxu0 0.0
    %656 = vmatprep.subr.mxu0 0.0
    %657 = vmatpush2.msra.mxu0 0.0
    %658 = vmatprep.subr.mxu0 0.0
    %659 = vmatpush2.msra.mxu0 0.0
    %660 = vmatprep.subr.mxu0 0.0
    %661 = vmatpush2.msra.mxu0 0.0
    %662 = vmatprep.subr.mxu0 0.0
    %663 = vmatpush2.msra.mxu0 0.0
    %664 = vmatprep.subr.mxu0 0.0
    %665 = vmatpush2.msra.mxu0 0.0
    %666 = vmatprep.subr.mxu0 0.0
    %667 = vmatpush2.msra.mxu0 0.0
    %668 = vmatprep.subr.mxu0 0.0
    %669 = vmatpush2.msra.mxu0 0.0
    %670 = vmatprep.subr.mxu0 0.0
    %671 = vmatpush2.msra.mxu0 0.0
    %672 = vmatprep.mubr.f32.mxu0 0.0
    %673 = vmatmul.mubr.f32.gmra.mxu0 %v606
    %v674 = vpop.f32.mrf.mxu0
    %v675 = vadd.f32 %v60, %v674
    %v676 = vpop.f32.mrf.mxu0
    %677 = vdwg.mxu0
    %s678 = scalar_lea.vmem [#allocation6], 56
    %679 = vst [vmem:[%s678] sm:$0xff] %v675
    %v680 = vld [vmem:[#allocation2] sm:$0xff]
    %v681 = vld [vmem:[#allocation6] sm:$0xff]
    %682 = vmatprep.subr.mxu0 0.0
    %683 = vmatpush1.msra.mxu0 %v54
    %684 = vmatprep.subr.mxu0 0.0
    %685 = vmatpush1.msra.mxu0 %v53
    %686 = vmatprep.subr.mxu0 0.0
    %687 = vmatpush1.msra.mxu0 %v52
    %688 = vmatprep.subr.mxu0 0.0
    %689 = vmatpush1.msra.mxu0 %v51
    %690 = vmatprep.subr.mxu0 0.0
    %691 = vmatpush1.msra.mxu0 %v50
    %692 = vmatprep.subr.mxu0 0.0
    %693 = vmatpush1.msra.mxu0 %v49
    %694 = vmatprep.subr.mxu0 0.0
    %695 = vmatpush1.msra.mxu0 %v48
    %696 = vmatprep.subr.mxu0 0.0
    %697 = vmatpush1.msra.mxu0 %v47
    %698 = vmatprep.subr.mxu0 0.0
    %699 = vmatpush1.msra.mxu0 %v46
    %700 = vmatprep.subr.mxu0 0.0
    %701 = vmatpush1.msra.mxu0 %v45
    %702 = vmatprep.subr.mxu0 0.0
    %703 = vmatpush1.msra.mxu0 %v44
    %704 = vmatprep.subr.mxu0 0.0
    %705 = vmatpush1.msra.mxu0 %v43
    %706 = vmatprep.subr.mxu0 0.0
    %707 = vmatpush1.msra.mxu0 %v42
    %708 = vmatprep.subr.mxu0 0.0
    %709 = vmatpush1.msra.mxu0 %v41
    %710 = vmatprep.subr.mxu0 0.0
    %711 = vmatpush1.msra.mxu0 %v40
    %712 = vmatprep.subr.mxu0 0.0
    %713 = vmatpush1.msra.mxu0 %v39
    %714 = vmatprep.subr.mxu0 0.0
    %715 = vmatpush2.msra.mxu0 0.0
    %716 = vmatprep.subr.mxu0 0.0
    %717 = vmatpush2.msra.mxu0 0.0
    %718 = vmatprep.subr.mxu0 0.0
    %719 = vmatpush2.msra.mxu0 0.0
    %720 = vmatprep.subr.mxu0 0.0
    %721 = vmatpush2.msra.mxu0 0.0
    %722 = vmatprep.subr.mxu0 0.0
    %723 = vmatpush2.msra.mxu0 0.0
    %724 = vmatprep.subr.mxu0 0.0
    %725 = vmatpush2.msra.mxu0 0.0
    %726 = vmatprep.subr.mxu0 0.0
    %727 = vmatpush2.msra.mxu0 0.0
    %728 = vmatprep.subr.mxu0 0.0
    %729 = vmatpush2.msra.mxu0 0.0
    %730 = vmatprep.subr.mxu0 0.0
    %731 = vmatpush2.msra.mxu0 0.0
    %732 = vmatprep.subr.mxu0 0.0
    %733 = vmatpush2.msra.mxu0 0.0
    %734 = vmatprep.subr.mxu0 0.0
    %735 = vmatpush2.msra.mxu0 0.0
    %736 = vmatprep.subr.mxu0 0.0
    %737 = vmatpush2.msra.mxu0 0.0
    %738 = vmatprep.subr.mxu0 0.0
    %739 = vmatpush2.msra.mxu0 0.0
    %740 = vmatprep.subr.mxu0 0.0
    %741 = vmatpush2.msra.mxu0 0.0
    %742 = vmatprep.subr.mxu0 0.0
    %743 = vmatpush2.msra.mxu0 0.0
    %744 = vmatprep.subr.mxu0 0.0
    %745 = vmatpush2.msra.mxu0 0.0
    %746 = vmatprep.mubr.f32.mxu0 0.0
    %747 = vmatmul.mubr.f32.gmra.mxu0 %v680
    %v748 = vpop.f32.mrf.mxu0
    %v749 = vadd.f32 0.0, %v748
    %v750 = vpop.f32.mrf.mxu0
    %751 = vdwg.mxu0
    %v752 = vadd.f32 %v681, %v749
    %v753 = vmax.f32 %v752, 0.0
    %v754 = vmul.f32 %v680, 0.9
    %v755 = vmul.f32 %v753, 0.1
    %v756 = vadd.f32 %v754, %v755
    %757 = vst [vmem:[#allocation6] sm:$0xff] %v756
    %v758 = vld [vmem:[%s216] sm:$0xff]
    %759 = vmatprep.subr.mxu0 0.0
    %760 = vmatpush1.msra.mxu0 %v54
    %761 = vmatprep.subr.mxu0 0.0
    %762 = vmatpush1.msra.mxu0 %v53
    %763 = vmatprep.subr.mxu0 0.0
    %764 = vmatpush1.msra.mxu0 %v52
    %765 = vmatprep.subr.mxu0 0.0
    %766 = vmatpush1.msra.mxu0 %v51
    %767 = vmatprep.subr.mxu0 0.0
    %768 = vmatpush1.msra.mxu0 %v50
    %769 = vmatprep.subr.mxu0 0.0
    %770 = vmatpush1.msra.mxu0 %v49
    %771 = vmatprep.subr.mxu0 0.0
    %772 = vmatpush1.msra.mxu0 %v48
    %773 = vmatprep.subr.mxu0 0.0
    %774 = vmatpush1.msra.mxu0 %v47
    %775 = vmatprep.subr.mxu0 0.0
    %776 = vmatpush1.msra.mxu0 %v46
    %777 = vmatprep.subr.mxu0 0.0
    %778 = vmatpush1.msra.mxu0 %v45
    %779 = vmatprep.subr.mxu0 0.0
    %780 = vmatpush1.msra.mxu0 %v44
    %781 = vmatprep.subr.mxu0 0.0
    %782 = vmatpush1.msra.mxu0 %v43
    %783 = vmatprep.subr.mxu0 0.0
    %784 = vmatpush1.msra.mxu0 %v42
    %785 = vmatprep.subr.mxu0 0.0
    %786 = vmatpush1.msra.mxu0 %v41
    %787 = vmatprep.subr.mxu0 0.0
    %788 = vmatpush1.msra.mxu0 %v40
    %789 = vmatprep.subr.mxu0 0.0
    %790 = vmatpush1.msra.mxu0 %v39
    %791 = vmatprep.subr.mxu0 0.0
    %792 = vmatpush2.msra.mxu0 0.0
    %793 = vmatprep.subr.mxu0 0.0
    %794 = vmatpush2.msra.mxu0 0.0
    %795 = vmatprep.subr.mxu0 0.0
    %796 = vmatpush2.msra.mxu0 0.0
    %797 = vmatprep.subr.mxu0 0.0
    %798 = vmatpush2.msra.mxu0 0.0
    %799 = vmatprep.subr.mxu0 0.0
    %800 = vmatpush2.msra.mxu0 0.0
    %801 = vmatprep.subr.mxu0 0.0
    %802 = vmatpush2.msra.mxu0 0.0
    %803 = vmatprep.subr.mxu0 0.0
    %804 = vmatpush2.msra.mxu0 0.0
    %805 = vmatprep.subr.mxu0 0.0
    %806 = vmatpush2.msra.mxu0 0.0
    %807 = vmatprep.subr.mxu0 0.0
    %808 = vmatpush2.msra.mxu0 0.0
    %809 = vmatprep.subr.mxu0 0.0
    %810 = vmatpush2.msra.mxu0 0.0
    %811 = vmatprep.subr.mxu0 0.0
    %812 = vmatpush2.msra.mxu0 0.0
    %813 = vmatprep.subr.mxu0 0.0
    %814 = vmatpush2.msra.mxu0 0.0
    %815 = vmatprep.subr.mxu0 0.0
    %816 = vmatpush2.msra.mxu0 0.0
    %817 = vmatprep.subr.mxu0 0.0
    %818 = vmatpush2.msra.mxu0 0.0
    %819 = vmatprep.subr.mxu0 0.0
    %820 = vmatpush2.msra.mxu0 0.0
    %821 = vmatprep.subr.mxu0 0.0
    %822 = vmatpush2.msra.mxu0 0.0
    %823 = vmatprep.mubr.f32.mxu0 0.0
    %824 = vmatmul.mubr.f32.gmra.mxu0 %v756
    %v825 = vpop.f32.mrf.mxu0
    %v826 = vadd.f32 0.0, %v825
    %v827 = vpop.f32.mrf.mxu0
    %828 = vdwg.mxu0
    %v829 = vadd.f32 %v758, %v826
    %v830 = vmax.f32 %v829, 0.0
    %v831 = vmul.f32 %v756, 0.9
    %v832 = vmul.f32 %v830, 0.1
    %v833 = vadd.f32 %v831, %v832
    %834 = vst [vmem:[%s216] sm:$0xff] %v833
    %v835 = vld [vmem:[%s293] sm:$0xff]
    %836 = vmatprep.subr.mxu0 0.0
    %837 = vmatpush1.msra.mxu0 %v54
    %838 = vmatprep.subr.mxu0 0.0
    %839 = vmatpush1.msra.mxu0 %v53
    %840 = vmatprep.subr.mxu0 0.0
    %841 = vmatpush1.msra.mxu0 %v52
    %842 = vmatprep.subr.mxu0 0.0
    %843 = vmatpush1.msra.mxu0 %v51
    %844 = vmatprep.subr.mxu0 0.0
    %845 = vmatpush1.msra.mxu0 %v50
    %846 = vmatprep.subr.mxu0 0.0
    %847 = vmatpush1.msra.mxu0 %v49
    %848 = vmatprep.subr.mxu0 0.0
    %849 = vmatpush1.msra.mxu0 %v48
    %850 = vmatprep.subr.mxu0 0.0
    %851 = vmatpush1.msra.mxu0 %v47
    %852 = vmatprep.subr.mxu0 0.0
    %853 = vmatpush1.msra.mxu0 %v46
    %854 = vmatprep.subr.mxu0 0.0
    %855 = vmatpush1.msra.mxu0 %v45
    %856 = vmatprep.subr.mxu0 0.0
    %857 = vmatpush1.msra.mxu0 %v44
    %858 = vmatprep.subr.mxu0 0.0
    %859 = vmatpush1.msra.mxu0 %v43
    %860 = vmatprep.subr.mxu0 0.0
    %861 = vmatpush1.msra.mxu0 %v42
    %862 = vmatprep.subr.mxu0 0.0
    %863 = vmatpush1.msra.mxu0 %v41
    %864 = vmatprep.subr.mxu0 0.0
    %865 = vmatpush1.msra.mxu0 %v40
    %866 = vmatprep.subr.mxu0 0.0
    %867 = vmatpush1.msra.mxu0 %v39
    %868 = vmatprep.subr.mxu0 0.0
    %869 = vmatpush2.msra.mxu0 0.0
    %870 = vmatprep.subr.mxu0 0.0
    %871 = vmatpush2.msra.mxu0 0.0
    %872 = vmatprep.subr.mxu0 0.0
    %873 = vmatpush2.msra.mxu0 0.0
    %874 = vmatprep.subr.mxu0 0.0
    %875 = vmatpush2.msra.mxu0 0.0
    %876 = vmatprep.subr.mxu0 0.0
    %877 = vmatpush2.msra.mxu0 0.0
    %878 = vmatprep.subr.mxu0 0.0
    %879 = vmatpush2.msra.mxu0 0.0
    %880 = vmatprep.subr.mxu0 0.0
    %881 = vmatpush2.msra.mxu0 0.0
    %882 = vmatprep.subr.mxu0 0.0
    %883 = vmatpush2.msra.mxu0 0.0
    %884 = vmatprep.subr.mxu0 0.0
    %885 = vmatpush2.msra.mxu0 0.0
    %886 = vmatprep.subr.mxu0 0.0
    %887 = vmatpush2.msra.mxu0 0.0
    %888 = vmatprep.subr.mxu0 0.0
    %889 = vmatpush2.msra.mxu0 0.0
    %890 = vmatprep.subr.mxu0 0.0
    %891 = vmatpush2.msra.mxu0 0.0
    %892 = vmatprep.subr.mxu0 0.0
    %893 = vmatpush2.msra.mxu0 0.0
    %894 = vmatprep.subr.mxu0 0.0
    %895 = vmatpush2.msra.mxu0 0.0
    %896 = vmatprep.subr.mxu0 0.0
    %897 = vmatpush2.msra.mxu0 0.0
    %898 = vmatprep.subr.mxu0 0.0
    %899 = vmatpush2.msra.mxu0 0.0
    %900 = vmatprep.mubr.f32.mxu0 0.0
    %901 = vmatmul.mubr.f32.gmra.mxu0 %v833
    %v902 = vpop.f32.mrf.mxu0
    %v903 = vadd.f32 0.0, %v902
    %v904 = vpop.f32.mrf.mxu0
    %905 = vdwg.mxu0
    %v906 = vadd.f32 %v835, %v903
    %v907 = vmax.f32 %v906, 0.0
    %v908 = vmul.f32 %v833, 0.9
    %v909 = vmul.f32 %v907, 0.1
    %v910 = vadd.f32 %v908, %v909
    %911 = vst [vmem:[%s293] sm:$0xff] %v910
    %v912 = vld [vmem:[%s370] sm:$0xff]
    %913 = vmatprep.subr.mxu0 0.0
    %914 = vmatpush1.msra.mxu0 %v54
    %915 = vmatprep.subr.mxu0 0.0
    %916 = vmatpush1.msra.mxu0 %v53
    %917 = vmatprep.subr.mxu0 0.0
    %918 = vmatpush1.msra.mxu0 %v52
    %919 = vmatprep.subr.mxu0 0.0
    %920 = vmatpush1.msra.mxu0 %v51
    %921 = vmatprep.subr.mxu0 0.0
    %922 = vmatpush1.msra.mxu0 %v50
    %923 = vmatprep.subr.mxu0 0.0
    %924 = vmatpush1.msra.mxu0 %v49
    %925 = vmatprep.subr.mxu0 0.0
    %926 = vmatpush1.msra.mxu0 %v48
    %927 = vmatprep.subr.mxu0 0.0
    %928 = vmatpush1.msra.mxu0 %v47
    %929 = vmatprep.subr.mxu0 0.0
    %930 = vmatpush1.msra.mxu0 %v46
    %931 = vmatprep.subr.mxu0 0.0
    %932 = vmatpush1.msra.mxu0 %v45
    %933 = vmatprep.subr.mxu0 0.0
    %934 = vmatpush1.msra.mxu0 %v44
    %935 = vmatprep.subr.mxu0 0.0
    %936 = vmatpush1.msra.mxu0 %v43
    %937 = vmatprep.subr.mxu0 0.0
    %938 = vmatpush1.msra.mxu0 %v42
    %939 = vmatprep.subr.mxu0 0.0
    %940 = vmatpush1.msra.mxu0 %v41
    %941 = vmatprep.subr.mxu0 0.0
    %942 = vmatpush1.msra.mxu0 %v40
    %943 = vmatprep.subr.mxu0 0.0
    %944 = vmatpush1.msra.mxu0 %v39
    %945 = vmatprep.subr.mxu0 0.0
    %946 = vmatpush2.msra.mxu0 0.0
    %947 = vmatprep.subr.mxu0 0.0
    %948 = vmatpush2.msra.mxu0 0.0
    %949 = vmatprep.subr.mxu0 0.0
    %950 = vmatpush2.msra.mxu0 0.0
    %951 = vmatprep.subr.mxu0 0.0
    %952 = vmatpush2.msra.mxu0 0.0
    %953 = vmatprep.subr.mxu0 0.0
    %954 = vmatpush2.msra.mxu0 0.0
    %955 = vmatprep.subr.mxu0 0.0
    %956 = vmatpush2.msra.mxu0 0.0
    %957 = vmatprep.subr.mxu0 0.0
    %958 = vmatpush2.msra.mxu0 0.0
    %959 = vmatprep.subr.mxu0 0.0
    %960 = vmatpush2.msra.mxu0 0.0
    %961 = vmatprep.subr.mxu0 0.0
    %962 = vmatpush2.msra.mxu0 0.0
    %963 = vmatprep.subr.mxu0 0.0
    %964 = vmatpush2.msra.mxu0 0.0
    %965 = vmatprep.subr.mxu0 0.0
    %966 = vmatpush2.msra.mxu0 0.0
    %967 = vmatprep.subr.mxu0 0.0
    %968 = vmatpush2.msra.mxu0 0.0
    %969 = vmatprep.subr.mxu0 0.0
    %970 = vmatpush2.msra.mxu0 0.0
    %971 = vmatprep.subr.mxu0 0.0
    %972 = vmatpush2.msra.mxu0 0.0
    %973 = vmatprep.subr.mxu0 0.0
    %974 = vmatpush2.msra.mxu0 0.0
    %975 = vmatprep.subr.mxu0 0.0
    %976 = vmatpush2.msra.mxu0 0.0
    %977 = vmatprep.mubr.f32.mxu0 0.0
    %978 = vmatmul.mubr.f32.gmra.mxu0 %v910
    %v979 = vpop.f32.mrf.mxu0
    %v980 = vadd.f32 0.0, %v979
    %v981 = vpop.f32.mrf.mxu0
    %982 = vdwg.mxu0
    %v983 = vadd.f32 %v912, %v980
    %v984 = vmax.f32 %v983, 0.0
    %v985 = vmul.f32 %v910, 0.9
    %v986 = vmul.f32 %v984, 0.1
    %v987 = vadd.f32 %v985, %v986
    %988 = vst [vmem:[%s370] sm:$0xff] %v987
    %v989 = vld [vmem:[%s447] sm:$0xff]
    %990 = vmatprep.subr.mxu0 0.0
    %991 = vmatpush1.msra.mxu0 %v54
    %992 = vmatprep.subr.mxu0 0.0
    %993 = vmatpush1.msra.mxu0 %v53
    %994 = vmatprep.subr.mxu0 0.0
    %995 = vmatpush1.msra.mxu0 %v52
    %996 = vmatprep.subr.mxu0 0.0
    %997 = vmatpush1.msra.mxu0 %v51
    %998 = vmatprep.subr.mxu0 0.0
    %999 = vmatpush1.msra.mxu0 %v50
    %1000 = vmatprep.subr.mxu0 0.0
    %1001 = vmatpush1.msra.mxu0 %v49
    %1002 = vmatprep.subr.mxu0 0.0
    %1003 = vmatpush1.msra.mxu0 %v48
    %1004 = vmatprep.subr.mxu0 0.0
    %1005 = vmatpush1.msra.mxu0 %v47
    %1006 = vmatprep.subr.mxu0 0.0
    %1007 = vmatpush1.msra.mxu0 %v46
    %1008 = vmatprep.subr.mxu0 0.0
    %1009 = vmatpush1.msra.mxu0 %v45
    %1010 = vmatprep.subr.mxu0 0.0
    %1011 = vmatpush1.msra.mxu0 %v44
    %1012 = vmatprep.subr.mxu0 0.0
    %1013 = vmatpush1.msra.mxu0 %v43
    %1014 = vmatprep.subr.mxu0 0.0
    %1015 = vmatpush1.msra.mxu0 %v42
    %1016 = vmatprep.subr.mxu0 0.0
    %1017 = vmatpush1.msra.mxu0 %v41
    %1018 = vmatprep.subr.mxu0 0.0
    %1019 = vmatpush1.msra.mxu0 %v40
    %1020 = vmatprep.subr.mxu0 0.0
    %1021 = vmatpush1.msra.mxu0 %v39
    %1022 = vmatprep.subr.mxu0 0.0
    %1023 = vmatpush2.msra.mxu0 0.0
    %1024 = vmatprep.subr.mxu0 0.0
    %1025 = vmatpush2.msra.mxu0 0.0
    %1026 = vmatprep.subr.mxu0 0.0
    %1027 = vmatpush2.msra.mxu0 0.0
    %1028 = vmatprep.subr.mxu0 0.0
    %1029 = vmatpush2.msra.mxu0 0.0
    %1030 = vmatprep.subr.mxu0 0.0
    %1031 = vmatpush2.msra.mxu0 0.0
    %1032 = vmatprep.subr.mxu0 0.0
    %1033 = vmatpush2.msra.mxu0 0.0
    %1034 = vmatprep.subr.mxu0 0.0
    %1035 = vmatpush2.msra.mxu0 0.0
    %1036 = vmatprep.subr.mxu0 0.0
    %1037 = vmatpush2.msra.mxu0 0.0
    %1038 = vmatprep.subr.mxu0 0.0
    %1039 = vmatpush2.msra.mxu0 0.0
    %1040 = vmatprep.subr.mxu0 0.0
    %1041 = vmatpush2.msra.mxu0 0.0
    %1042 = vmatprep.subr.mxu0 0.0
    %1043 = vmatpush2.msra.mxu0 0.0
    %1044 = vmatprep.subr.mxu0 0.0
    %1045 = vmatpush2.msra.mxu0 0.0
    %1046 = vmatprep.subr.mxu0 0.0
    %1047 = vmatpush2.msra.mxu0 0.0
    %1048 = vmatprep.subr.mxu0 0.0
    %1049 = vmatpush2.msra.mxu0 0.0
    %1050 = vmatprep.subr.mxu0 0.0
    %1051 = vmatpush2.msra.mxu0 0.0
    %1052 = vmatprep.subr.mxu0 0.0
    %1053 = vmatpush2.msra.mxu0 0.0
    %1054 = vmatprep.mubr.f32.mxu0 0.0
    %1055 = vmatmul.mubr.f32.gmra.mxu0 %v987
    %v1056 = vpop.f32.mrf.mxu0
    %v1057 = vadd.f32 0.0, %v1056
    %v1058 = vpop.f32.mrf.mxu0
    %1059 = vdwg.mxu0
    %v1060 = vadd.f32 %v989, %v1057
    %v1061 = vmax.f32 %v1060, 0.0
    %v1062 = vmul.f32 %v987, 0.9
    %v1063 = vmul.f32 %v1061, 0.1
    %v1064 = vadd.f32 %v1062, %v1063
    %1065 = vst [vmem:[%s447] sm:$0xff] %v1064
    %v1066 = vld [vmem:[%s524] sm:$0xff]
    %1067 = vmatprep.subr.mxu0 0.0
    %1068 = vmatpush1.msra.mxu0 %v54
    %1069 = vmatprep.subr.mxu0 0.0
    %1070 = vmatpush1.msra.mxu0 %v53
    %1071 = vmatprep.subr.mxu0 0.0
    %1072 = vmatpush1.msra.mxu0 %v52
    %1073 = vmatprep.subr.mxu0 0.0
    %1074 = vmatpush1.msra.mxu0 %v51
    %1075 = vmatprep.subr.mxu0 0.0
    %1076 = vmatpush1.msra.mxu0 %v50
    %1077 = vmatprep.subr.mxu0 0.0
    %1078 = vmatpush1.msra.mxu0 %v49
    %1079 = vmatprep.subr.mxu0 0.0
    %1080 = vmatpush1.msra.mxu0 %v48
    %1081 = vmatprep.subr.mxu0 0.0
    %1082 = vmatpush1.msra.mxu0 %v47
    %1083 = vmatprep.subr.mxu0 0.0
    %1084 = vmatpush1.msra.mxu0 %v46
    %1085 = vmatprep.subr.mxu0 0.0
    %1086 = vmatpush1.msra.mxu0 %v45
    %1087 = vmatprep.subr.mxu0 0.0
    %1088 = vmatpush1.msra.mxu0 %v44
    %1089 = vmatprep.subr.mxu0 0.0
    %1090 = vmatpush1.msra.mxu0 %v43
    %1091 = vmatprep.subr.mxu0 0.0
    %1092 = vmatpush1.msra.mxu0 %v42
    %1093 = vmatprep.subr.mxu0 0.0
    %1094 = vmatpush1.msra.mxu0 %v41
    %1095 = vmatprep.subr.mxu0 0.0
    %1096 = vmatpush1.msra.mxu0 %v40
    %1097 = vmatprep.subr.mxu0 0.0
    %1098 = vmatpush1.msra.mxu0 %v39
    %1099 = vmatprep.subr.mxu0 0.0
    %1100 = vmatpush2.msra.mxu0 0.0
    %1101 = vmatprep.subr.mxu0 0.0
    %1102 = vmatpush2.msra.mxu0 0.0
    %1103 = vmatprep.subr.mxu0 0.0
    %1104 = vmatpush2.msra.mxu0 0.0
    %1105 = vmatprep.subr.mxu0 0.0
    %1106 = vmatpush2.msra.mxu0 0.0
    %1107 = vmatprep.subr.mxu0 0.0
    %1108 = vmatpush2.msra.mxu0 0.0
    %1109 = vmatprep.subr.mxu0 0.0
    %1110 = vmatpush2.msra.mxu0 0.0
    %1111 = vmatprep.subr.mxu0 0.0
    %1112 = vmatpush2.msra.mxu0 0.0
    %1113 = vmatprep.subr.mxu0 0.0
    %1114 = vmatpush2.msra.mxu0 0.0
    %1115 = vmatprep.subr.mxu0 0.0
    %1116 = vmatpush2.msra.mxu0 0.0
    %1117 = vmatprep.subr.mxu0 0.0
    %1118 = vmatpush2.msra.mxu0 0.0
    %1119 = vmatprep.subr.mxu0 0.0
    %1120 = vmatpush2.msra.mxu0 0.0
    %1121 = vmatprep.subr.mxu0 0.0
    %1122 = vmatpush2.msra.mxu0 0.0
    %1123 = vmatprep.subr.mxu0 0.0
    %1124 = vmatpush2.msra.mxu0 0.0
    %1125 = vmatprep.subr.mxu0 0.0
    %1126 = vmatpush2.msra.mxu0 0.0
    %1127 = vmatprep.subr.mxu0 0.0
    %1128 = vmatpush2.msra.mxu0 0.0
    %1129 = vmatprep.subr.mxu0 0.0
    %1130 = vmatpush2.msra.mxu0 0.0
    %1131 = vmatprep.mubr.f32.mxu0 0.0
    %1132 = vmatmul.mubr.f32.gmra.mxu0 %v1064
    %v1133 = vpop.f32.mrf.mxu0
    %v1134 = vadd.f32 0.0, %v1133
    %v1135 = vpop.f32.mrf.mxu0
    %1136 = vdwg.mxu0
    %v1137 = vadd.f32 %v1066, %v1134
    %v1138 = vmax.f32 %v1137, 0.0
    %v1139 = vmul.f32 %v1064, 0.9
    %v1140 = vmul.f32 %v1138, 0.1
    %v1141 = vadd.f32 %v1139, %v1140
    %1142 = vst [vmem:[%s524] sm:$0xff] %v1141
    %v1143 = vld [vmem:[%s601] sm:$0xff]
    %1144 = vmatprep.subr.mxu0 0.0
    %1145 = vmatpush1.msra.mxu0 %v54
    %1146 = vmatprep.subr.mxu0 0.0
    %1147 = vmatpush1.msra.mxu0 %v53
    %1148 = vmatprep.subr.mxu0 0.0
    %1149 = vmatpush1.msra.mxu0 %v52
    %1150 = vmatprep.subr.mxu0 0.0
    %1151 = vmatpush1.msra.mxu0 %v51
    %1152 = vmatprep.subr.mxu0 0.0
    %1153 = vmatpush1.msra.mxu0 %v50
    %1154 = vmatprep.subr.mxu0 0.0
    %1155 = vmatpush1.msra.mxu0 %v49
    %1156 = vmatprep.subr.mxu0 0.0
    %1157 = vmatpush1.msra.mxu0 %v48
    %1158 = vmatprep.subr.mxu0 0.0
    %1159 = vmatpush1.msra.mxu0 %v47
    %1160 = vmatprep.subr.mxu0 0.0
    %1161 = vmatpush1.msra.mxu0 %v46
    %1162 = vmatprep.subr.mxu0 0.0
    %1163 = vmatpush1.msra.mxu0 %v45
    %1164 = vmatprep.subr.mxu0 0.0
    %1165 = vmatpush1.msra.mxu0 %v44
    %1166 = vmatprep.subr.mxu0 0.0
    %1167 = vmatpush1.msra.mxu0 %v43
    %1168 = vmatprep.subr.mxu0 0.0
    %1169 = vmatpush1.msra.mxu0 %v42
    %1170 = vmatprep.subr.mxu0 0.0
    %1171 = vmatpush1.msra.mxu0 %v41
    %1172 = vmatprep.subr.mxu0 0.0
    %1173 = vmatpush1.msra.mxu0 %v40
    %1174 = vmatprep.subr.mxu0 0.0
    %1175 = vmatpush1.msra.mxu0 %v39
    %1176 = vmatprep.subr.mxu0 0.0
    %1177 = vmatpush2.msra.mxu0 0.0
    %1178 = vmatprep.subr.mxu0 0.0
    %1179 = vmatpush2.msra.mxu0 0.0
    %1180 = vmatprep.subr.mxu0 0.0
    %1181 = vmatpush2.msra.mxu0 0.0
    %1182 = vmatprep.subr.mxu0 0.0
    %1183 = vmatpush2.msra.mxu0 0.0
    %1184 = vmatprep.subr.mxu0 0.0
    %1185 = vmatpush2.msra.mxu0 0.0
    %1186 = vmatprep.subr.mxu0 0.0
    %1187 = vmatpush2.msra.mxu0 0.0
    %1188 = vmatprep.subr.mxu0 0.0
    %1189 = vmatpush2.msra.mxu0 0.0
    %1190 = vmatprep.subr.mxu0 0.0
    %1191 = vmatpush2.msra.mxu0 0.0
    %1192 = vmatprep.subr.mxu0 0.0
    %1193 = vmatpush2.msra.mxu0 0.0
    %1194 = vmatprep.subr.mxu0 0.0
    %1195 = vmatpush2.msra.mxu0 0.0
    %1196 = vmatprep.subr.mxu0 0.0
    %1197 = vmatpush2.msra.mxu0 0.0
    %1198 = vmatprep.subr.mxu0 0.0
    %1199 = vmatpush2.msra.mxu0 0.0
    %1200 = vmatprep.subr.mxu0 0.0
    %1201 = vmatpush2.msra.mxu0 0.0
    %1202 = vmatprep.subr.mxu0 0.0
    %1203 = vmatpush2.msra.mxu0 0.0
    %1204 = vmatprep.subr.mxu0 0.0
    %1205 = vmatpush2.msra.mxu0 0.0
    %1206 = vmatprep.subr.mxu0 0.0
    %1207 = vmatpush2.msra.mxu0 0.0
    %1208 = vmatprep.mubr.f32.mxu0 0.0
    %1209 = vmatmul.mubr.f32.gmra.mxu0 %v1141
    %v1210 = vpop.f32.mrf.mxu0
    %v1211 = vadd.f32 0.0, %v1210
    %v1212 = vpop.f32.mrf.mxu0
    %1213 = vdwg.mxu0
    %v1214 = vadd.f32 %v1143, %v1211
    %v1215 = vmax.f32 %v1214, 0.0
    %v1216 = vmul.f32 %v1141, 0.9
    %v1217 = vmul.f32 %v1215, 0.1
    %v1218 = vadd.f32 %v1216, %v1217
    %1219 = vst [vmem:[%s601] sm:$0xff] %v1218
    %v1220 = vld [vmem:[%s678] sm:$0xff]
    %1221 = vmatprep.subr.mxu0 0.0
    %1222 = vmatpush1.msra.mxu0 %v54
    %1223 = vmatprep.subr.mxu0 0.0
    %1224 = vmatpush1.msra.mxu0 %v53
    %1225 = vmatprep.subr.mxu0 0.0
    %1226 = vmatpush1.msra.mxu0 %v52
    %1227 = vmatprep.subr.mxu0 0.0
    %1228 = vmatpush1.msra.mxu0 %v51
    %1229 = vmatprep.subr.mxu0 0.0
    %1230 = vmatpush1.msra.mxu0 %v50
    %1231 = vmatprep.subr.mxu0 0.0
    %1232 = vmatpush1.msra.mxu0 %v49
    %1233 = vmatprep.subr.mxu0 0.0
    %1234 = vmatpush1.msra.mxu0 %v48
    %1235 = vmatprep.subr.mxu0 0.0
    %1236 = vmatpush1.msra.mxu0 %v47
    %1237 = vmatprep.subr.mxu0 0.0
    %1238 = vmatpush1.msra.mxu0 %v46
    %1239 = vmatprep.subr.mxu0 0.0
    %1240 = vmatpush1.msra.mxu0 %v45
    %1241 = vmatprep.subr.mxu0 0.0
    %1242 = vmatpush1.msra.mxu0 %v44
    %1243 = vmatprep.subr.mxu0 0.0
    %1244 = vmatpush1.msra.mxu0 %v43
    %1245 = vmatprep.subr.mxu0 0.0
    %1246 = vmatpush1.msra.mxu0 %v42
    %1247 = vmatprep.subr.mxu0 0.0
    %1248 = vmatpush1.msra.mxu0 %v41
    %1249 = vmatprep.subr.mxu0 0.0
    %1250 = vmatpush1.msra.mxu0 %v40
    %1251 = vmatprep.subr.mxu0 0.0
    %1252 = vmatpush1.msra.mxu0 %v39
    %1253 = vmatprep.subr.mxu0 0.0
    %1254 = vmatpush2.msra.mxu0 0.0
    %1255 = vmatprep.subr.mxu0 0.0
    %1256 = vmatpush2.msra.mxu0 0.0
    %1257 = vmatprep.subr.mxu0 0.0
    %1258 = vmatpush2.msra.mxu0 0.0
    %1259 = vmatprep.subr.mxu0 0.0
    %1260 = vmatpush2.msra.mxu0 0.0
    %1261 = vmatprep.subr.mxu0 0.0
    %1262 = vmatpush2.msra.mxu0 0.0
    %1263 = vmatprep.subr.mxu0 0.0
    %1264 = vmatpush2.msra.mxu0 0.0
    %1265 = vmatprep.subr.mxu0 0.0
    %1266 = vmatpush2.msra.mxu0 0.0
    %1267 = vmatprep.subr.mxu0 0.0
    %1268 = vmatpush2.msra.mxu0 0.0
    %1269 = vmatprep.subr.mxu0 0.0
    %1270 = vmatpush2.msra.mxu0 0.0
    %1271 = vmatprep.subr.mxu0 0.0
    %1272 = vmatpush2.msra.mxu0 0.0
    %1273 = vmatprep.subr.mxu0 0.0
    %1274 = vmatpush2.msra.mxu0 0.0
    %1275 = vmatprep.subr.mxu0 0.0
    %1276 = vmatpush2.msra.mxu0 0.0
    %1277 = vmatprep.subr.mxu0 0.0
    %1278 = vmatpush2.msra.mxu0 0.0
    %1279 = vmatprep.subr.mxu0 0.0
    %1280 = vmatpush2.msra.mxu0 0.0
    %1281 = vmatprep.subr.mxu0 0.0
    %1282 = vmatpush2.msra.mxu0 0.0
    %1283 = vmatprep.subr.mxu0 0.0
    %1284 = vmatpush2.msra.mxu0 0.0
    %1285 = vmatprep.mubr.f32.mxu0 0.0
    %1286 = vmatmul.mubr.f32.gmra.mxu0 %v1218
    %v1287 = vpop.f32.mrf.mxu0
    %v1288 = vadd.f32 0.0, %v1287
    %v1289 = vpop.f32.mrf.mxu0
    %1290 = vdwg.mxu0
    %v1291 = vadd.f32 %v1220, %v1288
    %v1292 = vmax.f32 %v1291, 0.0
    %v1293 = vmul.f32 %v1218, 0.9
    %v1294 = vmul.f32 %v1292, 0.1
    %v1295 = vadd.f32 %v1293, %v1294
    %1296 = vst [vmem:[%s678] sm:$0xff] %v1295
    %1297 = vst [vmem:[#allocation2] sm:$0xff] %v1295
    // Predicated region
    $region26: #{tpu_custom_call.1} parent=1 // pred_check
      _
    $region27: #{tpu_custom_call.1} parent=1 // pred_check_branch
      %1299 = sbr.rel (0) target = $region29
    $region28: #{tpu_custom_call.1} parent=1 // pred_region
      %s1301 = ssub.s32 1024, 1024
      %1302 = vsyncadd [#allocation5], %s1301
      %s1303 = sshll.u32 [#allocation6], 4
      %s1304 = int_to_ptr.vmem [resolvable:$true] %s1303
      %1309 = dma.vmem_to_hbm [thread:$0]  %s1304, 1024, %s4, [#allocation5], 128, 128, 8
    $region29: #{tpu_custom_call.1} parent=1 // pred_fallthru
      _
    // Predicated region
    $region30: #{tpu_custom_call.1} parent=1 // pred_check
      _
    $region31: #{tpu_custom_call.1} parent=1 // pred_check_branch
      %1311 = sbr.rel (0) target = $region33
    $region32: #{tpu_custom_call.1} parent=1 // pred_region
      %1312 = dma.done [#allocation5], 1024
    $region33: #{tpu_custom_call.1} parent=1 // pred_fallthru
      _
    %1313 = vsyncpa [#allocation4], 1
    %1314 = vsyncpa [#allocation5], 1

// kernel: tpu_custom_call.1
$region0: #{tpu_custom_call.1}
  #allocation0 [shape = 'u32[]', space=smem, size = 0x4, offset = 0x4, fixed_abs, tag = 'smem constant byte address 0x4 - core index']
  #allocation1 [shape = 'u32[144,128]{1,0:T(1,128)}', space=vmem, size = 0x12000, scoped, tag = 'internal scratch']
  #allocation2 [shape = 'f32[8,128]{1,0:T(8,128)}', space=vmem, size = 0x1000, scoped, tag = 'scratch operand']
  %s0 = inlined_call_operand.vmem [shape: f32[8,8,4], index: 0, kind: input, shape index: {}]
  %s1 = inlined_call_operand.vmem [shape: f32[4,128], index: 1, kind: input, shape index: {}]
  %s2 = inlined_call_operand.vmem [shape: f32[1,128], index: 2, kind: input, shape index: {}]
  %s3 = inlined_call_operand.hbm [shape: f32[128,128], index: 3, kind: input, shape index: {}]
  %s4 = inlined_call_operand.hbm [shape: f32[8,8,128], index: 4, kind: output, shape index: {}]
  %s5 = sld [smem:[#allocation0]]
  $region34: #{tpu_custom_call.1} parent=0
    _
  %s7 = ssub.s32 1, %s5
  %s8 = scalar_select 0, %s7, %s5
  $region1: #{tpu_custom_call.1} parent=0
    #allocation3 [shape = 'u8[65536]{0}', space=vmem, size = 0x10000, scoped, tag = 'input window, operand 3, single buffered']
    #allocation4 [shape = 's32[1]{0}', space=sflag, size = 0x4, scoped, tag = 'scoped memory for tpu_custom_call.1']
    #allocation5 [shape = 's32[1]{0}', space=sflag, size = 0x4, scoped, tag = 'scoped memory for tpu_custom_call.1']
    #allocation6 [shape = 'u8[32768]{0}', space=vmem, size = 0x8000, scoped, tag = 'output window, operand 0, single buffered']
    %9 = vsyncpa [#allocation4], 0
    %10 = vsyncpa [#allocation5], 0
    // Predicated region
    $region2: #{tpu_custom_call.1} parent=1 // pred_check
      _
    $region3: #{tpu_custom_call.1} parent=1 // pred_check_branch
      %12 = sbr.rel (0) target = $region5
    $region4: #{tpu_custom_call.1} parent=1 // pred_region
      _
    $region5: #{tpu_custom_call.1} parent=1 // pred_fallthru
      _
    // Predicated region
    $region6: #{tpu_custom_call.1} parent=1 // pred_check
      _
    $region7: #{tpu_custom_call.1} parent=1 // pred_check_branch
      %14 = sbr.rel (0) target = $region9
    $region8: #{tpu_custom_call.1} parent=1 // pred_region
      _
    $region9: #{tpu_custom_call.1} parent=1 // pred_fallthru
      _
    // Predicated region
    $region10: #{tpu_custom_call.1} parent=1 // pred_check
      _
    $region11: #{tpu_custom_call.1} parent=1 // pred_check_branch
      %16 = sbr.rel (0) target = $region13
    $region12: #{tpu_custom_call.1} parent=1 // pred_region
      _
    $region13: #{tpu_custom_call.1} parent=1 // pred_fallthru
      _
    // Predicated region
    $region14: #{tpu_custom_call.1} parent=1 // pred_check
      _
    $region15: #{tpu_custom_call.1} parent=1 // pred_check_branch
      %18 = sbr.rel (0) target = $region17
    $region16: #{tpu_custom_call.1} parent=1 // pred_region
      %s20 = ssub.s32 2048, 2048
      %21 = vsyncadd [#allocation4], %s20
      %s22 = sshll.u32 [#allocation3], 4
      %s23 = int_to_ptr.vmem [resolvable:$true] %s22
      %28 = dma.hbm_to_vmem [thread:$0]  %s3, 2048, %s23, [#allocation4], 128, 128, 8
    $region17: #{tpu_custom_call.1} parent=1 // pred_fallthru
      _
    // Predicated region
    $region18: #{tpu_custom_call.1} parent=1 // pred_check
      _
    $region19: #{tpu_custom_call.1} parent=1 // pred_check_branch
      %30 = sbr.rel (0) target = $region21
    $region20: #{tpu_custom_call.1} parent=1 // pred_region
      %31 = dma.done [#allocation4], 2048
    $region21: #{tpu_custom_call.1} parent=1 // pred_fallthru
      _
    %p32 = scmp.eq.s32.totalorder 0, 0
    // Predicated region
    $region22: #{tpu_custom_call.1} parent=1 // pred_check
      %p33 = pneg %p32
    $region23: #{tpu_custom_call.1} parent=1 // pred_check_branch
      %35 = sbr.rel (%p33) target = $region25
    $region24: #{tpu_custom_call.1} parent=1 // pred_region
      %36 = vst [vmem:[#allocation2] sm:$0xff] 0.0
    $region25: #{tpu_custom_call.1} parent=1 // pred_fallthru
      _
    %v37 = vld [vmem:[%s2] sm:$0x1]
    %v38 = vld [vmem:[%s1] sm:$0xf]
    %v39 = vld [vmem:[#allocation3] sm:$0xff]
    %v40 = vld [vmem:[#allocation3 + $0x8] sm:$0xff]
    %v41 = vld [vmem:[#allocation3 + $0x10] sm:$0xff]
    %v42 = vld [vmem:[#allocation3 + $0x18] sm:$0xff]
    %v43 = vld [vmem:[#allocation3 + $0x20] sm:$0xff]
    %v44 = vld [vmem:[#allocation3 + $0x28] sm:$0xff]
    %v45 = vld [vmem:[#allocation3 + $0x30] sm:$0xff]
    %v46 = vld [vmem:[#allocation3 + $0x38] sm:$0xff]
    %v47 = vld [vmem:[#allocation3 + $0x40] sm:$0xff]
    %v48 = vld [vmem:[#allocation3 + $0x48] sm:$0xff]
    %v49 = vld [vmem:[#allocation3 + $0x50] sm:$0xff]
    %v50 = vld [vmem:[#allocation3 + $0x58] sm:$0xff]
    %v51 = vld [vmem:[#allocation3 + $0x60] sm:$0xff]
    %v52 = vld [vmem:[#allocation3 + $0x68] sm:$0xff]
    %v53 = vld [vmem:[#allocation3 + $0x70] sm:$0xff]
    %v54 = vld [vmem:[#allocation3 + $0x78] sm:$0xff]
    %v55 = vld [vmem:[%s0] sm:$0xff]
    %v57 = vlaneseq
    %v58 = vshrl.u32 %v57, 7
    %v59 = vsub.s32 0, %v58
    %v60 = vrot.slane %v37, %v59
    %vm62 = vcmask 31744
    %v64 = vsel %vm62, %v55, 0
    %vm66 = vcmask 1043456
    %v68 = vsel %vm66, %v38, 0
    %70 = vmatprep.subr.mxu0 0.0
    %71 = vmatpush1.msra.mxu0 0.0
    %72 = vmatprep.subr.mxu0 0.0
    %73 = vmatpush1.msra.mxu0 0.0
    %74 = vmatprep.subr.mxu0 0.0
    %75 = vmatpush1.msra.mxu0 0.0
    %76 = vmatprep.subr.mxu0 0.0
    %77 = vmatpush1.msra.mxu0 0.0
    %78 = vmatprep.subr.mxu0 0.0
    %79 = vmatpush1.msra.mxu0 0.0
    %80 = vmatprep.subr.mxu0 0.0
    %81 = vmatpush1.msra.mxu0 0.0
    %82 = vmatprep.subr.mxu0 0.0
    %83 = vmatpush1.msra.mxu0 0.0
    %84 = vmatprep.subr.mxu0 0.0
    %85 = vmatpush1.msra.mxu0 0.0
    %86 = vmatprep.subr.mxu0 0.0
    %87 = vmatpush1.msra.mxu0 0.0
    %88 = vmatprep.subr.mxu0 0.0
    %89 = vmatpush1.msra.mxu0 0.0
    %90 = vmatprep.subr.mxu0 0.0
    %91 = vmatpush1.msra.mxu0 0.0
    %92 = vmatprep.subr.mxu0 0.0
    %93 = vmatpush1.msra.mxu0 0.0
    %94 = vmatprep.subr.mxu0 0.0
    %95 = vmatpush1.msra.mxu0 0.0
    %96 = vmatprep.subr.mxu0 0.0
    %97 = vmatpush1.msra.mxu0 0.0
    %98 = vmatprep.subr.mxu0 0.0
    %99 = vmatpush1.msra.mxu0 0.0
    %100 = vmatprep.subr.mxu0 0.0
    %101 = vmatpush1.msra.mxu0 %v68
    %102 = vmatprep.subr.mxu0 0.0
    %103 = vmatpush2.msra.mxu0 0.0
    %104 = vmatprep.subr.mxu0 0.0
    %105 = vmatpush2.msra.mxu0 0.0
    %106 = vmatprep.subr.mxu0 0.0
    %107 = vmatpush2.msra.mxu0 0.0
    %108 = vmatprep.subr.mxu0 0.0
    %109 = vmatpush2.msra.mxu0 0.0
    %110 = vmatprep.subr.mxu0 0.0
    %111 = vmatpush2.msra.mxu0 0.0
    %112 = vmatprep.subr.mxu0 0.0
    %113 = vmatpush2.msra.mxu0 0.0
    %114 = vmatprep.subr.mxu0 0.0
    %115 = vmatpush2.msra.mxu0 0.0
    %116 = vmatprep.subr.mxu0 0.0
    %117 = vmatpush2.msra.mxu0 0.0
    %118 = vmatprep.subr.mxu0 0.0
    %119 = vmatpush2.msra.mxu0 0.0
    %120 = vmatprep.subr.mxu0 0.0
    %121 = vmatpush2.msra.mxu0 0.0
    %122 = vmatprep.subr.mxu0 0.0
    %123 = vmatpush2.msra.mxu0 0.0
    %124 = vmatprep.subr.mxu0 0.0
    %125 = vmatpush2.msra.mxu0 0.0
    %126 = vmatprep.subr.mxu0 0.0
    %127 = vmatpush2.msra.mxu0 0.0
    %128 = vmatprep.subr.mxu0 0.0
    %129 = vmatpush2.msra.mxu0 0.0
    %130 = vmatprep.subr.mxu0 0.0
    %131 = vmatpush2.msra.mxu0 0.0
    %132 = vmatprep.subr.mxu0 0.0
    %133 = vmatpush2.msra.mxu0 0.0
    %134 = vmatprep.mubr.f32.mxu0 0.0
    %135 = vmatmul.mubr.f32.gmra.mxu0 %v64
    %v136 = vpop.f32.mrf.mxu0
    %v137 = vadd.f32 %v60, %v136
    %v138 = vpop.f32.mrf.mxu0
    %139 = vdwg.mxu0
    %140 = vst [vmem:[#allocation6] sm:$0xff] %v137
    %s141 = scalar_lea.vmem %s0, 8
    %v142 = vld [vmem:[%s141] sm:$0xff]
    %v144 = vsel %vm62, %v142, 0
    %146 = vmatprep.subr.mxu0 0.0
    %147 = vmatpush1.msra.mxu0 0.0
    %148 = vmatprep.subr.mxu0 0.0
    %149 = vmatpush1.msra.mxu0 0.0
    %150 = vmatprep.subr.mxu0 0.0
    %151 = vmatpush1.msra.mxu0 0.0
    %152 = vmatprep.subr.mxu0 0.0
    %153 = vmatpush1.msra.mxu0 0.0
    %154 = vmatprep.subr.mxu0 0.0
    %155 = vmatpush1.msra.mxu0 0.0
    %156 = vmatprep.subr.mxu0 0.0
    %157 = vmatpush1.msra.mxu0 0.0
    %158 = vmatprep.subr.mxu0 0.0
    %159 = vmatpush1.msra.mxu0 0.0
    %160 = vmatprep.subr.mxu0 0.0
    %161 = vmatpush1.msra.mxu0 0.0
    %162 = vmatprep.subr.mxu0 0.0
    %163 = vmatpush1.msra.mxu0 0.0
    %164 = vmatprep.subr.mxu0 0.0
    %165 = vmatpush1.msra.mxu0 0.0
    %166 = vmatprep.subr.mxu0 0.0
    %167 = vmatpush1.msra.mxu0 0.0
    %168 = vmatprep.subr.mxu0 0.0
    %169 = vmatpush1.msra.mxu0 0.0
    %170 = vmatprep.subr.mxu0 0.0
    %171 = vmatpush1.msra.mxu0 0.0
    %172 = vmatprep.subr.mxu0 0.0
    %173 = vmatpush1.msra.mxu0 0.0
    %174 = vmatprep.subr.mxu0 0.0
    %175 = vmatpush1.msra.mxu0 0.0
    %176 = vmatprep.subr.mxu0 0.0
    %177 = vmatpush1.msra.mxu0 %v68
    %178 = vmatprep.subr.mxu0 0.0
    %179 = vmatpush2.msra.mxu0 0.0
    %180 = vmatprep.subr.mxu0 0.0
    %181 = vmatpush2.msra.mxu0 0.0
    %182 = vmatprep.subr.mxu0 0.0
    %183 = vmatpush2.msra.mxu0 0.0
    %184 = vmatprep.subr.mxu0 0.0
    %185 = vmatpush2.msra.mxu0 0.0
    %186 = vmatprep.subr.mxu0 0.0
    %187 = vmatpush2.msra.mxu0 0.0
    %188 = vmatprep.subr.mxu0 0.0
    %189 = vmatpush2.msra.mxu0 0.0
    %190 = vmatprep.subr.mxu0 0.0
    %191 = vmatpush2.msra.mxu0 0.0
    %192 = vmatprep.subr.mxu0 0.0
    %193 = vmatpush2.msra.mxu0 0.0
    %194 = vmatprep.subr.mxu0 0.0
    %195 = vmatpush2.msra.mxu0 0.0
    %196 = vmatprep.subr.mxu0 0.0
    %197 = vmatpush2.msra.mxu0 0.0
    %198 = vmatprep.subr.mxu0 0.0
    %199 = vmatpush2.msra.mxu0 0.0
    %200 = vmatprep.subr.mxu0 0.0
    %201 = vmatpush2.msra.mxu0 0.0
    %202 = vmatprep.subr.mxu0 0.0
    %203 = vmatpush2.msra.mxu0 0.0
    %204 = vmatprep.subr.mxu0 0.0
    %205 = vmatpush2.msra.mxu0 0.0
    %206 = vmatprep.subr.mxu0 0.0
    %207 = vmatpush2.msra.mxu0 0.0
    %208 = vmatprep.subr.mxu0 0.0
    %209 = vmatpush2.msra.mxu0 0.0
    %210 = vmatprep.mubr.f32.mxu0 0.0
    %211 = vmatmul.mubr.f32.gmra.mxu0 %v144
    %v212 = vpop.f32.mrf.mxu0
    %v213 = vadd.f32 %v60, %v212
    %v214 = vpop.f32.mrf.mxu0
    %215 = vdwg.mxu0
    %s216 = scalar_lea.vmem [#allocation6], 8
    %217 = vst [vmem:[%s216] sm:$0xff] %v213
    %s218 = scalar_lea.vmem %s0, 16
    %v219 = vld [vmem:[%s218] sm:$0xff]
    %v221 = vsel %vm62, %v219, 0
    %223 = vmatprep.subr.mxu0 0.0
    %224 = vmatpush1.msra.mxu0 0.0
    %225 = vmatprep.subr.mxu0 0.0
    %226 = vmatpush1.msra.mxu0 0.0
    %227 = vmatprep.subr.mxu0 0.0
    %228 = vmatpush1.msra.mxu0 0.0
    %229 = vmatprep.subr.mxu0 0.0
    %230 = vmatpush1.msra.mxu0 0.0
    %231 = vmatprep.subr.mxu0 0.0
    %232 = vmatpush1.msra.mxu0 0.0
    %233 = vmatprep.subr.mxu0 0.0
    %234 = vmatpush1.msra.mxu0 0.0
    %235 = vmatprep.subr.mxu0 0.0
    %236 = vmatpush1.msra.mxu0 0.0
    %237 = vmatprep.subr.mxu0 0.0
    %238 = vmatpush1.msra.mxu0 0.0
    %239 = vmatprep.subr.mxu0 0.0
    %240 = vmatpush1.msra.mxu0 0.0
    %241 = vmatprep.subr.mxu0 0.0
    %242 = vmatpush1.msra.mxu0 0.0
    %243 = vmatprep.subr.mxu0 0.0
    %244 = vmatpush1.msra.mxu0 0.0
    %245 = vmatprep.subr.mxu0 0.0
    %246 = vmatpush1.msra.mxu0 0.0
    %247 = vmatprep.subr.mxu0 0.0
    %248 = vmatpush1.msra.mxu0 0.0
    %249 = vmatprep.subr.mxu0 0.0
    %250 = vmatpush1.msra.mxu0 0.0
    %251 = vmatprep.subr.mxu0 0.0
    %252 = vmatpush1.msra.mxu0 0.0
    %253 = vmatprep.subr.mxu0 0.0
    %254 = vmatpush1.msra.mxu0 %v68
    %255 = vmatprep.subr.mxu0 0.0
    %256 = vmatpush2.msra.mxu0 0.0
    %257 = vmatprep.subr.mxu0 0.0
    %258 = vmatpush2.msra.mxu0 0.0
    %259 = vmatprep.subr.mxu0 0.0
    %260 = vmatpush2.msra.mxu0 0.0
    %261 = vmatprep.subr.mxu0 0.0
    %262 = vmatpush2.msra.mxu0 0.0
    %263 = vmatprep.subr.mxu0 0.0
    %264 = vmatpush2.msra.mxu0 0.0
    %265 = vmatprep.subr.mxu0 0.0
    %266 = vmatpush2.msra.mxu0 0.0
    %267 = vmatprep.subr.mxu0 0.0
    %268 = vmatpush2.msra.mxu0 0.0
    %269 = vmatprep.subr.mxu0 0.0
    %270 = vmatpush2.msra.mxu0 0.0
    %271 = vmatprep.subr.mxu0 0.0
    %272 = vmatpush2.msra.mxu0 0.0
    %273 = vmatprep.subr.mxu0 0.0
    %274 = vmatpush2.msra.mxu0 0.0
    %275 = vmatprep.subr.mxu0 0.0
    %276 = vmatpush2.msra.mxu0 0.0
    %277 = vmatprep.subr.mxu0 0.0
    %278 = vmatpush2.msra.mxu0 0.0
    %279 = vmatprep.subr.mxu0 0.0
    %280 = vmatpush2.msra.mxu0 0.0
    %281 = vmatprep.subr.mxu0 0.0
    %282 = vmatpush2.msra.mxu0 0.0
    %283 = vmatprep.subr.mxu0 0.0
    %284 = vmatpush2.msra.mxu0 0.0
    %285 = vmatprep.subr.mxu0 0.0
    %286 = vmatpush2.msra.mxu0 0.0
    %287 = vmatprep.mubr.f32.mxu0 0.0
    %288 = vmatmul.mubr.f32.gmra.mxu0 %v221
    %v289 = vpop.f32.mrf.mxu0
    %v290 = vadd.f32 %v60, %v289
    %v291 = vpop.f32.mrf.mxu0
    %292 = vdwg.mxu0
    %s293 = scalar_lea.vmem [#allocation6], 16
    %294 = vst [vmem:[%s293] sm:$0xff] %v290
    %s295 = scalar_lea.vmem %s0, 24
    %v296 = vld [vmem:[%s295] sm:$0xff]
    %v298 = vsel %vm62, %v296, 0
    %300 = vmatprep.subr.mxu0 0.0
    %301 = vmatpush1.msra.mxu0 0.0
    %302 = vmatprep.subr.mxu0 0.0
    %303 = vmatpush1.msra.mxu0 0.0
    %304 = vmatprep.subr.mxu0 0.0
    %305 = vmatpush1.msra.mxu0 0.0
    %306 = vmatprep.subr.mxu0 0.0
    %307 = vmatpush1.msra.mxu0 0.0
    %308 = vmatprep.subr.mxu0 0.0
    %309 = vmatpush1.msra.mxu0 0.0
    %310 = vmatprep.subr.mxu0 0.0
    %311 = vmatpush1.msra.mxu0 0.0
    %312 = vmatprep.subr.mxu0 0.0
    %313 = vmatpush1.msra.mxu0 0.0
    %314 = vmatprep.subr.mxu0 0.0
    %315 = vmatpush1.msra.mxu0 0.0
    %316 = vmatprep.subr.mxu0 0.0
    %317 = vmatpush1.msra.mxu0 0.0
    %318 = vmatprep.subr.mxu0 0.0
    %319 = vmatpush1.msra.mxu0 0.0
    %320 = vmatprep.subr.mxu0 0.0
    %321 = vmatpush1.msra.mxu0 0.0
    %322 = vmatprep.subr.mxu0 0.0
    %323 = vmatpush1.msra.mxu0 0.0
    %324 = vmatprep.subr.mxu0 0.0
    %325 = vmatpush1.msra.mxu0 0.0
    %326 = vmatprep.subr.mxu0 0.0
    %327 = vmatpush1.msra.mxu0 0.0
    %328 = vmatprep.subr.mxu0 0.0
    %329 = vmatpush1.msra.mxu0 0.0
    %330 = vmatprep.subr.mxu0 0.0
    %331 = vmatpush1.msra.mxu0 %v68
    %332 = vmatprep.subr.mxu0 0.0
    %333 = vmatpush2.msra.mxu0 0.0
    %334 = vmatprep.subr.mxu0 0.0
    %335 = vmatpush2.msra.mxu0 0.0
    %336 = vmatprep.subr.mxu0 0.0
    %337 = vmatpush2.msra.mxu0 0.0
    %338 = vmatprep.subr.mxu0 0.0
    %339 = vmatpush2.msra.mxu0 0.0
    %340 = vmatprep.subr.mxu0 0.0
    %341 = vmatpush2.msra.mxu0 0.0
    %342 = vmatprep.subr.mxu0 0.0
    %343 = vmatpush2.msra.mxu0 0.0
    %344 = vmatprep.subr.mxu0 0.0
    %345 = vmatpush2.msra.mxu0 0.0
    %346 = vmatprep.subr.mxu0 0.0
    %347 = vmatpush2.msra.mxu0 0.0
    %348 = vmatprep.subr.mxu0 0.0
    %349 = vmatpush2.msra.mxu0 0.0
    %350 = vmatprep.subr.mxu0 0.0
    %351 = vmatpush2.msra.mxu0 0.0
    %352 = vmatprep.subr.mxu0 0.0
    %353 = vmatpush2.msra.mxu0 0.0
    %354 = vmatprep.subr.mxu0 0.0
    %355 = vmatpush2.msra.mxu0 0.0
    %356 = vmatprep.subr.mxu0 0.0
    %357 = vmatpush2.msra.mxu0 0.0
    %358 = vmatprep.subr.mxu0 0.0
    %359 = vmatpush2.msra.mxu0 0.0
    %360 = vmatprep.subr.mxu0 0.0
    %361 = vmatpush2.msra.mxu0 0.0
    %362 = vmatprep.subr.mxu0 0.0
    %363 = vmatpush2.msra.mxu0 0.0
    %364 = vmatprep.mubr.f32.mxu0 0.0
    %365 = vmatmul.mubr.f32.gmra.mxu0 %v298
    %v366 = vpop.f32.mrf.mxu0
    %v367 = vadd.f32 %v60, %v366
    %v368 = vpop.f32.mrf.mxu0
    %369 = vdwg.mxu0
    %s370 = scalar_lea.vmem [#allocation6], 24
    %371 = vst [vmem:[%s370] sm:$0xff] %v367
    %s372 = scalar_lea.vmem %s0, 32
    %v373 = vld [vmem:[%s372] sm:$0xff]
    %v375 = vsel %vm62, %v373, 0
    %377 = vmatprep.subr.mxu0 0.0
    %378 = vmatpush1.msra.mxu0 0.0
    %379 = vmatprep.subr.mxu0 0.0
    %380 = vmatpush1.msra.mxu0 0.0
    %381 = vmatprep.subr.mxu0 0.0
    %382 = vmatpush1.msra.mxu0 0.0
    %383 = vmatprep.subr.mxu0 0.0
    %384 = vmatpush1.msra.mxu0 0.0
    %385 = vmatprep.subr.mxu0 0.0
    %386 = vmatpush1.msra.mxu0 0.0
    %387 = vmatprep.subr.mxu0 0.0
    %388 = vmatpush1.msra.mxu0 0.0
    %389 = vmatprep.subr.mxu0 0.0
    %390 = vmatpush1.msra.mxu0 0.0
    %391 = vmatprep.subr.mxu0 0.0
    %392 = vmatpush1.msra.mxu0 0.0
    %393 = vmatprep.subr.mxu0 0.0
    %394 = vmatpush1.msra.mxu0 0.0
    %395 = vmatprep.subr.mxu0 0.0
    %396 = vmatpush1.msra.mxu0 0.0
    %397 = vmatprep.subr.mxu0 0.0
    %398 = vmatpush1.msra.mxu0 0.0
    %399 = vmatprep.subr.mxu0 0.0
    %400 = vmatpush1.msra.mxu0 0.0
    %401 = vmatprep.subr.mxu0 0.0
    %402 = vmatpush1.msra.mxu0 0.0
    %403 = vmatprep.subr.mxu0 0.0
    %404 = vmatpush1.msra.mxu0 0.0
    %405 = vmatprep.subr.mxu0 0.0
    %406 = vmatpush1.msra.mxu0 0.0
    %407 = vmatprep.subr.mxu0 0.0
    %408 = vmatpush1.msra.mxu0 %v68
    %409 = vmatprep.subr.mxu0 0.0
    %410 = vmatpush2.msra.mxu0 0.0
    %411 = vmatprep.subr.mxu0 0.0
    %412 = vmatpush2.msra.mxu0 0.0
    %413 = vmatprep.subr.mxu0 0.0
    %414 = vmatpush2.msra.mxu0 0.0
    %415 = vmatprep.subr.mxu0 0.0
    %416 = vmatpush2.msra.mxu0 0.0
    %417 = vmatprep.subr.mxu0 0.0
    %418 = vmatpush2.msra.mxu0 0.0
    %419 = vmatprep.subr.mxu0 0.0
    %420 = vmatpush2.msra.mxu0 0.0
    %421 = vmatprep.subr.mxu0 0.0
    %422 = vmatpush2.msra.mxu0 0.0
    %423 = vmatprep.subr.mxu0 0.0
    %424 = vmatpush2.msra.mxu0 0.0
    %425 = vmatprep.subr.mxu0 0.0
    %426 = vmatpush2.msra.mxu0 0.0
    %427 = vmatprep.subr.mxu0 0.0
    %428 = vmatpush2.msra.mxu0 0.0
    %429 = vmatprep.subr.mxu0 0.0
    %430 = vmatpush2.msra.mxu0 0.0
    %431 = vmatprep.subr.mxu0 0.0
    %432 = vmatpush2.msra.mxu0 0.0
    %433 = vmatprep.subr.mxu0 0.0
    %434 = vmatpush2.msra.mxu0 0.0
    %435 = vmatprep.subr.mxu0 0.0
    %436 = vmatpush2.msra.mxu0 0.0
    %437 = vmatprep.subr.mxu0 0.0
    %438 = vmatpush2.msra.mxu0 0.0
    %439 = vmatprep.subr.mxu0 0.0
    %440 = vmatpush2.msra.mxu0 0.0
    %441 = vmatprep.mubr.f32.mxu0 0.0
    %442 = vmatmul.mubr.f32.gmra.mxu0 %v375
    %v443 = vpop.f32.mrf.mxu0
    %v444 = vadd.f32 %v60, %v443
    %v445 = vpop.f32.mrf.mxu0
    %446 = vdwg.mxu0
    %s447 = scalar_lea.vmem [#allocation6], 32
    %448 = vst [vmem:[%s447] sm:$0xff] %v444
    %s449 = scalar_lea.vmem %s0, 40
    %v450 = vld [vmem:[%s449] sm:$0xff]
    %v452 = vsel %vm62, %v450, 0
    %454 = vmatprep.subr.mxu0 0.0
    %455 = vmatpush1.msra.mxu0 0.0
    %456 = vmatprep.subr.mxu0 0.0
    %457 = vmatpush1.msra.mxu0 0.0
    %458 = vmatprep.subr.mxu0 0.0
    %459 = vmatpush1.msra.mxu0 0.0
    %460 = vmatprep.subr.mxu0 0.0
    %461 = vmatpush1.msra.mxu0 0.0
    %462 = vmatprep.subr.mxu0 0.0
    %463 = vmatpush1.msra.mxu0 0.0
    %464 = vmatprep.subr.mxu0 0.0
    %465 = vmatpush1.msra.mxu0 0.0
    %466 = vmatprep.subr.mxu0 0.0
    %467 = vmatpush1.msra.mxu0 0.0
    %468 = vmatprep.subr.mxu0 0.0
    %469 = vmatpush1.msra.mxu0 0.0
    %470 = vmatprep.subr.mxu0 0.0
    %471 = vmatpush1.msra.mxu0 0.0
    %472 = vmatprep.subr.mxu0 0.0
    %473 = vmatpush1.msra.mxu0 0.0
    %474 = vmatprep.subr.mxu0 0.0
    %475 = vmatpush1.msra.mxu0 0.0
    %476 = vmatprep.subr.mxu0 0.0
    %477 = vmatpush1.msra.mxu0 0.0
    %478 = vmatprep.subr.mxu0 0.0
    %479 = vmatpush1.msra.mxu0 0.0
    %480 = vmatprep.subr.mxu0 0.0
    %481 = vmatpush1.msra.mxu0 0.0
    %482 = vmatprep.subr.mxu0 0.0
    %483 = vmatpush1.msra.mxu0 0.0
    %484 = vmatprep.subr.mxu0 0.0
    %485 = vmatpush1.msra.mxu0 %v68
    %486 = vmatprep.subr.mxu0 0.0
    %487 = vmatpush2.msra.mxu0 0.0
    %488 = vmatprep.subr.mxu0 0.0
    %489 = vmatpush2.msra.mxu0 0.0
    %490 = vmatprep.subr.mxu0 0.0
    %491 = vmatpush2.msra.mxu0 0.0
    %492 = vmatprep.subr.mxu0 0.0
    %493 = vmatpush2.msra.mxu0 0.0
    %494 = vmatprep.subr.mxu0 0.0
    %495 = vmatpush2.msra.mxu0 0.0
    %496 = vmatprep.subr.mxu0 0.0
    %497 = vmatpush2.msra.mxu0 0.0
    %498 = vmatprep.subr.mxu0 0.0
    %499 = vmatpush2.msra.mxu0 0.0
    %500 = vmatprep.subr.mxu0 0.0
    %501 = vmatpush2.msra.mxu0 0.0
    %502 = vmatprep.subr.mxu0 0.0
    %503 = vmatpush2.msra.mxu0 0.0
    %504 = vmatprep.subr.mxu0 0.0
    %505 = vmatpush2.msra.mxu0 0.0
    %506 = vmatprep.subr.mxu0 0.0
    %507 = vmatpush2.msra.mxu0 0.0
    %508 = vmatprep.subr.mxu0 0.0
    %509 = vmatpush2.msra.mxu0 0.0
    %510 = vmatprep.subr.mxu0 0.0
    %511 = vmatpush2.msra.mxu0 0.0
    %512 = vmatprep.subr.mxu0 0.0
    %513 = vmatpush2.msra.mxu0 0.0
    %514 = vmatprep.subr.mxu0 0.0
    %515 = vmatpush2.msra.mxu0 0.0
    %516 = vmatprep.subr.mxu0 0.0
    %517 = vmatpush2.msra.mxu0 0.0
    %518 = vmatprep.mubr.f32.mxu0 0.0
    %519 = vmatmul.mubr.f32.gmra.mxu0 %v452
    %v520 = vpop.f32.mrf.mxu0
    %v521 = vadd.f32 %v60, %v520
    %v522 = vpop.f32.mrf.mxu0
    %523 = vdwg.mxu0
    %s524 = scalar_lea.vmem [#allocation6], 40
    %525 = vst [vmem:[%s524] sm:$0xff] %v521
    %s526 = scalar_lea.vmem %s0, 48
    %v527 = vld [vmem:[%s526] sm:$0xff]
    %v529 = vsel %vm62, %v527, 0
    %531 = vmatprep.subr.mxu0 0.0
    %532 = vmatpush1.msra.mxu0 0.0
    %533 = vmatprep.subr.mxu0 0.0
    %534 = vmatpush1.msra.mxu0 0.0
    %535 = vmatprep.subr.mxu0 0.0
    %536 = vmatpush1.msra.mxu0 0.0
    %537 = vmatprep.subr.mxu0 0.0
    %538 = vmatpush1.msra.mxu0 0.0
    %539 = vmatprep.subr.mxu0 0.0
    %540 = vmatpush1.msra.mxu0 0.0
    %541 = vmatprep.subr.mxu0 0.0
    %542 = vmatpush1.msra.mxu0 0.0
    %543 = vmatprep.subr.mxu0 0.0
    %544 = vmatpush1.msra.mxu0 0.0
    %545 = vmatprep.subr.mxu0 0.0
    %546 = vmatpush1.msra.mxu0 0.0
    %547 = vmatprep.subr.mxu0 0.0
    %548 = vmatpush1.msra.mxu0 0.0
    %549 = vmatprep.subr.mxu0 0.0
    %550 = vmatpush1.msra.mxu0 0.0
    %551 = vmatprep.subr.mxu0 0.0
    %552 = vmatpush1.msra.mxu0 0.0
    %553 = vmatprep.subr.mxu0 0.0
    %554 = vmatpush1.msra.mxu0 0.0
    %555 = vmatprep.subr.mxu0 0.0
    %556 = vmatpush1.msra.mxu0 0.0
    %557 = vmatprep.subr.mxu0 0.0
    %558 = vmatpush1.msra.mxu0 0.0
    %559 = vmatprep.subr.mxu0 0.0
    %560 = vmatpush1.msra.mxu0 0.0
    %561 = vmatprep.subr.mxu0 0.0
    %562 = vmatpush1.msra.mxu0 %v68
    %563 = vmatprep.subr.mxu0 0.0
    %564 = vmatpush2.msra.mxu0 0.0
    %565 = vmatprep.subr.mxu0 0.0
    %566 = vmatpush2.msra.mxu0 0.0
    %567 = vmatprep.subr.mxu0 0.0
    %568 = vmatpush2.msra.mxu0 0.0
    %569 = vmatprep.subr.mxu0 0.0
    %570 = vmatpush2.msra.mxu0 0.0
    %571 = vmatprep.subr.mxu0 0.0
    %572 = vmatpush2.msra.mxu0 0.0
    %573 = vmatprep.subr.mxu0 0.0
    %574 = vmatpush2.msra.mxu0 0.0
    %575 = vmatprep.subr.mxu0 0.0
    %576 = vmatpush2.msra.mxu0 0.0
    %577 = vmatprep.subr.mxu0 0.0
    %578 = vmatpush2.msra.mxu0 0.0
    %579 = vmatprep.subr.mxu0 0.0
    %580 = vmatpush2.msra.mxu0 0.0
    %581 = vmatprep.subr.mxu0 0.0
    %582 = vmatpush2.msra.mxu0 0.0
    %583 = vmatprep.subr.mxu0 0.0
    %584 = vmatpush2.msra.mxu0 0.0
    %585 = vmatprep.subr.mxu0 0.0
    %586 = vmatpush2.msra.mxu0 0.0
    %587 = vmatprep.subr.mxu0 0.0
    %588 = vmatpush2.msra.mxu0 0.0
    %589 = vmatprep.subr.mxu0 0.0
    %590 = vmatpush2.msra.mxu0 0.0
    %591 = vmatprep.subr.mxu0 0.0
    %592 = vmatpush2.msra.mxu0 0.0
    %593 = vmatprep.subr.mxu0 0.0
    %594 = vmatpush2.msra.mxu0 0.0
    %595 = vmatprep.mubr.f32.mxu0 0.0
    %596 = vmatmul.mubr.f32.gmra.mxu0 %v529
    %v597 = vpop.f32.mrf.mxu0
    %v598 = vadd.f32 %v60, %v597
    %v599 = vpop.f32.mrf.mxu0
    %600 = vdwg.mxu0
    %s601 = scalar_lea.vmem [#allocation6], 48
    %602 = vst [vmem:[%s601] sm:$0xff] %v598
    %s603 = scalar_lea.vmem %s0, 56
    %v604 = vld [vmem:[%s603] sm:$0xff]
    %v606 = vsel %vm62, %v604, 0
    %608 = vmatprep.subr.mxu0 0.0
    %609 = vmatpush1.msra.mxu0 0.0
    %610 = vmatprep.subr.mxu0 0.0
    %611 = vmatpush1.msra.mxu0 0.0
    %612 = vmatprep.subr.mxu0 0.0
    %613 = vmatpush1.msra.mxu0 0.0
    %614 = vmatprep.subr.mxu0 0.0
    %615 = vmatpush1.msra.mxu0 0.0
    %616 = vmatprep.subr.mxu0 0.0
    %617 = vmatpush1.msra.mxu0 0.0
    %618 = vmatprep.subr.mxu0 0.0
    %619 = vmatpush1.msra.mxu0 0.0
    %620 = vmatprep.subr.mxu0 0.0
    %621 = vmatpush1.msra.mxu0 0.0
    %622 = vmatprep.subr.mxu0 0.0
    %623 = vmatpush1.msra.mxu0 0.0
    %624 = vmatprep.subr.mxu0 0.0
    %625 = vmatpush1.msra.mxu0 0.0
    %626 = vmatprep.subr.mxu0 0.0
    %627 = vmatpush1.msra.mxu0 0.0
    %628 = vmatprep.subr.mxu0 0.0
    %629 = vmatpush1.msra.mxu0 0.0
    %630 = vmatprep.subr.mxu0 0.0
    %631 = vmatpush1.msra.mxu0 0.0
    %632 = vmatprep.subr.mxu0 0.0
    %633 = vmatpush1.msra.mxu0 0.0
    %634 = vmatprep.subr.mxu0 0.0
    %635 = vmatpush1.msra.mxu0 0.0
    %636 = vmatprep.subr.mxu0 0.0
    %637 = vmatpush1.msra.mxu0 0.0
    %638 = vmatprep.subr.mxu0 0.0
    %639 = vmatpush1.msra.mxu0 %v68
    %640 = vmatprep.subr.mxu0 0.0
    %641 = vmatpush2.msra.mxu0 0.0
    %642 = vmatprep.subr.mxu0 0.0
    %643 = vmatpush2.msra.mxu0 0.0
    %644 = vmatprep.subr.mxu0 0.0
    %645 = vmatpush2.msra.mxu0 0.0
    %646 = vmatprep.subr.mxu0 0.0
    %647 = vmatpush2.msra.mxu0 0.0
    %648 = vmatprep.subr.mxu0 0.0
    %649 = vmatpush2.msra.mxu0 0.0
    %650 = vmatprep.subr.mxu0 0.0
    %651 = vmatpush2.msra.mxu0 0.0
    %652 = vmatprep.subr.mxu0 0.0
    %653 = vmatpush2.msra.mxu0 0.0
    %654 = vmatprep.subr.mxu0 0.0
    %655 = vmatpush2.msra.mxu0 0.0
    %656 = vmatprep.subr.mxu0 0.0
    %657 = vmatpush2.msra.mxu0 0.0
    %658 = vmatprep.subr.mxu0 0.0
    %659 = vmatpush2.msra.mxu0 0.0
    %660 = vmatprep.subr.mxu0 0.0
    %661 = vmatpush2.msra.mxu0 0.0
    %662 = vmatprep.subr.mxu0 0.0
    %663 = vmatpush2.msra.mxu0 0.0
    %664 = vmatprep.subr.mxu0 0.0
    %665 = vmatpush2.msra.mxu0 0.0
    %666 = vmatprep.subr.mxu0 0.0
    %667 = vmatpush2.msra.mxu0 0.0
    %668 = vmatprep.subr.mxu0 0.0
    %669 = vmatpush2.msra.mxu0 0.0
    %670 = vmatprep.subr.mxu0 0.0
    %671 = vmatpush2.msra.mxu0 0.0
    %672 = vmatprep.mubr.f32.mxu0 0.0
    %673 = vmatmul.mubr.f32.gmra.mxu0 %v606
    %v674 = vpop.f32.mrf.mxu0
    %v675 = vadd.f32 %v60, %v674
    %v676 = vpop.f32.mrf.mxu0
    %677 = vdwg.mxu0
    %s678 = scalar_lea.vmem [#allocation6], 56
    %679 = vst [vmem:[%s678] sm:$0xff] %v675
    %v680 = vld [vmem:[#allocation2] sm:$0xff]
    %v681 = vld [vmem:[#allocation6] sm:$0xff]
    %682 = vmatprep.subr.mxu0 0.0
    %683 = vmatpush1.msra.mxu0 %v54
    %684 = vmatprep.subr.mxu0 0.0
    %685 = vmatpush1.msra.mxu0 %v53
    %686 = vmatprep.subr.mxu0 0.0
    %687 = vmatpush1.msra.mxu0 %v52
    %688 = vmatprep.subr.mxu0 0.0
    %689 = vmatpush1.msra.mxu0 %v51
    %690 = vmatprep.subr.mxu0 0.0
    %691 = vmatpush1.msra.mxu0 %v50
    %692 = vmatprep.subr.mxu0 0.0
    %693 = vmatpush1.msra.mxu0 %v49
    %694 = vmatprep.subr.mxu0 0.0
    %695 = vmatpush1.msra.mxu0 %v48
    %696 = vmatprep.subr.mxu0 0.0
    %697 = vmatpush1.msra.mxu0 %v47
    %698 = vmatprep.subr.mxu0 0.0
    %699 = vmatpush1.msra.mxu0 %v46
    %700 = vmatprep.subr.mxu0 0.0
    %701 = vmatpush1.msra.mxu0 %v45
    %702 = vmatprep.subr.mxu0 0.0
    %703 = vmatpush1.msra.mxu0 %v44
    %704 = vmatprep.subr.mxu0 0.0
    %705 = vmatpush1.msra.mxu0 %v43
    %706 = vmatprep.subr.mxu0 0.0
    %707 = vmatpush1.msra.mxu0 %v42
    %708 = vmatprep.subr.mxu0 0.0
    %709 = vmatpush1.msra.mxu0 %v41
    %710 = vmatprep.subr.mxu0 0.0
    %711 = vmatpush1.msra.mxu0 %v40
    %712 = vmatprep.subr.mxu0 0.0
    %713 = vmatpush1.msra.mxu0 %v39
    %714 = vmatprep.subr.mxu0 0.0
    %715 = vmatpush2.msra.mxu0 0.0
    %716 = vmatprep.subr.mxu0 0.0
    %717 = vmatpush2.msra.mxu0 0.0
    %718 = vmatprep.subr.mxu0 0.0
    %719 = vmatpush2.msra.mxu0 0.0
    %720 = vmatprep.subr.mxu0 0.0
    %721 = vmatpush2.msra.mxu0 0.0
    %722 = vmatprep.subr.mxu0 0.0
    %723 = vmatpush2.msra.mxu0 0.0
    %724 = vmatprep.subr.mxu0 0.0
    %725 = vmatpush2.msra.mxu0 0.0
    %726 = vmatprep.subr.mxu0 0.0
    %727 = vmatpush2.msra.mxu0 0.0
    %728 = vmatprep.subr.mxu0 0.0
    %729 = vmatpush2.msra.mxu0 0.0
    %730 = vmatprep.subr.mxu0 0.0
    %731 = vmatpush2.msra.mxu0 0.0
    %732 = vmatprep.subr.mxu0 0.0
    %733 = vmatpush2.msra.mxu0 0.0
    %734 = vmatprep.subr.mxu0 0.0
    %735 = vmatpush2.msra.mxu0 0.0
    %736 = vmatprep.subr.mxu0 0.0
    %737 = vmatpush2.msra.mxu0 0.0
    %738 = vmatprep.subr.mxu0 0.0
    %739 = vmatpush2.msra.mxu0 0.0
    %740 = vmatprep.subr.mxu0 0.0
    %741 = vmatpush2.msra.mxu0 0.0
    %742 = vmatprep.subr.mxu0 0.0
    %743 = vmatpush2.msra.mxu0 0.0
    %744 = vmatprep.subr.mxu0 0.0
    %745 = vmatpush2.msra.mxu0 0.0
    %746 = vmatprep.mubr.f32.mxu0 0.0
    %747 = vmatmul.mubr.f32.gmra.mxu0 %v680
    %v748 = vpop.f32.mrf.mxu0
    %v749 = vadd.f32 0.0, %v748
    %v750 = vpop.f32.mrf.mxu0
    %751 = vdwg.mxu0
    %v752 = vadd.f32 %v681, %v749
    %v753 = vmax.f32 %v752, 0.0
    %v754 = vmul.f32 %v680, 0.9
    %v755 = vmul.f32 %v753, 0.1
    %v756 = vadd.f32 %v754, %v755
    %757 = vst [vmem:[#allocation6] sm:$0xff] %v756
    %v758 = vld [vmem:[%s216] sm:$0xff]
    %759 = vmatprep.subr.mxu0 0.0
    %760 = vmatpush1.msra.mxu0 %v54
    %761 = vmatprep.subr.mxu0 0.0
    %762 = vmatpush1.msra.mxu0 %v53
    %763 = vmatprep.subr.mxu0 0.0
    %764 = vmatpush1.msra.mxu0 %v52
    %765 = vmatprep.subr.mxu0 0.0
    %766 = vmatpush1.msra.mxu0 %v51
    %767 = vmatprep.subr.mxu0 0.0
    %768 = vmatpush1.msra.mxu0 %v50
    %769 = vmatprep.subr.mxu0 0.0
    %770 = vmatpush1.msra.mxu0 %v49
    %771 = vmatprep.subr.mxu0 0.0
    %772 = vmatpush1.msra.mxu0 %v48
    %773 = vmatprep.subr.mxu0 0.0
    %774 = vmatpush1.msra.mxu0 %v47
    %775 = vmatprep.subr.mxu0 0.0
    %776 = vmatpush1.msra.mxu0 %v46
    %777 = vmatprep.subr.mxu0 0.0
    %778 = vmatpush1.msra.mxu0 %v45
    %779 = vmatprep.subr.mxu0 0.0
    %780 = vmatpush1.msra.mxu0 %v44
    %781 = vmatprep.subr.mxu0 0.0
    %782 = vmatpush1.msra.mxu0 %v43
    %783 = vmatprep.subr.mxu0 0.0
    %784 = vmatpush1.msra.mxu0 %v42
    %785 = vmatprep.subr.mxu0 0.0
    %786 = vmatpush1.msra.mxu0 %v41
    %787 = vmatprep.subr.mxu0 0.0
    %788 = vmatpush1.msra.mxu0 %v40
    %789 = vmatprep.subr.mxu0 0.0
    %790 = vmatpush1.msra.mxu0 %v39
    %791 = vmatprep.subr.mxu0 0.0
    %792 = vmatpush2.msra.mxu0 0.0
    %793 = vmatprep.subr.mxu0 0.0
    %794 = vmatpush2.msra.mxu0 0.0
    %795 = vmatprep.subr.mxu0 0.0
    %796 = vmatpush2.msra.mxu0 0.0
    %797 = vmatprep.subr.mxu0 0.0
    %798 = vmatpush2.msra.mxu0 0.0
    %799 = vmatprep.subr.mxu0 0.0
    %800 = vmatpush2.msra.mxu0 0.0
    %801 = vmatprep.subr.mxu0 0.0
    %802 = vmatpush2.msra.mxu0 0.0
    %803 = vmatprep.subr.mxu0 0.0
    %804 = vmatpush2.msra.mxu0 0.0
    %805 = vmatprep.subr.mxu0 0.0
    %806 = vmatpush2.msra.mxu0 0.0
    %807 = vmatprep.subr.mxu0 0.0
    %808 = vmatpush2.msra.mxu0 0.0
    %809 = vmatprep.subr.mxu0 0.0
    %810 = vmatpush2.msra.mxu0 0.0
    %811 = vmatprep.subr.mxu0 0.0
    %812 = vmatpush2.msra.mxu0 0.0
    %813 = vmatprep.subr.mxu0 0.0
    %814 = vmatpush2.msra.mxu0 0.0
    %815 = vmatprep.subr.mxu0 0.0
    %816 = vmatpush2.msra.mxu0 0.0
    %817 = vmatprep.subr.mxu0 0.0
    %818 = vmatpush2.msra.mxu0 0.0
    %819 = vmatprep.subr.mxu0 0.0
    %820 = vmatpush2.msra.mxu0 0.0
    %821 = vmatprep.subr.mxu0 0.0
    %822 = vmatpush2.msra.mxu0 0.0
    %823 = vmatprep.mubr.f32.mxu0 0.0
    %824 = vmatmul.mubr.f32.gmra.mxu0 %v756
    %v825 = vpop.f32.mrf.mxu0
    %v826 = vadd.f32 0.0, %v825
    %v827 = vpop.f32.mrf.mxu0
    %828 = vdwg.mxu0
    %v829 = vadd.f32 %v758, %v826
    %v830 = vmax.f32 %v829, 0.0
    %v831 = vmul.f32 %v756, 0.9
    %v832 = vmul.f32 %v830, 0.1
    %v833 = vadd.f32 %v831, %v832
    %834 = vst [vmem:[%s216] sm:$0xff] %v833
    %v835 = vld [vmem:[%s293] sm:$0xff]
    %836 = vmatprep.subr.mxu0 0.0
    %837 = vmatpush1.msra.mxu0 %v54
    %838 = vmatprep.subr.mxu0 0.0
    %839 = vmatpush1.msra.mxu0 %v53
    %840 = vmatprep.subr.mxu0 0.0
    %841 = vmatpush1.msra.mxu0 %v52
    %842 = vmatprep.subr.mxu0 0.0
    %843 = vmatpush1.msra.mxu0 %v51
    %844 = vmatprep.subr.mxu0 0.0
    %845 = vmatpush1.msra.mxu0 %v50
    %846 = vmatprep.subr.mxu0 0.0
    %847 = vmatpush1.msra.mxu0 %v49
    %848 = vmatprep.subr.mxu0 0.0
    %849 = vmatpush1.msra.mxu0 %v48
    %850 = vmatprep.subr.mxu0 0.0
    %851 = vmatpush1.msra.mxu0 %v47
    %852 = vmatprep.subr.mxu0 0.0
    %853 = vmatpush1.msra.mxu0 %v46
    %854 = vmatprep.subr.mxu0 0.0
    %855 = vmatpush1.msra.mxu0 %v45
    %856 = vmatprep.subr.mxu0 0.0
    %857 = vmatpush1.msra.mxu0 %v44
    %858 = vmatprep.subr.mxu0 0.0
    %859 = vmatpush1.msra.mxu0 %v43
    %860 = vmatprep.subr.mxu0 0.0
    %861 = vmatpush1.msra.mxu0 %v42
    %862 = vmatprep.subr.mxu0 0.0
    %863 = vmatpush1.msra.mxu0 %v41
    %864 = vmatprep.subr.mxu0 0.0
    %865 = vmatpush1.msra.mxu0 %v40
    %866 = vmatprep.subr.mxu0 0.0
    %867 = vmatpush1.msra.mxu0 %v39
    %868 = vmatprep.subr.mxu0 0.0
    %869 = vmatpush2.msra.mxu0 0.0
    %870 = vmatprep.subr.mxu0 0.0
    %871 = vmatpush2.msra.mxu0 0.0
    %872 = vmatprep.subr.mxu0 0.0
    %873 = vmatpush2.msra.mxu0 0.0
    %874 = vmatprep.subr.mxu0 0.0
    %875 = vmatpush2.msra.mxu0 0.0
    %876 = vmatprep.subr.mxu0 0.0
    %877 = vmatpush2.msra.mxu0 0.0
    %878 = vmatprep.subr.mxu0 0.0
    %879 = vmatpush2.msra.mxu0 0.0
    %880 = vmatprep.subr.mxu0 0.0
    %881 = vmatpush2.msra.mxu0 0.0
    %882 = vmatprep.subr.mxu0 0.0
    %883 = vmatpush2.msra.mxu0 0.0
    %884 = vmatprep.subr.mxu0 0.0
    %885 = vmatpush2.msra.mxu0 0.0
    %886 = vmatprep.subr.mxu0 0.0
    %887 = vmatpush2.msra.mxu0 0.0
    %888 = vmatprep.subr.mxu0 0.0
    %889 = vmatpush2.msra.mxu0 0.0
    %890 = vmatprep.subr.mxu0 0.0
    %891 = vmatpush2.msra.mxu0 0.0
    %892 = vmatprep.subr.mxu0 0.0
    %893 = vmatpush2.msra.mxu0 0.0
    %894 = vmatprep.subr.mxu0 0.0
    %895 = vmatpush2.msra.mxu0 0.0
    %896 = vmatprep.subr.mxu0 0.0
    %897 = vmatpush2.msra.mxu0 0.0
    %898 = vmatprep.subr.mxu0 0.0
    %899 = vmatpush2.msra.mxu0 0.0
    %900 = vmatprep.mubr.f32.mxu0 0.0
    %901 = vmatmul.mubr.f32.gmra.mxu0 %v833
    %v902 = vpop.f32.mrf.mxu0
    %v903 = vadd.f32 0.0, %v902
    %v904 = vpop.f32.mrf.mxu0
    %905 = vdwg.mxu0
    %v906 = vadd.f32 %v835, %v903
    %v907 = vmax.f32 %v906, 0.0
    %v908 = vmul.f32 %v833, 0.9
    %v909 = vmul.f32 %v907, 0.1
    %v910 = vadd.f32 %v908, %v909
    %911 = vst [vmem:[%s293] sm:$0xff] %v910
    %v912 = vld [vmem:[%s370] sm:$0xff]
    %913 = vmatprep.subr.mxu0 0.0
    %914 = vmatpush1.msra.mxu0 %v54
    %915 = vmatprep.subr.mxu0 0.0
    %916 = vmatpush1.msra.mxu0 %v53
    %917 = vmatprep.subr.mxu0 0.0
    %918 = vmatpush1.msra.mxu0 %v52
    %919 = vmatprep.subr.mxu0 0.0
    %920 = vmatpush1.msra.mxu0 %v51
    %921 = vmatprep.subr.mxu0 0.0
    %922 = vmatpush1.msra.mxu0 %v50
    %923 = vmatprep.subr.mxu0 0.0
    %924 = vmatpush1.msra.mxu0 %v49
    %925 = vmatprep.subr.mxu0 0.0
    %926 = vmatpush1.msra.mxu0 %v48
    %927 = vmatprep.subr.mxu0 0.0
    %928 = vmatpush1.msra.mxu0 %v47
    %929 = vmatprep.subr.mxu0 0.0
    %930 = vmatpush1.msra.mxu0 %v46
    %931 = vmatprep.subr.mxu0 0.0
    %932 = vmatpush1.msra.mxu0 %v45
    %933 = vmatprep.subr.mxu0 0.0
    %934 = vmatpush1.msra.mxu0 %v44
    %935 = vmatprep.subr.mxu0 0.0
    %936 = vmatpush1.msra.mxu0 %v43
    %937 = vmatprep.subr.mxu0 0.0
    %938 = vmatpush1.msra.mxu0 %v42
    %939 = vmatprep.subr.mxu0 0.0
    %940 = vmatpush1.msra.mxu0 %v41
    %941 = vmatprep.subr.mxu0 0.0
    %942 = vmatpush1.msra.mxu0 %v40
    %943 = vmatprep.subr.mxu0 0.0
    %944 = vmatpush1.msra.mxu0 %v39
    %945 = vmatprep.subr.mxu0 0.0
    %946 = vmatpush2.msra.mxu0 0.0
    %947 = vmatprep.subr.mxu0 0.0
    %948 = vmatpush2.msra.mxu0 0.0
    %949 = vmatprep.subr.mxu0 0.0
    %950 = vmatpush2.msra.mxu0 0.0
    %951 = vmatprep.subr.mxu0 0.0
    %952 = vmatpush2.msra.mxu0 0.0
    %953 = vmatprep.subr.mxu0 0.0
    %954 = vmatpush2.msra.mxu0 0.0
    %955 = vmatprep.subr.mxu0 0.0
    %956 = vmatpush2.msra.mxu0 0.0
    %957 = vmatprep.subr.mxu0 0.0
    %958 = vmatpush2.msra.mxu0 0.0
    %959 = vmatprep.subr.mxu0 0.0
    %960 = vmatpush2.msra.mxu0 0.0
    %961 = vmatprep.subr.mxu0 0.0
    %962 = vmatpush2.msra.mxu0 0.0
    %963 = vmatprep.subr.mxu0 0.0
    %964 = vmatpush2.msra.mxu0 0.0
    %965 = vmatprep.subr.mxu0 0.0
    %966 = vmatpush2.msra.mxu0 0.0
    %967 = vmatprep.subr.mxu0 0.0
    %968 = vmatpush2.msra.mxu0 0.0
    %969 = vmatprep.subr.mxu0 0.0
    %970 = vmatpush2.msra.mxu0 0.0
    %971 = vmatprep.subr.mxu0 0.0
    %972 = vmatpush2.msra.mxu0 0.0
    %973 = vmatprep.subr.mxu0 0.0
    %974 = vmatpush2.msra.mxu0 0.0
    %975 = vmatprep.subr.mxu0 0.0
    %976 = vmatpush2.msra.mxu0 0.0
    %977 = vmatprep.mubr.f32.mxu0 0.0
    %978 = vmatmul.mubr.f32.gmra.mxu0 %v910
    %v979 = vpop.f32.mrf.mxu0
    %v980 = vadd.f32 0.0, %v979
    %v981 = vpop.f32.mrf.mxu0
    %982 = vdwg.mxu0
    %v983 = vadd.f32 %v912, %v980
    %v984 = vmax.f32 %v983, 0.0
    %v985 = vmul.f32 %v910, 0.9
    %v986 = vmul.f32 %v984, 0.1
    %v987 = vadd.f32 %v985, %v986
    %988 = vst [vmem:[%s370] sm:$0xff] %v987
    %v989 = vld [vmem:[%s447] sm:$0xff]
    %990 = vmatprep.subr.mxu0 0.0
    %991 = vmatpush1.msra.mxu0 %v54
    %992 = vmatprep.subr.mxu0 0.0
    %993 = vmatpush1.msra.mxu0 %v53
    %994 = vmatprep.subr.mxu0 0.0
    %995 = vmatpush1.msra.mxu0 %v52
    %996 = vmatprep.subr.mxu0 0.0
    %997 = vmatpush1.msra.mxu0 %v51
    %998 = vmatprep.subr.mxu0 0.0
    %999 = vmatpush1.msra.mxu0 %v50
    %1000 = vmatprep.subr.mxu0 0.0
    %1001 = vmatpush1.msra.mxu0 %v49
    %1002 = vmatprep.subr.mxu0 0.0
    %1003 = vmatpush1.msra.mxu0 %v48
    %1004 = vmatprep.subr.mxu0 0.0
    %1005 = vmatpush1.msra.mxu0 %v47
    %1006 = vmatprep.subr.mxu0 0.0
    %1007 = vmatpush1.msra.mxu0 %v46
    %1008 = vmatprep.subr.mxu0 0.0
    %1009 = vmatpush1.msra.mxu0 %v45
    %1010 = vmatprep.subr.mxu0 0.0
    %1011 = vmatpush1.msra.mxu0 %v44
    %1012 = vmatprep.subr.mxu0 0.0
    %1013 = vmatpush1.msra.mxu0 %v43
    %1014 = vmatprep.subr.mxu0 0.0
    %1015 = vmatpush1.msra.mxu0 %v42
    %1016 = vmatprep.subr.mxu0 0.0
    %1017 = vmatpush1.msra.mxu0 %v41
    %1018 = vmatprep.subr.mxu0 0.0
    %1019 = vmatpush1.msra.mxu0 %v40
    %1020 = vmatprep.subr.mxu0 0.0
    %1021 = vmatpush1.msra.mxu0 %v39
    %1022 = vmatprep.subr.mxu0 0.0
    %1023 = vmatpush2.msra.mxu0 0.0
    %1024 = vmatprep.subr.mxu0 0.0
    %1025 = vmatpush2.msra.mxu0 0.0
    %1026 = vmatprep.subr.mxu0 0.0
    %1027 = vmatpush2.msra.mxu0 0.0
    %1028 = vmatprep.subr.mxu0 0.0
    %1029 = vmatpush2.msra.mxu0 0.0
    %1030 = vmatprep.subr.mxu0 0.0
    %1031 = vmatpush2.msra.mxu0 0.0
    %1032 = vmatprep.subr.mxu0 0.0
    %1033 = vmatpush2.msra.mxu0 0.0
    %1034 = vmatprep.subr.mxu0 0.0
    %1035 = vmatpush2.msra.mxu0 0.0
    %1036 = vmatprep.subr.mxu0 0.0
    %1037 = vmatpush2.msra.mxu0 0.0
    %1038 = vmatprep.subr.mxu0 0.0
    %1039 = vmatpush2.msra.mxu0 0.0
    %1040 = vmatprep.subr.mxu0 0.0
    %1041 = vmatpush2.msra.mxu0 0.0
    %1042 = vmatprep.subr.mxu0 0.0
    %1043 = vmatpush2.msra.mxu0 0.0
    %1044 = vmatprep.subr.mxu0 0.0
    %1045 = vmatpush2.msra.mxu0 0.0
    %1046 = vmatprep.subr.mxu0 0.0
    %1047 = vmatpush2.msra.mxu0 0.0
    %1048 = vmatprep.subr.mxu0 0.0
    %1049 = vmatpush2.msra.mxu0 0.0
    %1050 = vmatprep.subr.mxu0 0.0
    %1051 = vmatpush2.msra.mxu0 0.0
    %1052 = vmatprep.subr.mxu0 0.0
    %1053 = vmatpush2.msra.mxu0 0.0
    %1054 = vmatprep.mubr.f32.mxu0 0.0
    %1055 = vmatmul.mubr.f32.gmra.mxu0 %v987
    %v1056 = vpop.f32.mrf.mxu0
    %v1057 = vadd.f32 0.0, %v1056
    %v1058 = vpop.f32.mrf.mxu0
    %1059 = vdwg.mxu0
    %v1060 = vadd.f32 %v989, %v1057
    %v1061 = vmax.f32 %v1060, 0.0
    %v1062 = vmul.f32 %v987, 0.9
    %v1063 = vmul.f32 %v1061, 0.1
    %v1064 = vadd.f32 %v1062, %v1063
    %1065 = vst [vmem:[%s447] sm:$0xff] %v1064
    %v1066 = vld [vmem:[%s524] sm:$0xff]
    %1067 = vmatprep.subr.mxu0 0.0
    %1068 = vmatpush1.msra.mxu0 %v54
    %1069 = vmatprep.subr.mxu0 0.0
    %1070 = vmatpush1.msra.mxu0 %v53
    %1071 = vmatprep.subr.mxu0 0.0
    %1072 = vmatpush1.msra.mxu0 %v52
    %1073 = vmatprep.subr.mxu0 0.0
    %1074 = vmatpush1.msra.mxu0 %v51
    %1075 = vmatprep.subr.mxu0 0.0
    %1076 = vmatpush1.msra.mxu0 %v50
    %1077 = vmatprep.subr.mxu0 0.0
    %1078 = vmatpush1.msra.mxu0 %v49
    %1079 = vmatprep.subr.mxu0 0.0
    %1080 = vmatpush1.msra.mxu0 %v48
    %1081 = vmatprep.subr.mxu0 0.0
    %1082 = vmatpush1.msra.mxu0 %v47
    %1083 = vmatprep.subr.mxu0 0.0
    %1084 = vmatpush1.msra.mxu0 %v46
    %1085 = vmatprep.subr.mxu0 0.0
    %1086 = vmatpush1.msra.mxu0 %v45
    %1087 = vmatprep.subr.mxu0 0.0
    %1088 = vmatpush1.msra.mxu0 %v44
    %1089 = vmatprep.subr.mxu0 0.0
    %1090 = vmatpush1.msra.mxu0 %v43
    %1091 = vmatprep.subr.mxu0 0.0
    %1092 = vmatpush1.msra.mxu0 %v42
    %1093 = vmatprep.subr.mxu0 0.0
    %1094 = vmatpush1.msra.mxu0 %v41
    %1095 = vmatprep.subr.mxu0 0.0
    %1096 = vmatpush1.msra.mxu0 %v40
    %1097 = vmatprep.subr.mxu0 0.0
    %1098 = vmatpush1.msra.mxu0 %v39
    %1099 = vmatprep.subr.mxu0 0.0
    %1100 = vmatpush2.msra.mxu0 0.0
    %1101 = vmatprep.subr.mxu0 0.0
    %1102 = vmatpush2.msra.mxu0 0.0
    %1103 = vmatprep.subr.mxu0 0.0
    %1104 = vmatpush2.msra.mxu0 0.0
    %1105 = vmatprep.subr.mxu0 0.0
    %1106 = vmatpush2.msra.mxu0 0.0
    %1107 = vmatprep.subr.mxu0 0.0
    %1108 = vmatpush2.msra.mxu0 0.0
    %1109 = vmatprep.subr.mxu0 0.0
    %1110 = vmatpush2.msra.mxu0 0.0
    %1111 = vmatprep.subr.mxu0 0.0
    %1112 = vmatpush2.msra.mxu0 0.0
    %1113 = vmatprep.subr.mxu0 0.0
    %1114 = vmatpush2.msra.mxu0 0.0
    %1115 = vmatprep.subr.mxu0 0.0
    %1116 = vmatpush2.msra.mxu0 0.0
    %1117 = vmatprep.subr.mxu0 0.0
    %1118 = vmatpush2.msra.mxu0 0.0
    %1119 = vmatprep.subr.mxu0 0.0
    %1120 = vmatpush2.msra.mxu0 0.0
    %1121 = vmatprep.subr.mxu0 0.0
    %1122 = vmatpush2.msra.mxu0 0.0
    %1123 = vmatprep.subr.mxu0 0.0
    %1124 = vmatpush2.msra.mxu0 0.0
    %1125 = vmatprep.subr.mxu0 0.0
    %1126 = vmatpush2.msra.mxu0 0.0
    %1127 = vmatprep.subr.mxu0 0.0
    %1128 = vmatpush2.msra.mxu0 0.0
    %1129 = vmatprep.subr.mxu0 0.0
    %1130 = vmatpush2.msra.mxu0 0.0
    %1131 = vmatprep.mubr.f32.mxu0 0.0
    %1132 = vmatmul.mubr.f32.gmra.mxu0 %v1064
    %v1133 = vpop.f32.mrf.mxu0
    %v1134 = vadd.f32 0.0, %v1133
    %v1135 = vpop.f32.mrf.mxu0
    %1136 = vdwg.mxu0
    %v1137 = vadd.f32 %v1066, %v1134
    %v1138 = vmax.f32 %v1137, 0.0
    %v1139 = vmul.f32 %v1064, 0.9
    %v1140 = vmul.f32 %v1138, 0.1
    %v1141 = vadd.f32 %v1139, %v1140
    %1142 = vst [vmem:[%s524] sm:$0xff] %v1141
    %v1143 = vld [vmem:[%s601] sm:$0xff]
    %1144 = vmatprep.subr.mxu0 0.0
    %1145 = vmatpush1.msra.mxu0 %v54
    %1146 = vmatprep.subr.mxu0 0.0
    %1147 = vmatpush1.msra.mxu0 %v53
    %1148 = vmatprep.subr.mxu0 0.0
    %1149 = vmatpush1.msra.mxu0 %v52
    %1150 = vmatprep.subr.mxu0 0.0
    %1151 = vmatpush1.msra.mxu0 %v51
    %1152 = vmatprep.subr.mxu0 0.0
    %1153 = vmatpush1.msra.mxu0 %v50
    %1154 = vmatprep.subr.mxu0 0.0
    %1155 = vmatpush1.msra.mxu0 %v49
    %1156 = vmatprep.subr.mxu0 0.0
    %1157 = vmatpush1.msra.mxu0 %v48
    %1158 = vmatprep.subr.mxu0 0.0
    %1159 = vmatpush1.msra.mxu0 %v47
    %1160 = vmatprep.subr.mxu0 0.0
    %1161 = vmatpush1.msra.mxu0 %v46
    %1162 = vmatprep.subr.mxu0 0.0
    %1163 = vmatpush1.msra.mxu0 %v45
    %1164 = vmatprep.subr.mxu0 0.0
    %1165 = vmatpush1.msra.mxu0 %v44
    %1166 = vmatprep.subr.mxu0 0.0
    %1167 = vmatpush1.msra.mxu0 %v43
    %1168 = vmatprep.subr.mxu0 0.0
    %1169 = vmatpush1.msra.mxu0 %v42
    %1170 = vmatprep.subr.mxu0 0.0
    %1171 = vmatpush1.msra.mxu0 %v41
    %1172 = vmatprep.subr.mxu0 0.0
    %1173 = vmatpush1.msra.mxu0 %v40
    %1174 = vmatprep.subr.mxu0 0.0
    %1175 = vmatpush1.msra.mxu0 %v39
    %1176 = vmatprep.subr.mxu0 0.0
    %1177 = vmatpush2.msra.mxu0 0.0
    %1178 = vmatprep.subr.mxu0 0.0
    %1179 = vmatpush2.msra.mxu0 0.0
    %1180 = vmatprep.subr.mxu0 0.0
    %1181 = vmatpush2.msra.mxu0 0.0
    %1182 = vmatprep.subr.mxu0 0.0
    %1183 = vmatpush2.msra.mxu0 0.0
    %1184 = vmatprep.subr.mxu0 0.0
    %1185 = vmatpush2.msra.mxu0 0.0
    %1186 = vmatprep.subr.mxu0 0.0
    %1187 = vmatpush2.msra.mxu0 0.0
    %1188 = vmatprep.subr.mxu0 0.0
    %1189 = vmatpush2.msra.mxu0 0.0
    %1190 = vmatprep.subr.mxu0 0.0
    %1191 = vmatpush2.msra.mxu0 0.0
    %1192 = vmatprep.subr.mxu0 0.0
    %1193 = vmatpush2.msra.mxu0 0.0
    %1194 = vmatprep.subr.mxu0 0.0
    %1195 = vmatpush2.msra.mxu0 0.0
    %1196 = vmatprep.subr.mxu0 0.0
    %1197 = vmatpush2.msra.mxu0 0.0
    %1198 = vmatprep.subr.mxu0 0.0
    %1199 = vmatpush2.msra.mxu0 0.0
    %1200 = vmatprep.subr.mxu0 0.0
    %1201 = vmatpush2.msra.mxu0 0.0
    %1202 = vmatprep.subr.mxu0 0.0
    %1203 = vmatpush2.msra.mxu0 0.0
    %1204 = vmatprep.subr.mxu0 0.0
    %1205 = vmatpush2.msra.mxu0 0.0
    %1206 = vmatprep.subr.mxu0 0.0
    %1207 = vmatpush2.msra.mxu0 0.0
    %1208 = vmatprep.mubr.f32.mxu0 0.0
    %1209 = vmatmul.mubr.f32.gmra.mxu0 %v1141
    %v1210 = vpop.f32.mrf.mxu0
    %v1211 = vadd.f32 0.0, %v1210
    %v1212 = vpop.f32.mrf.mxu0
    %1213 = vdwg.mxu0
    %v1214 = vadd.f32 %v1143, %v1211
    %v1215 = vmax.f32 %v1214, 0.0
    %v1216 = vmul.f32 %v1141, 0.9
    %v1217 = vmul.f32 %v1215, 0.1
    %v1218 = vadd.f32 %v1216, %v1217
    %1219 = vst [vmem:[%s601] sm:$0xff] %v1218
    %v1220 = vld [vmem:[%s678] sm:$0xff]
    %1221 = vmatprep.subr.mxu0 0.0
    %1222 = vmatpush1.msra.mxu0 %v54
    %1223 = vmatprep.subr.mxu0 0.0
    %1224 = vmatpush1.msra.mxu0 %v53
    %1225 = vmatprep.subr.mxu0 0.0
    %1226 = vmatpush1.msra.mxu0 %v52
    %1227 = vmatprep.subr.mxu0 0.0
    %1228 = vmatpush1.msra.mxu0 %v51
    %1229 = vmatprep.subr.mxu0 0.0
    %1230 = vmatpush1.msra.mxu0 %v50
    %1231 = vmatprep.subr.mxu0 0.0
    %1232 = vmatpush1.msra.mxu0 %v49
    %1233 = vmatprep.subr.mxu0 0.0
    %1234 = vmatpush1.msra.mxu0 %v48
    %1235 = vmatprep.subr.mxu0 0.0
    %1236 = vmatpush1.msra.mxu0 %v47
    %1237 = vmatprep.subr.mxu0 0.0
    %1238 = vmatpush1.msra.mxu0 %v46
    %1239 = vmatprep.subr.mxu0 0.0
    %1240 = vmatpush1.msra.mxu0 %v45
    %1241 = vmatprep.subr.mxu0 0.0
    %1242 = vmatpush1.msra.mxu0 %v44
    %1243 = vmatprep.subr.mxu0 0.0
    %1244 = vmatpush1.msra.mxu0 %v43
    %1245 = vmatprep.subr.mxu0 0.0
    %1246 = vmatpush1.msra.mxu0 %v42
    %1247 = vmatprep.subr.mxu0 0.0
    %1248 = vmatpush1.msra.mxu0 %v41
    %1249 = vmatprep.subr.mxu0 0.0
    %1250 = vmatpush1.msra.mxu0 %v40
    %1251 = vmatprep.subr.mxu0 0.0
    %1252 = vmatpush1.msra.mxu0 %v39
    %1253 = vmatprep.subr.mxu0 0.0
    %1254 = vmatpush2.msra.mxu0 0.0
    %1255 = vmatprep.subr.mxu0 0.0
    %1256 = vmatpush2.msra.mxu0 0.0
    %1257 = vmatprep.subr.mxu0 0.0
    %1258 = vmatpush2.msra.mxu0 0.0
    %1259 = vmatprep.subr.mxu0 0.0
    %1260 = vmatpush2.msra.mxu0 0.0
    %1261 = vmatprep.subr.mxu0 0.0
    %1262 = vmatpush2.msra.mxu0 0.0
    %1263 = vmatprep.subr.mxu0 0.0
    %1264 = vmatpush2.msra.mxu0 0.0
    %1265 = vmatprep.subr.mxu0 0.0
    %1266 = vmatpush2.msra.mxu0 0.0
    %1267 = vmatprep.subr.mxu0 0.0
    %1268 = vmatpush2.msra.mxu0 0.0
    %1269 = vmatprep.subr.mxu0 0.0
    %1270 = vmatpush2.msra.mxu0 0.0
    %1271 = vmatprep.subr.mxu0 0.0
    %1272 = vmatpush2.msra.mxu0 0.0
    %1273 = vmatprep.subr.mxu0 0.0
    %1274 = vmatpush2.msra.mxu0 0.0
    %1275 = vmatprep.subr.mxu0 0.0
    %1276 = vmatpush2.msra.mxu0 0.0
    %1277 = vmatprep.subr.mxu0 0.0
    %1278 = vmatpush2.msra.mxu0 0.0
    %1279 = vmatprep.subr.mxu0 0.0
    %1280 = vmatpush2.msra.mxu0 0.0
    %1281 = vmatprep.subr.mxu0 0.0
    %1282 = vmatpush2.msra.mxu0 0.0
    %1283 = vmatprep.subr.mxu0 0.0
    %1284 = vmatpush2.msra.mxu0 0.0
    %1285 = vmatprep.mubr.f32.mxu0 0.0
    %1286 = vmatmul.mubr.f32.gmra.mxu0 %v1218
    %v1287 = vpop.f32.mrf.mxu0
    %v1288 = vadd.f32 0.0, %v1287
    %v1289 = vpop.f32.mrf.mxu0
    %1290 = vdwg.mxu0
    %v1291 = vadd.f32 %v1220, %v1288
    %v1292 = vmax.f32 %v1291, 0.0
    %v1293 = vmul.f32 %v1218, 0.9
    %v1294 = vmul.f32 %v1292, 0.1
    %v1295 = vadd.f32 %v1293, %v1294
    %1296 = vst [vmem:[%s678] sm:$0xff] %v1295
    %1297 = vst [vmem:[#allocation2] sm:$0xff] %v1295
    // Predicated region
    $region26: #{tpu_custom_call.1} parent=1 // pred_check
      _
    $region27: #{tpu_custom_call.1} parent=1 // pred_check_branch
      %1299 = sbr.rel (0) target = $region29
    $region28: #{tpu_custom_call.1} parent=1 // pred_region
      %s1301 = ssub.s32 1024, 1024
      %1302 = vsyncadd [#allocation5], %s1301
      %s1303 = sshll.u32 [#allocation6], 4
      %s1304 = int_to_ptr.vmem [resolvable:$true] %s1303
      %1309 = dma.vmem_to_hbm [thread:$0]  %s1304, 1024, %s4, [#allocation5], 128, 128, 8
    $region29: #{tpu_custom_call.1} parent=1 // pred_fallthru
      _
    // Predicated region
    $region30: #{tpu_custom_call.1} parent=1 // pred_check
      _
    $region31: #{tpu_custom_call.1} parent=1 // pred_check_branch
      %1311 = sbr.rel (0) target = $region33
    $region32: #{tpu_custom_call.1} parent=1 // pred_region
      %1312 = dma.done [#allocation5], 1024
    $region33: #{tpu_custom_call.1} parent=1 // pred_fallthru
      _
    %1313 = vsyncpa [#allocation4], 1
    %1314 = vsyncpa [#allocation5], 1

</llo_original>
